<compile_context>
chip_gen: v5e
topology: v5e:2x2
jax: 0.10.0
libtpu: 0.0.40
codegen_flags: <defaults>
</compile_context>

<pallas_src>
import functools

import jax
import jax.numpy as jnp
from jax.experimental import pallas as pl
from jax.experimental.pallas import tpu as pltpu

D_IN = 28 * 28      # 784
D_IN_PAD = 896      # 7 * 128, lane-aligned K for the first matmul
D_H1 = 512
D_H2 = 128


def enc_mnist_kernel(x_ref, w1_ref, b1_ref, w2_ref, b2_ref, wh_ref, bh_ref, out_ref):
    # x_ref: (TM, 896) bf16, weights bf16, biases f32, out_ref: (TM, n_pad) bf16.
    h1 = jnp.dot(x_ref[...], w1_ref[...], preferred_element_type=jnp.float32)
    h1 = jnp.maximum(h1 + b1_ref[...], 0.0).astype(jnp.bfloat16)          # (TM, 512)
    h2 = jnp.dot(h1, w2_ref[...], preferred_element_type=jnp.float32)
    h2 = jnp.maximum(h2 + b2_ref[...], 0.0).astype(jnp.bfloat16)          # (TM, 128)
    # Fused 4-head matmul -> lane-dense (TM, n_pad) output, stored as bf16.
    out = jnp.dot(h2, wh_ref[...], preferred_element_type=jnp.float32) + bh_ref[...]
    out_ref[...] = out.astype(out_ref.dtype)


def make_params(key, latent_dim_mnist, latent_dim_svhn):
    """Synthetic params in PyTorch-Linear layout transposed to (in, out), f32."""
    dims = [
        ("w1", (D_IN, D_H1)), ("b1", (1, D_H1)),
        ("w2", (D_H1, D_H2)), ("b2", (1, D_H2)),
        ("wmu_m", (D_H2, latent_dim_mnist)), ("bmu_m", (1, latent_dim_mnist)),
        ("wvar_m", (D_H2, latent_dim_mnist)), ("bvar_m", (1, latent_dim_mnist)),
        ("wmu_s", (D_H2, latent_dim_svhn)), ("bmu_s", (1, latent_dim_svhn)),
        ("wvar_s", (D_H2, latent_dim_svhn)), ("bvar_s", (1, latent_dim_svhn)),
    ]
    params = {}
    keys = jax.random.split(key, len(dims))
    for (name, shape), k in zip(dims, keys):
        fan_in = shape[0] if shape[0] != 1 else shape[1]
        scale = 1.0 / jnp.sqrt(jnp.float32(fan_in))
        params[name] = jax.random.uniform(
            k, shape, dtype=jnp.float32, minval=-scale, maxval=scale
        )
    return params


def prepare_kernel_params(params):
    """Pad / cast / fuse the f32 reference params into kernel-ready form."""
    # w1: pad K 784 -> 896 with zero rows, cast bf16.
    w1 = jnp.pad(params["w1"], ((0, D_IN_PAD - D_IN), (0, 0))).astype(jnp.bfloat16)
    w2 = params["w2"].astype(jnp.bfloat16)
    # Fuse the 4 heads along the output (lane) dim and pad up to 128 lanes.
    wh = jnp.concatenate(
        [params["wmu_m"], params["wvar_m"], params["wmu_s"], params["wvar_s"]], axis=1)
    bh = jnp.concatenate(
        [params["bmu_m"], params["bvar_m"], params["bmu_s"], params["bvar_s"]], axis=1)
    n_heads = wh.shape[1]
    n_pad = max(128, pl.cdiv(n_heads, 128) * 128)
    wh = jnp.pad(wh, ((0, 0), (0, n_pad - n_heads))).astype(jnp.bfloat16)
    bh = jnp.pad(bh, ((0, 0), (0, n_pad - n_heads))).astype(jnp.float32)
    return {
        "w1": w1, "b1": params["b1"].astype(jnp.float32),
        "w2": w2, "b2": params["b2"].astype(jnp.float32),
        "wh": wh, "bh": bh,
    }


def choose_tm(batch):
    """Per-generation row-tile choice (Python-level, outside jit)."""
    kind = jax.devices()[0].device_kind.lower()
    n_tiles_128 = pl.cdiv(max(batch, 1), 128)
    if "v7" in kind:
        # 2 TensorCores/chip: keep an even grid-step count >= 2 when possible.
        return 128 if n_tiles_128 <= 2 else 256
    # Single TensorCore (v5e/v6e): fewer, fatter steps amortize per-step cost.
    return 256 if batch >= 256 else 128


@functools.partial(
    jax.jit, static_argnames=("latent_dim_mnist", "latent_dim_svhn", "tm"))
def enc_mnist_forward(x, kparams, *, latent_dim_mnist, latent_dim_svhn, tm=128):
    B = x.shape[0]
    n_pad = kparams["wh"].shape[1]

    # Flatten (..., 28, 28) -> (B, 784); cast to bf16 FIRST, then pad the
    # feature dim to 896 and the batch to a multiple of the row tile.
    # All of this is fused under jit -- no separate f32 pad materialized.
    x2d = x.reshape(B, D_IN).astype(jnp.bfloat16)
    b_pad = pl.cdiv(B, tm) * tm
    x2d = jnp.pad(x2d, ((0, b_pad - B), (0, D_IN_PAD - D_IN)))

    out = pl.pallas_call(
        enc_mnist_kernel,
        out_shape=jax.ShapeDtypeStruct((b_pad, n_pad), jnp.bfloat16),
        grid_spec=pltpu.PrefetchScalarGridSpec(
            num_scalar_prefetch=0,
            grid=(b_pad // tm,),
            in_specs=[
                # x tile walks the batch; weights/biases stay VMEM-resident.
                pl.BlockSpec((tm, D_IN_PAD), lambda i: (i, 0)),
                pl.BlockSpec((D_IN_PAD, D_H1), lambda i: (0, 0)),
                pl.BlockSpec((1, D_H1), lambda i: (0, 0)),
                pl.BlockSpec((D_H1, D_H2), lambda i: (0, 0)),
                pl.BlockSpec((1, D_H2), lambda i: (0, 0)),
                pl.BlockSpec((D_H2, n_pad), lambda i: (0, 0)),
                pl.BlockSpec((1, n_pad), lambda i: (0, 0)),
            ],
            out_specs=pl.BlockSpec((tm, n_pad), lambda i: (i, 0)),
        ),
        compiler_params=pltpu.CompilerParams(
            dimension_semantics=("parallel",)),
    )(x2d, kparams["w1"], kparams["b1"], kparams["w2"], kparams["b2"],
      kparams["wh"], kparams["bh"])

    out = out[:B]
    lm, ls = latent_dim_mnist, latent_dim_svhn
    # Tiny (B, latent) slices; cast back to f32 to match the module's outputs.
    mu_m = out[:, 0:lm].astype(jnp.float32)
    var_m = out[:, lm:2 * lm].astype(jnp.float32)
    mu_s = out[:, 2 * lm:2 * lm + ls].astype(jnp.float32)
    var_s = out[:, 2 * lm + ls:2 * lm + 2 * ls].astype(jnp.float32)
    return mu_m, var_m, mu_s, var_s


def enc_mnist_ref(x, params):
    """Pure-JAX f32 reference of the same forward pass."""
    B = x.shape[0]
    h = x.reshape(B, D_IN).astype(jnp.float32)
    h = jnp.maximum(h @ params["w1"] + params["b1"], 0.0)
    h = jnp.maximum(h @ params["w2"] + params["b2"], 0.0)
    return (
        h @ params["wmu_m"] + params["bmu_m"],
        h @ params["wvar_m"] + params["bvar_m"],
        h @ params["wmu_s"] + params["bmu_s"],
        h @ params["wvar_s"] + params["bvar_s"],
    )


if __name__ == "__main__":
    latent_dim_mnist = 16
    latent_dim_svhn = 16
    B = 256       # multiple row tiles so the batch grid is exercised

    key = jax.random.PRNGKey(0)
    k_x, k_p = jax.random.split(key)
    x = jax.random.normal(k_x, (B, 28, 28), dtype=jnp.float32)
    params = make_params(k_p, latent_dim_mnist, latent_dim_svhn)
    kparams = prepare_kernel_params(params)

    tm = choose_tm(B)
    outs = enc_mnist_forward(
        x, kparams,
        latent_dim_mnist=latent_dim_mnist, latent_dim_svhn=latent_dim_svhn, tm=tm)
    outs = jax.block_until_ready(outs)

    refs = enc_mnist_ref(x, params)
    for o, r in zip(outs, refs):
        assert o.shape == r.shape, (o.shape, r.shape)
        # bf16 weights/activations/output with f32 accumulation: use a
        # relative tolerance so it holds for differently-scaled real inputs.
        err = float(jnp.max(jnp.abs(o - r)))
        scale = float(jnp.maximum(jnp.max(jnp.abs(r)), 1.0))
        assert err / scale < 5e-2, (err, scale)

    print("KERNEL_OK")
</pallas_src>

<mosaic_0001>
module attributes {stable_mosaic.version = 11 : i64} {
  func.func @enc_mnist_kernel(%arg0: i32, %arg1: memref<256x896xbf16, #tpu.memory_space<vmem>>, %arg2: memref<896x512xbf16, #tpu.memory_space<vmem>>, %arg3: memref<1x512xf32, #tpu.memory_space<vmem>>, %arg4: memref<512x128xbf16, #tpu.memory_space<vmem>>, %arg5: memref<1x128xf32, #tpu.memory_space<vmem>>, %arg6: memref<128x128xbf16, #tpu.memory_space<vmem>>, %arg7: memref<1x128xf32, #tpu.memory_space<vmem>>, %arg8: memref<256x128xbf16, #tpu.memory_space<vmem>>) attributes {dimension_semantics = [#tpu.dimension_semantics<parallel>], iteration_bounds = array<i64: 1>, scalar_prefetch = 0 : i64, scratch_operands = 0 : i64, tpu.core_type = #tpu.core_type<tc>, window_params = [{transform_indices = @transform_0, window_bounds = array<i64: 256, 896>}, {pipeline_mode = #tpu.pipeline_mode<synchronous>, transform_indices = @transform_1, window_bounds = array<i64: 896, 512>}, {pipeline_mode = #tpu.pipeline_mode<synchronous>, transform_indices = @transform_2, window_bounds = array<i64: 1, 512>}, {pipeline_mode = #tpu.pipeline_mode<synchronous>, transform_indices = @transform_3, window_bounds = array<i64: 512, 128>}, {pipeline_mode = #tpu.pipeline_mode<synchronous>, transform_indices = @transform_4, window_bounds = array<i64: 1, 128>}, {pipeline_mode = #tpu.pipeline_mode<synchronous>, transform_indices = @transform_5, window_bounds = array<i64: 128, 128>}, {pipeline_mode = #tpu.pipeline_mode<synchronous>, transform_indices = @transform_6, window_bounds = array<i64: 1, 128>}, {transform_indices = @transform_7, window_bounds = array<i64: 256, 128>}]} {
    %c0 = arith.constant 0 : index
    %c0_0 = arith.constant 0 : index
    %0 = vector.load %arg1[%c0, %c0_0] : memref<256x896xbf16, #tpu.memory_space<vmem>>, vector<256x896xbf16>
    %c0_1 = arith.constant 0 : index
    %c0_2 = arith.constant 0 : index
    %1 = vector.load %arg2[%c0_1, %c0_2] : memref<896x512xbf16, #tpu.memory_space<vmem>>, vector<896x512xbf16>
    %cst = arith.constant dense<0.000000e+00> : vector<256x512xf32>
    %2 = tpu.matmul %0, %1, %cst {dimension_numbers = #tpu.dot_dimension_numbers<[1], [0], [0], [1], [0, 0, 1, 1], [], []>} : vector<256x896xbf16>, vector<896x512xbf16>, vector<256x512xf32> -> vector<256x512xf32>
    %c0_3 = arith.constant 0 : index
    %c0_4 = arith.constant 0 : index
    %3 = vector.load %arg3[%c0_3, %c0_4] : memref<1x512xf32, #tpu.memory_space<vmem>>, vector<1x512xf32>
    %4 = vector.broadcast %3 : vector<1x512xf32> to vector<256x512xf32>
    %5 = arith.addf %2, %4 : vector<256x512xf32>
    %cst_5 = arith.constant 0.000000e+00 : f32
    %6 = vector.broadcast %cst_5 : f32 to vector<256x512xf32>
    %7 = arith.maximumf %5, %6 : vector<256x512xf32>
    %8 = arith.truncf %7 : vector<256x512xf32> to vector<256x512xbf16>
    %c0_6 = arith.constant 0 : index
    %c0_7 = arith.constant 0 : index
    %9 = vector.load %arg4[%c0_6, %c0_7] : memref<512x128xbf16, #tpu.memory_space<vmem>>, vector<512x128xbf16>
    %cst_8 = arith.constant dense<0.000000e+00> : vector<256x128xf32>
    %10 = tpu.matmul %8, %9, %cst_8 {dimension_numbers = #tpu.dot_dimension_numbers<[1], [0], [0], [1], [0, 0, 1, 1], [], []>} : vector<256x512xbf16>, vector<512x128xbf16>, vector<256x128xf32> -> vector<256x128xf32>
    %c0_9 = arith.constant 0 : index
    %c0_10 = arith.constant 0 : index
    %11 = vector.load %arg5[%c0_9, %c0_10] : memref<1x128xf32, #tpu.memory_space<vmem>>, vector<1x128xf32>
    %12 = vector.broadcast %11 : vector<1x128xf32> to vector<256x128xf32>
    %13 = arith.addf %10, %12 : vector<256x128xf32>
    %cst_11 = arith.constant 0.000000e+00 : f32
    %14 = vector.broadcast %cst_11 : f32 to vector<256x128xf32>
    %15 = arith.maximumf %13, %14 : vector<256x128xf32>
    %16 = arith.truncf %15 : vector<256x128xf32> to vector<256x128xbf16>
    %c0_12 = arith.constant 0 : index
    %c0_13 = arith.constant 0 : index
    %17 = vector.load %arg6[%c0_12, %c0_13] : memref<128x128xbf16, #tpu.memory_space<vmem>>, vector<128x128xbf16>
    %cst_14 = arith.constant dense<0.000000e+00> : vector<256x128xf32>
    %18 = tpu.matmul %16, %17, %cst_14 {dimension_numbers = #tpu.dot_dimension_numbers<[1], [0], [0], [1], [0, 0, 1, 1], [], []>} : vector<256x128xbf16>, vector<128x128xbf16>, vector<256x128xf32> -> vector<256x128xf32>
    %c0_15 = arith.constant 0 : index
    %c0_16 = arith.constant 0 : index
    %19 = vector.load %arg7[%c0_15, %c0_16] : memref<1x128xf32, #tpu.memory_space<vmem>>, vector<1x128xf32>
    %20 = vector.broadcast %19 : vector<1x128xf32> to vector<256x128xf32>
    %21 = arith.addf %18, %20 : vector<256x128xf32>
    %22 = arith.truncf %21 : vector<256x128xf32> to vector<256x128xbf16>
    %c0_17 = arith.constant 0 : index
    %c0_18 = arith.constant 0 : index
    %23 = vector.load %arg8[%c0_17, %c0_18] : memref<256x128xbf16, #tpu.memory_space<vmem>>, vector<256x128xbf16>
    tpu.vector_store %arg8[%c0_17, %c0_18], %22 {strides = array<i32>} : memref<256x128xbf16, #tpu.memory_space<vmem>>, vector<256x128xbf16>,
    return
  }
  func.func @transform_0(%arg0: i32) -> (i32, i32) {
    %c0_i32 = arith.constant 0 : i32
    %c0_i32_0 = arith.constant 0 : i32
    return %arg0, %c0_i32 : i32, i32
  }
  func.func @transform_1(%arg0: i32) -> (i32, i32) {
    %c0_i32 = arith.constant 0 : i32
    %c0_i32_0 = arith.constant 0 : i32
    %c0_i32_1 = arith.constant 0 : i32
    return %c0_i32, %c0_i32_0 : i32, i32
  }
  func.func @transform_2(%arg0: i32) -> (i32, i32) {
    %c0_i32 = arith.constant 0 : i32
    %c0_i32_0 = arith.constant 0 : i32
    %c0_i32_1 = arith.constant 0 : i32
    return %c0_i32, %c0_i32_0 : i32, i32
  }
  func.func @transform_3(%arg0: i32) -> (i32, i32) {
    %c0_i32 = arith.constant 0 : i32
    %c0_i32_0 = arith.constant 0 : i32
    %c0_i32_1 = arith.constant 0 : i32
    return %c0_i32, %c0_i32_0 : i32, i32
  }
  func.func @transform_4(%arg0: i32) -> (i32, i32) {
    %c0_i32 = arith.constant 0 : i32
    %c0_i32_0 = arith.constant 0 : i32
    %c0_i32_1 = arith.constant 0 : i32
    return %c0_i32, %c0_i32_0 : i32, i32
  }
  func.func @transform_5(%arg0: i32) -> (i32, i32) {
    %c0_i32 = arith.constant 0 : i32
    %c0_i32_0 = arith.constant 0 : i32
    %c0_i32_1 = arith.constant 0 : i32
    return %c0_i32, %c0_i32_0 : i32, i32
  }
  func.func @transform_6(%arg0: i32) -> (i32, i32) {
    %c0_i32 = arith.constant 0 : i32
    %c0_i32_0 = arith.constant 0 : i32
    %c0_i32_1 = arith.constant 0 : i32
    return %c0_i32, %c0_i32_0 : i32, i32
  }
  func.func @transform_7(%arg0: i32) -> (i32, i32) {
    %c0_i32 = arith.constant 0 : i32
    %c0_i32_0 = arith.constant 0 : i32
    return %arg0, %c0_i32 : i32, i32
  }
}

</mosaic_0001>

<llo_original>
// kernel: enc_mnist_forward.1
$region0: #{enc_mnist_forward.1}
  #allocation0 [shape = 'u32[]', space=smem, size = 0x4, offset = 0x4, fixed_abs, tag = 'smem constant byte address 0x4 - core index']
  #allocation1 [shape = 'u32[72,128]{1,0:T(1,128)}', space=vmem, size = 0x9000, scoped, tag = 'internal scratch']
  %s0 = inlined_call_operand.vmem [shape: bf16[256,896], index: 0, kind: input, shape index: {}]
  %s1 = inlined_call_operand.vmem [shape: bf16[896,512], index: 1, kind: input, shape index: {}]
  %s2 = inlined_call_operand.vmem [shape: f32[1,512], index: 2, kind: input, shape index: {}]
  %s3 = inlined_call_operand.vmem [shape: bf16[512,128], index: 3, kind: input, shape index: {}]
  %s4 = inlined_call_operand.vmem [shape: f32[1,128], index: 4, kind: input, shape index: {}]
  %s5 = inlined_call_operand.vmem [shape: bf16[128,128], index: 5, kind: input, shape index: {}]
  %s6 = inlined_call_operand.vmem [shape: f32[1,128], index: 6, kind: input, shape index: {}]
  %s7 = inlined_call_operand.vmem [shape: bf16[256,128], index: 7, kind: output, shape index: {}]
  %s8 = sld [smem:[#allocation0]]
  $region38: #{enc_mnist_forward.1} parent=0
    _
  %s10 = ssub.s32 1, %s8
  %s11 = scalar_select 0, %s10, %s8
  // Predicated region
  $region2: #{enc_mnist_forward.1} parent=0 // pred_check
    _
  $region3: #{enc_mnist_forward.1} parent=0 // pred_check_branch
    %13 = sbr.rel (0) target = $region5
  $region4: #{enc_mnist_forward.1} parent=0 // pred_region
    _
  $region5: #{enc_mnist_forward.1} parent=0 // pred_fallthru
    _
  // Predicated region
  $region6: #{enc_mnist_forward.1} parent=0 // pred_check
    _
  $region7: #{enc_mnist_forward.1} parent=0 // pred_check_branch
    %15 = sbr.rel (0) target = $region9
  $region8: #{enc_mnist_forward.1} parent=0 // pred_region
    _
  $region9: #{enc_mnist_forward.1} parent=0 // pred_fallthru
    _
  // Predicated region
  $region10: #{enc_mnist_forward.1} parent=0 // pred_check
    _
  $region11: #{enc_mnist_forward.1} parent=0 // pred_check_branch
    %17 = sbr.rel (0) target = $region13
  $region12: #{enc_mnist_forward.1} parent=0 // pred_region
    _
  $region13: #{enc_mnist_forward.1} parent=0 // pred_fallthru
    _
  // Predicated region
  $region14: #{enc_mnist_forward.1} parent=0 // pred_check
    _
  $region15: #{enc_mnist_forward.1} parent=0 // pred_check_branch
    %19 = sbr.rel (0) target = $region17
  $region16: #{enc_mnist_forward.1} parent=0 // pred_region
    _
  $region17: #{enc_mnist_forward.1} parent=0 // pred_fallthru
    _
  // Predicated region
  $region18: #{enc_mnist_forward.1} parent=0 // pred_check
    _
  $region19: #{enc_mnist_forward.1} parent=0 // pred_check_branch
    %21 = sbr.rel (0) target = $region21
  $region20: #{enc_mnist_forward.1} parent=0 // pred_region
    _
  $region21: #{enc_mnist_forward.1} parent=0 // pred_fallthru
    _
  // Predicated region
  $region22: #{enc_mnist_forward.1} parent=0 // pred_check
    _
  $region23: #{enc_mnist_forward.1} parent=0 // pred_check_branch
    %23 = sbr.rel (0) target = $region25
  $region24: #{enc_mnist_forward.1} parent=0 // pred_region
    _
  $region25: #{enc_mnist_forward.1} parent=0 // pred_fallthru
    _
  // Predicated region
  $region26: #{enc_mnist_forward.1} parent=0 // pred_check
    _
  $region27: #{enc_mnist_forward.1} parent=0 // pred_check_branch
    %25 = sbr.rel (0) target = $region29
  $region28: #{enc_mnist_forward.1} parent=0 // pred_region
    _
  $region29: #{enc_mnist_forward.1} parent=0 // pred_fallthru
    _
  %v26 = vld [vmem:[%s0] sm:$0xff]
  %v27 = vld [vmem:[%s0 + $0x8] sm:$0xff]
  %v28 = vld [vmem:[%s0 + $0x10] sm:$0xff]
  %v29 = vld [vmem:[%s0 + $0x18] sm:$0xf]
  %v30 = vld [vmem:[%s0 + $0x1c] sm:$0xff]
  %v31 = vld [vmem:[%s0 + $0x24] sm:$0xff]
  %v32 = vld [vmem:[%s0 + $0x2c] sm:$0xff]
  %v33 = vld [vmem:[%s0 + $0x34] sm:$0xf]
  %v34 = vld [vmem:[%s0 + $0x38] sm:$0xff]
  %v35 = vld [vmem:[%s0 + $0x40] sm:$0xff]
  %v36 = vld [vmem:[%s0 + $0x48] sm:$0xff]
  %v37 = vld [vmem:[%s0 + $0x50] sm:$0xf]
  %v38 = vld [vmem:[%s0 + $0x54] sm:$0xff]
  %v39 = vld [vmem:[%s0 + $0x5c] sm:$0xff]
  %v40 = vld [vmem:[%s0 + $0x64] sm:$0xff]
  %v41 = vld [vmem:[%s0 + $0x6c] sm:$0xf]
  %v42 = vld [vmem:[%s0 + $0x70] sm:$0xff]
  %v43 = vld [vmem:[%s0 + $0x78] sm:$0xff]
  %v44 = vld [vmem:[%s0 + $0x80] sm:$0xff]
  %v45 = vld [vmem:[%s0 + $0x88] sm:$0xf]
  %v46 = vld [vmem:[%s0 + $0x8c] sm:$0xff]
  %v47 = vld [vmem:[%s0 + $0x94] sm:$0xff]
  %v48 = vld [vmem:[%s0 + $0x9c] sm:$0xff]
  %v49 = vld [vmem:[%s0 + $0xa4] sm:$0xf]
  %v50 = vld [vmem:[%s0 + $0xa8] sm:$0xff]
  %v51 = vld [vmem:[%s0 + $0xb0] sm:$0xff]
  %v52 = vld [vmem:[%s0 + $0xb8] sm:$0xff]
  %v53 = vld [vmem:[%s0 + $0xc0] sm:$0xf]
  %v54 = vld [vmem:[%s0 + $0xc4] sm:$0xff]
  %v55 = vld [vmem:[%s0 + $0xcc] sm:$0xff]
  %v56 = vld [vmem:[%s0 + $0xd4] sm:$0xff]
  %v57 = vld [vmem:[%s0 + $0xdc] sm:$0xf]
  %v58 = vld [vmem:[%s0 + $0xe0] sm:$0xff]
  %v59 = vld [vmem:[%s0 + $0xe8] sm:$0xff]
  %v60 = vld [vmem:[%s0 + $0xf0] sm:$0xff]
  %v61 = vld [vmem:[%s0 + $0xf8] sm:$0xf]
  %v62 = vld [vmem:[%s0 + $0xfc] sm:$0xff]
  %v63 = vld [vmem:[%s0 + $0x104] sm:$0xff]
  %v64 = vld [vmem:[%s0 + $0x10c] sm:$0xff]
  %v65 = vld [vmem:[%s0 + $0x114] sm:$0xf]
  %v66 = vld [vmem:[%s0 + $0x118] sm:$0xff]
  %v67 = vld [vmem:[%s0 + $0x120] sm:$0xff]
  %v68 = vld [vmem:[%s0 + $0x128] sm:$0xff]
  %v69 = vld [vmem:[%s0 + $0x130] sm:$0xf]
  %v70 = vld [vmem:[%s0 + $0x134] sm:$0xff]
  %v71 = vld [vmem:[%s0 + $0x13c] sm:$0xff]
  %v72 = vld [vmem:[%s0 + $0x144] sm:$0xff]
  %v73 = vld [vmem:[%s0 + $0x14c] sm:$0xf]
  %v74 = vld [vmem:[%s0 + $0x150] sm:$0xff]
  %v75 = vld [vmem:[%s0 + $0x158] sm:$0xff]
  %v76 = vld [vmem:[%s0 + $0x160] sm:$0xff]
  %v77 = vld [vmem:[%s0 + $0x168] sm:$0xf]
  %v78 = vld [vmem:[%s0 + $0x16c] sm:$0xff]
  %v79 = vld [vmem:[%s0 + $0x174] sm:$0xff]
  %v80 = vld [vmem:[%s0 + $0x17c] sm:$0xff]
  %v81 = vld [vmem:[%s0 + $0x184] sm:$0xf]
  %v82 = vld [vmem:[%s0 + $0x188] sm:$0xff]
  %v83 = vld [vmem:[%s0 + $0x190] sm:$0xff]
  %v84 = vld [vmem:[%s0 + $0x198] sm:$0xff]
  %v85 = vld [vmem:[%s0 + $0x1a0] sm:$0xf]
  %v86 = vld [vmem:[%s0 + $0x1a4] sm:$0xff]
  %v87 = vld [vmem:[%s0 + $0x1ac] sm:$0xff]
  %v88 = vld [vmem:[%s0 + $0x1b4] sm:$0xff]
  %v89 = vld [vmem:[%s0 + $0x1bc] sm:$0xf]
  %v90 = vld [vmem:[%s0 + $0x1c0] sm:$0xff]
  %v91 = vld [vmem:[%s0 + $0x1c8] sm:$0xff]
  %v92 = vld [vmem:[%s0 + $0x1d0] sm:$0xff]
  %v93 = vld [vmem:[%s0 + $0x1d8] sm:$0xf]
  %v94 = vld [vmem:[%s0 + $0x1dc] sm:$0xff]
  %v95 = vld [vmem:[%s0 + $0x1e4] sm:$0xff]
  %v96 = vld [vmem:[%s0 + $0x1ec] sm:$0xff]
  %v97 = vld [vmem:[%s0 + $0x1f4] sm:$0xf]
  %v98 = vld [vmem:[%s0 + $0x1f8] sm:$0xff]
  %v99 = vld [vmem:[%s0 + $0x200] sm:$0xff]
  %v100 = vld [vmem:[%s0 + $0x208] sm:$0xff]
  %v101 = vld [vmem:[%s0 + $0x210] sm:$0xf]
  %v102 = vld [vmem:[%s0 + $0x214] sm:$0xff]
  %v103 = vld [vmem:[%s0 + $0x21c] sm:$0xff]
  %v104 = vld [vmem:[%s0 + $0x224] sm:$0xff]
  %v105 = vld [vmem:[%s0 + $0x22c] sm:$0xf]
  %v106 = vld [vmem:[%s0 + $0x230] sm:$0xff]
  %v107 = vld [vmem:[%s0 + $0x238] sm:$0xff]
  %v108 = vld [vmem:[%s0 + $0x240] sm:$0xff]
  %v109 = vld [vmem:[%s0 + $0x248] sm:$0xf]
  %v110 = vld [vmem:[%s0 + $0x24c] sm:$0xff]
  %v111 = vld [vmem:[%s0 + $0x254] sm:$0xff]
  %v112 = vld [vmem:[%s0 + $0x25c] sm:$0xff]
  %v113 = vld [vmem:[%s0 + $0x264] sm:$0xf]
  %v114 = vld [vmem:[%s0 + $0x268] sm:$0xff]
  %v115 = vld [vmem:[%s0 + $0x270] sm:$0xff]
  %v116 = vld [vmem:[%s0 + $0x278] sm:$0xff]
  %v117 = vld [vmem:[%s0 + $0x280] sm:$0xf]
  %v118 = vld [vmem:[%s0 + $0x284] sm:$0xff]
  %v119 = vld [vmem:[%s0 + $0x28c] sm:$0xff]
  %v120 = vld [vmem:[%s0 + $0x294] sm:$0xff]
  %v121 = vld [vmem:[%s0 + $0x29c] sm:$0xf]
  %v122 = vld [vmem:[%s0 + $0x2a0] sm:$0xff]
  %v123 = vld [vmem:[%s0 + $0x2a8] sm:$0xff]
  %v124 = vld [vmem:[%s0 + $0x2b0] sm:$0xff]
  %v125 = vld [vmem:[%s0 + $0x2b8] sm:$0xf]
  %v126 = vld [vmem:[%s0 + $0x2bc] sm:$0xff]
  %v127 = vld [vmem:[%s0 + $0x2c4] sm:$0xff]
  %v128 = vld [vmem:[%s0 + $0x2cc] sm:$0xff]
  %v129 = vld [vmem:[%s0 + $0x2d4] sm:$0xf]
  %v130 = vld [vmem:[%s0 + $0x2d8] sm:$0xff]
  %v131 = vld [vmem:[%s0 + $0x2e0] sm:$0xff]
  %v132 = vld [vmem:[%s0 + $0x2e8] sm:$0xff]
  %v133 = vld [vmem:[%s0 + $0x2f0] sm:$0xf]
  %v134 = vld [vmem:[%s0 + $0x2f4] sm:$0xff]
  %v135 = vld [vmem:[%s0 + $0x2fc] sm:$0xff]
  %v136 = vld [vmem:[%s0 + $0x304] sm:$0xff]
  %v137 = vld [vmem:[%s0 + $0x30c] sm:$0xf]
  %v138 = vld [vmem:[%s0 + $0x310] sm:$0xff]
  %v139 = vld [vmem:[%s0 + $0x318] sm:$0xff]
  %v140 = vld [vmem:[%s0 + $0x320] sm:$0xff]
  %v141 = vld [vmem:[%s0 + $0x328] sm:$0xf]
  %v142 = vld [vmem:[%s0 + $0x32c] sm:$0xff]
  %v143 = vld [vmem:[%s0 + $0x334] sm:$0xff]
  %v144 = vld [vmem:[%s0 + $0x33c] sm:$0xff]
  %v145 = vld [vmem:[%s0 + $0x344] sm:$0xf]
  %v146 = vld [vmem:[%s0 + $0x348] sm:$0xff]
  %v147 = vld [vmem:[%s0 + $0x350] sm:$0xff]
  %v148 = vld [vmem:[%s0 + $0x358] sm:$0xff]
  %v149 = vld [vmem:[%s0 + $0x360] sm:$0xf]
  %v150 = vld [vmem:[%s0 + $0x364] sm:$0xff]
  %v151 = vld [vmem:[%s0 + $0x36c] sm:$0xff]
  %v152 = vld [vmem:[%s0 + $0x374] sm:$0xff]
  %v153 = vld [vmem:[%s0 + $0x37c] sm:$0xf]
  %v154 = vld [vmem:[%s1] sm:$0xff]
  %v155 = vld [vmem:[%s1 + $0x8] sm:$0xff]
  %v156 = vld [vmem:[%s1 + $0x10] sm:$0xff]
  %v157 = vld [vmem:[%s1 + $0x18] sm:$0xff]
  %v158 = vld [vmem:[%s1 + $0x20] sm:$0xff]
  %v159 = vld [vmem:[%s1 + $0x28] sm:$0xff]
  %v160 = vld [vmem:[%s1 + $0x30] sm:$0xff]
  %v161 = vld [vmem:[%s1 + $0x38] sm:$0xff]
  %v162 = vld [vmem:[%s1 + $0x40] sm:$0xff]
  %v163 = vld [vmem:[%s1 + $0x48] sm:$0xff]
  %v164 = vld [vmem:[%s1 + $0x50] sm:$0xff]
  %v165 = vld [vmem:[%s1 + $0x58] sm:$0xff]
  %v166 = vld [vmem:[%s1 + $0x60] sm:$0xff]
  %v167 = vld [vmem:[%s1 + $0x68] sm:$0xff]
  %v168 = vld [vmem:[%s1 + $0x70] sm:$0xff]
  %v169 = vld [vmem:[%s1 + $0x78] sm:$0xff]
  %v170 = vld [vmem:[%s1 + $0x80] sm:$0xff]
  %v171 = vld [vmem:[%s1 + $0x88] sm:$0xff]
  %v172 = vld [vmem:[%s1 + $0x90] sm:$0xff]
  %v173 = vld [vmem:[%s1 + $0x98] sm:$0xff]
  %v174 = vld [vmem:[%s1 + $0xa0] sm:$0xff]
  %v175 = vld [vmem:[%s1 + $0xa8] sm:$0xff]
  %v176 = vld [vmem:[%s1 + $0xb0] sm:$0xff]
  %v177 = vld [vmem:[%s1 + $0xb8] sm:$0xff]
  %v178 = vld [vmem:[%s1 + $0xc0] sm:$0xff]
  %v179 = vld [vmem:[%s1 + $0xc8] sm:$0xff]
  %v180 = vld [vmem:[%s1 + $0xd0] sm:$0xff]
  %v181 = vld [vmem:[%s1 + $0xd8] sm:$0xff]
  %v182 = vld [vmem:[%s1 + $0xe0] sm:$0xff]
  %v183 = vld [vmem:[%s1 + $0xe8] sm:$0xff]
  %v184 = vld [vmem:[%s1 + $0xf0] sm:$0xff]
  %v185 = vld [vmem:[%s1 + $0xf8] sm:$0xff]
  %v186 = vld [vmem:[%s1 + $0x100] sm:$0xff]
  %v187 = vld [vmem:[%s1 + $0x108] sm:$0xff]
  %v188 = vld [vmem:[%s1 + $0x110] sm:$0xff]
  %v189 = vld [vmem:[%s1 + $0x118] sm:$0xff]
  %v190 = vld [vmem:[%s1 + $0x120] sm:$0xff]
  %v191 = vld [vmem:[%s1 + $0x128] sm:$0xff]
  %v192 = vld [vmem:[%s1 + $0x130] sm:$0xff]
  %v193 = vld [vmem:[%s1 + $0x138] sm:$0xff]
  %v194 = vld [vmem:[%s1 + $0x140] sm:$0xff]
  %v195 = vld [vmem:[%s1 + $0x148] sm:$0xff]
  %v196 = vld [vmem:[%s1 + $0x150] sm:$0xff]
  %v197 = vld [vmem:[%s1 + $0x158] sm:$0xff]
  %v198 = vld [vmem:[%s1 + $0x160] sm:$0xff]
  %v199 = vld [vmem:[%s1 + $0x168] sm:$0xff]
  %v200 = vld [vmem:[%s1 + $0x170] sm:$0xff]
  %v201 = vld [vmem:[%s1 + $0x178] sm:$0xff]
  %v202 = vld [vmem:[%s1 + $0x180] sm:$0xff]
  %v203 = vld [vmem:[%s1 + $0x188] sm:$0xff]
  %v204 = vld [vmem:[%s1 + $0x190] sm:$0xff]
  %v205 = vld [vmem:[%s1 + $0x198] sm:$0xff]
  %v206 = vld [vmem:[%s1 + $0x1a0] sm:$0xff]
  %v207 = vld [vmem:[%s1 + $0x1a8] sm:$0xff]
  %v208 = vld [vmem:[%s1 + $0x1b0] sm:$0xff]
  %v209 = vld [vmem:[%s1 + $0x1b8] sm:$0xff]
  %v210 = vld [vmem:[%s1 + $0x1c0] sm:$0xff]
  %v211 = vld [vmem:[%s1 + $0x1c8] sm:$0xff]
  %v212 = vld [vmem:[%s1 + $0x1d0] sm:$0xff]
  %v213 = vld [vmem:[%s1 + $0x1d8] sm:$0xff]
  %v214 = vld [vmem:[%s1 + $0x1e0] sm:$0xff]
  %v215 = vld [vmem:[%s1 + $0x1e8] sm:$0xff]
  %v216 = vld [vmem:[%s1 + $0x1f0] sm:$0xff]
  %v217 = vld [vmem:[%s1 + $0x1f8] sm:$0xff]
  %v218 = vld [vmem:[%s1 + $0x200] sm:$0xff]
  %v219 = vld [vmem:[%s1 + $0x208] sm:$0xff]
  %v220 = vld [vmem:[%s1 + $0x210] sm:$0xff]
  %v221 = vld [vmem:[%s1 + $0x218] sm:$0xff]
  %v222 = vld [vmem:[%s1 + $0x220] sm:$0xff]
  %v223 = vld [vmem:[%s1 + $0x228] sm:$0xff]
  %v224 = vld [vmem:[%s1 + $0x230] sm:$0xff]
  %v225 = vld [vmem:[%s1 + $0x238] sm:$0xff]
  %v226 = vld [vmem:[%s1 + $0x240] sm:$0xff]
  %v227 = vld [vmem:[%s1 + $0x248] sm:$0xff]
  %v228 = vld [vmem:[%s1 + $0x250] sm:$0xff]
  %v229 = vld [vmem:[%s1 + $0x258] sm:$0xff]
  %v230 = vld [vmem:[%s1 + $0x260] sm:$0xff]
  %v231 = vld [vmem:[%s1 + $0x268] sm:$0xff]
  %v232 = vld [vmem:[%s1 + $0x270] sm:$0xff]
  %v233 = vld [vmem:[%s1 + $0x278] sm:$0xff]
  %v234 = vld [vmem:[%s1 + $0x280] sm:$0xff]
  %v235 = vld [vmem:[%s1 + $0x288] sm:$0xff]
  %v236 = vld [vmem:[%s1 + $0x290] sm:$0xff]
  %v237 = vld [vmem:[%s1 + $0x298] sm:$0xff]
  %v238 = vld [vmem:[%s1 + $0x2a0] sm:$0xff]
  %v239 = vld [vmem:[%s1 + $0x2a8] sm:$0xff]
  %v240 = vld [vmem:[%s1 + $0x2b0] sm:$0xff]
  %v241 = vld [vmem:[%s1 + $0x2b8] sm:$0xff]
  %v242 = vld [vmem:[%s1 + $0x2c0] sm:$0xff]
  %v243 = vld [vmem:[%s1 + $0x2c8] sm:$0xff]
  %v244 = vld [vmem:[%s1 + $0x2d0] sm:$0xff]
  %v245 = vld [vmem:[%s1 + $0x2d8] sm:$0xff]
  %v246 = vld [vmem:[%s1 + $0x2e0] sm:$0xff]
  %v247 = vld [vmem:[%s1 + $0x2e8] sm:$0xff]
  %v248 = vld [vmem:[%s1 + $0x2f0] sm:$0xff]
  %v249 = vld [vmem:[%s1 + $0x2f8] sm:$0xff]
  %v250 = vld [vmem:[%s1 + $0x300] sm:$0xff]
  %v251 = vld [vmem:[%s1 + $0x308] sm:$0xff]
  %v252 = vld [vmem:[%s1 + $0x310] sm:$0xff]
  %v253 = vld [vmem:[%s1 + $0x318] sm:$0xff]
  %v254 = vld [vmem:[%s1 + $0x320] sm:$0xff]
  %v255 = vld [vmem:[%s1 + $0x328] sm:$0xff]
  %v256 = vld [vmem:[%s1 + $0x330] sm:$0xff]
  %v257 = vld [vmem:[%s1 + $0x338] sm:$0xff]
  %v258 = vld [vmem:[%s1 + $0x340] sm:$0xff]
  %v259 = vld [vmem:[%s1 + $0x348] sm:$0xff]
  %v260 = vld [vmem:[%s1 + $0x350] sm:$0xff]
  %v261 = vld [vmem:[%s1 + $0x358] sm:$0xff]
  %v262 = vld [vmem:[%s1 + $0x360] sm:$0xff]
  %v263 = vld [vmem:[%s1 + $0x368] sm:$0xff]
  %v264 = vld [vmem:[%s1 + $0x370] sm:$0xff]
  %v265 = vld [vmem:[%s1 + $0x378] sm:$0xff]
  %v266 = vld [vmem:[%s1 + $0x380] sm:$0xff]
  %v267 = vld [vmem:[%s1 + $0x388] sm:$0xff]
  %v268 = vld [vmem:[%s1 + $0x390] sm:$0xff]
  %v269 = vld [vmem:[%s1 + $0x398] sm:$0xff]
  %v270 = vld [vmem:[%s1 + $0x3a0] sm:$0xff]
  %v271 = vld [vmem:[%s1 + $0x3a8] sm:$0xff]
  %v272 = vld [vmem:[%s1 + $0x3b0] sm:$0xff]
  %v273 = vld [vmem:[%s1 + $0x3b8] sm:$0xff]
  %v274 = vld [vmem:[%s1 + $0x3c0] sm:$0xff]
  %v275 = vld [vmem:[%s1 + $0x3c8] sm:$0xff]
  %v276 = vld [vmem:[%s1 + $0x3d0] sm:$0xff]
  %v277 = vld [vmem:[%s1 + $0x3d8] sm:$0xff]
  %v278 = vld [vmem:[%s1 + $0x3e0] sm:$0xff]
  %v279 = vld [vmem:[%s1 + $0x3e8] sm:$0xff]
  %v280 = vld [vmem:[%s1 + $0x3f0] sm:$0xff]
  %v281 = vld [vmem:[%s1 + $0x3f8] sm:$0xff]
  %v282 = vld [vmem:[%s1 + $0x400] sm:$0xff]
  %v283 = vld [vmem:[%s1 + $0x408] sm:$0xff]
  %v284 = vld [vmem:[%s1 + $0x410] sm:$0xff]
  %v285 = vld [vmem:[%s1 + $0x418] sm:$0xff]
  %v286 = vld [vmem:[%s1 + $0x420] sm:$0xff]
  %v287 = vld [vmem:[%s1 + $0x428] sm:$0xff]
  %v288 = vld [vmem:[%s1 + $0x430] sm:$0xff]
  %v289 = vld [vmem:[%s1 + $0x438] sm:$0xff]
  %v290 = vld [vmem:[%s1 + $0x440] sm:$0xff]
  %v291 = vld [vmem:[%s1 + $0x448] sm:$0xff]
  %v292 = vld [vmem:[%s1 + $0x450] sm:$0xff]
  %v293 = vld [vmem:[%s1 + $0x458] sm:$0xff]
  %v294 = vld [vmem:[%s1 + $0x460] sm:$0xff]
  %v295 = vld [vmem:[%s1 + $0x468] sm:$0xff]
  %v296 = vld [vmem:[%s1 + $0x470] sm:$0xff]
  %v297 = vld [vmem:[%s1 + $0x478] sm:$0xff]
  %v298 = vld [vmem:[%s1 + $0x480] sm:$0xff]
  %v299 = vld [vmem:[%s1 + $0x488] sm:$0xff]
  %v300 = vld [vmem:[%s1 + $0x490] sm:$0xff]
  %v301 = vld [vmem:[%s1 + $0x498] sm:$0xff]
  %v302 = vld [vmem:[%s1 + $0x4a0] sm:$0xff]
  %v303 = vld [vmem:[%s1 + $0x4a8] sm:$0xff]
  %v304 = vld [vmem:[%s1 + $0x4b0] sm:$0xff]
  %v305 = vld [vmem:[%s1 + $0x4b8] sm:$0xff]
  %v306 = vld [vmem:[%s1 + $0x4c0] sm:$0xff]
  %v307 = vld [vmem:[%s1 + $0x4c8] sm:$0xff]
  %v308 = vld [vmem:[%s1 + $0x4d0] sm:$0xff]
  %v309 = vld [vmem:[%s1 + $0x4d8] sm:$0xff]
  %v310 = vld [vmem:[%s1 + $0x4e0] sm:$0xff]
  %v311 = vld [vmem:[%s1 + $0x4e8] sm:$0xff]
  %v312 = vld [vmem:[%s1 + $0x4f0] sm:$0xff]
  %v313 = vld [vmem:[%s1 + $0x4f8] sm:$0xff]
  %v314 = vld [vmem:[%s1 + $0x500] sm:$0xff]
  %v315 = vld [vmem:[%s1 + $0x508] sm:$0xff]
  %v316 = vld [vmem:[%s1 + $0x510] sm:$0xff]
  %v317 = vld [vmem:[%s1 + $0x518] sm:$0xff]
  %v318 = vld [vmem:[%s1 + $0x520] sm:$0xff]
  %v319 = vld [vmem:[%s1 + $0x528] sm:$0xff]
  %v320 = vld [vmem:[%s1 + $0x530] sm:$0xff]
  %v321 = vld [vmem:[%s1 + $0x538] sm:$0xff]
  %v322 = vld [vmem:[%s1 + $0x540] sm:$0xff]
  %v323 = vld [vmem:[%s1 + $0x548] sm:$0xff]
  %v324 = vld [vmem:[%s1 + $0x550] sm:$0xff]
  %v325 = vld [vmem:[%s1 + $0x558] sm:$0xff]
  %v326 = vld [vmem:[%s1 + $0x560] sm:$0xff]
  %v327 = vld [vmem:[%s1 + $0x568] sm:$0xff]
  %v328 = vld [vmem:[%s1 + $0x570] sm:$0xff]
  %v329 = vld [vmem:[%s1 + $0x578] sm:$0xff]
  %v330 = vld [vmem:[%s1 + $0x580] sm:$0xff]
  %v331 = vld [vmem:[%s1 + $0x588] sm:$0xff]
  %v332 = vld [vmem:[%s1 + $0x590] sm:$0xff]
  %v333 = vld [vmem:[%s1 + $0x598] sm:$0xff]
  %v334 = vld [vmem:[%s1 + $0x5a0] sm:$0xff]
  %v335 = vld [vmem:[%s1 + $0x5a8] sm:$0xff]
  %v336 = vld [vmem:[%s1 + $0x5b0] sm:$0xff]
  %v337 = vld [vmem:[%s1 + $0x5b8] sm:$0xff]
  %v338 = vld [vmem:[%s1 + $0x5c0] sm:$0xff]
  %v339 = vld [vmem:[%s1 + $0x5c8] sm:$0xff]
  %v340 = vld [vmem:[%s1 + $0x5d0] sm:$0xff]
  %v341 = vld [vmem:[%s1 + $0x5d8] sm:$0xff]
  %v342 = vld [vmem:[%s1 + $0x5e0] sm:$0xff]
  %v343 = vld [vmem:[%s1 + $0x5e8] sm:$0xff]
  %v344 = vld [vmem:[%s1 + $0x5f0] sm:$0xff]
  %v345 = vld [vmem:[%s1 + $0x5f8] sm:$0xff]
  %v346 = vld [vmem:[%s1 + $0x600] sm:$0xff]
  %v347 = vld [vmem:[%s1 + $0x608] sm:$0xff]
  %v348 = vld [vmem:[%s1 + $0x610] sm:$0xff]
  %v349 = vld [vmem:[%s1 + $0x618] sm:$0xff]
  %v350 = vld [vmem:[%s1 + $0x620] sm:$0xff]
  %v351 = vld [vmem:[%s1 + $0x628] sm:$0xff]
  %v352 = vld [vmem:[%s1 + $0x630] sm:$0xff]
  %v353 = vld [vmem:[%s1 + $0x638] sm:$0xff]
  %v354 = vld [vmem:[%s1 + $0x640] sm:$0xff]
  %v355 = vld [vmem:[%s1 + $0x648] sm:$0xff]
  %v356 = vld [vmem:[%s1 + $0x650] sm:$0xff]
  %v357 = vld [vmem:[%s1 + $0x658] sm:$0xff]
  %v358 = vld [vmem:[%s1 + $0x660] sm:$0xff]
  %v359 = vld [vmem:[%s1 + $0x668] sm:$0xff]
  %v360 = vld [vmem:[%s1 + $0x670] sm:$0xff]
  %v361 = vld [vmem:[%s1 + $0x678] sm:$0xff]
  %v362 = vld [vmem:[%s1 + $0x680] sm:$0xff]
  %v363 = vld [vmem:[%s1 + $0x688] sm:$0xff]
  %v364 = vld [vmem:[%s1 + $0x690] sm:$0xff]
  %v365 = vld [vmem:[%s1 + $0x698] sm:$0xff]
  %v366 = vld [vmem:[%s1 + $0x6a0] sm:$0xff]
  %v367 = vld [vmem:[%s1 + $0x6a8] sm:$0xff]
  %v368 = vld [vmem:[%s1 + $0x6b0] sm:$0xff]
  %v369 = vld [vmem:[%s1 + $0x6b8] sm:$0xff]
  %v370 = vld [vmem:[%s1 + $0x6c0] sm:$0xff]
  %v371 = vld [vmem:[%s1 + $0x6c8] sm:$0xff]
  %v372 = vld [vmem:[%s1 + $0x6d0] sm:$0xff]
  %v373 = vld [vmem:[%s1 + $0x6d8] sm:$0xff]
  %v374 = vld [vmem:[%s1 + $0x6e0] sm:$0xff]
  %v375 = vld [vmem:[%s1 + $0x6e8] sm:$0xff]
  %v376 = vld [vmem:[%s1 + $0x6f0] sm:$0xff]
  %v377 = vld [vmem:[%s1 + $0x6f8] sm:$0xff]
  %v378 = vld [vmem:[%s2] sm:$0xf]
  %v380 = vperm.slane %v378, 0
  %v381 = vperm.slane %v378, 1
  %v382 = vperm.slane %v378, 2
  %v383 = vperm.slane %v378, 3
  %v516 = vunpack.c.l.b16 %v26
  %v517 = vunpack.c.h.b16 %v26
  %v518 = vunpack.c.l.b16 %v27
  %v519 = vunpack.c.h.b16 %v27
  %v520 = vunpack.c.l.b16 %v28
  %v521 = vunpack.c.h.b16 %v28
  %v522 = vunpack.c.l.b16 %v29
  %v523 = vunpack.c.l.b16 %v30
  %v524 = vunpack.c.h.b16 %v30
  %v525 = vunpack.c.l.b16 %v31
  %v526 = vunpack.c.h.b16 %v31
  %v527 = vunpack.c.l.b16 %v32
  %v528 = vunpack.c.h.b16 %v32
  %v529 = vunpack.c.l.b16 %v33
  %v530 = vunpack.c.l.b16 %v34
  %v531 = vunpack.c.h.b16 %v34
  %v532 = vunpack.c.l.b16 %v35
  %v533 = vunpack.c.h.b16 %v35
  %v534 = vunpack.c.l.b16 %v36
  %v535 = vunpack.c.h.b16 %v36
  %v536 = vunpack.c.l.b16 %v37
  %v537 = vunpack.c.l.b16 %v38
  %v538 = vunpack.c.h.b16 %v38
  %v539 = vunpack.c.l.b16 %v39
  %v540 = vunpack.c.h.b16 %v39
  %v541 = vunpack.c.l.b16 %v40
  %v542 = vunpack.c.h.b16 %v40
  %v543 = vunpack.c.l.b16 %v41
  %v544 = vunpack.c.l.b16 %v42
  %v545 = vunpack.c.h.b16 %v42
  %v546 = vunpack.c.l.b16 %v43
  %v547 = vunpack.c.h.b16 %v43
  %v548 = vunpack.c.l.b16 %v44
  %v549 = vunpack.c.h.b16 %v44
  %v550 = vunpack.c.l.b16 %v45
  %v551 = vunpack.c.l.b16 %v46
  %v552 = vunpack.c.h.b16 %v46
  %v553 = vunpack.c.l.b16 %v47
  %v554 = vunpack.c.h.b16 %v47
  %v555 = vunpack.c.l.b16 %v48
  %v556 = vunpack.c.h.b16 %v48
  %v557 = vunpack.c.l.b16 %v49
  %v558 = vunpack.c.l.b16 %v50
  %v559 = vunpack.c.h.b16 %v50
  %v560 = vunpack.c.l.b16 %v51
  %v561 = vunpack.c.h.b16 %v51
  %v562 = vunpack.c.l.b16 %v52
  %v563 = vunpack.c.h.b16 %v52
  %v564 = vunpack.c.l.b16 %v53
  %v565 = vunpack.c.l.b16 %v54
  %v566 = vunpack.c.h.b16 %v54
  %v567 = vunpack.c.l.b16 %v55
  %v568 = vunpack.c.h.b16 %v55
  %v569 = vunpack.c.l.b16 %v56
  %v570 = vunpack.c.h.b16 %v56
  %v571 = vunpack.c.l.b16 %v57
  %v572 = vunpack.c.l.b16 %v58
  %v573 = vunpack.c.h.b16 %v58
  %v574 = vunpack.c.l.b16 %v59
  %v575 = vunpack.c.h.b16 %v59
  %v576 = vunpack.c.l.b16 %v60
  %v577 = vunpack.c.h.b16 %v60
  %v578 = vunpack.c.l.b16 %v61
  %v579 = vunpack.c.l.b16 %v62
  %v580 = vunpack.c.h.b16 %v62
  %v581 = vunpack.c.l.b16 %v63
  %v582 = vunpack.c.h.b16 %v63
  %v583 = vunpack.c.l.b16 %v64
  %v584 = vunpack.c.h.b16 %v64
  %v585 = vunpack.c.l.b16 %v65
  %v586 = vunpack.c.l.b16 %v66
  %v587 = vunpack.c.h.b16 %v66
  %v588 = vunpack.c.l.b16 %v67
  %v589 = vunpack.c.h.b16 %v67
  %v590 = vunpack.c.l.b16 %v68
  %v591 = vunpack.c.h.b16 %v68
  %v592 = vunpack.c.l.b16 %v69
  %v593 = vunpack.c.l.b16 %v70
  %v594 = vunpack.c.h.b16 %v70
  %v595 = vunpack.c.l.b16 %v71
  %v596 = vunpack.c.h.b16 %v71
  %v597 = vunpack.c.l.b16 %v72
  %v598 = vunpack.c.h.b16 %v72
  %v599 = vunpack.c.l.b16 %v73
  %v600 = vunpack.c.l.b16 %v74
  %v601 = vunpack.c.h.b16 %v74
  %v602 = vunpack.c.l.b16 %v75
  %v603 = vunpack.c.h.b16 %v75
  %v604 = vunpack.c.l.b16 %v76
  %v605 = vunpack.c.h.b16 %v76
  %v606 = vunpack.c.l.b16 %v77
  %v607 = vunpack.c.l.b16 %v78
  %v608 = vunpack.c.h.b16 %v78
  %v609 = vunpack.c.l.b16 %v79
  %v610 = vunpack.c.h.b16 %v79
  %v611 = vunpack.c.l.b16 %v80
  %v612 = vunpack.c.h.b16 %v80
  %v613 = vunpack.c.l.b16 %v81
  %v614 = vunpack.c.l.b16 %v82
  %v615 = vunpack.c.h.b16 %v82
  %v616 = vunpack.c.l.b16 %v83
  %v617 = vunpack.c.h.b16 %v83
  %v618 = vunpack.c.l.b16 %v84
  %v619 = vunpack.c.h.b16 %v84
  %v620 = vunpack.c.l.b16 %v85
  %v621 = vunpack.c.l.b16 %v86
  %v622 = vunpack.c.h.b16 %v86
  %v623 = vunpack.c.l.b16 %v87
  %v624 = vunpack.c.h.b16 %v87
  %v625 = vunpack.c.l.b16 %v88
  %v626 = vunpack.c.h.b16 %v88
  %v627 = vunpack.c.l.b16 %v89
  %v628 = vunpack.c.l.b16 %v90
  %v629 = vunpack.c.h.b16 %v90
  %v630 = vunpack.c.l.b16 %v91
  %v631 = vunpack.c.h.b16 %v91
  %v632 = vunpack.c.l.b16 %v92
  %v633 = vunpack.c.h.b16 %v92
  %v634 = vunpack.c.l.b16 %v93
  %v635 = vunpack.c.l.b16 %v94
  %v636 = vunpack.c.h.b16 %v94
  %v637 = vunpack.c.l.b16 %v95
  %v638 = vunpack.c.h.b16 %v95
  %v639 = vunpack.c.l.b16 %v96
  %v640 = vunpack.c.h.b16 %v96
  %v641 = vunpack.c.l.b16 %v97
  %v642 = vunpack.c.l.b16 %v98
  %v643 = vunpack.c.h.b16 %v98
  %v644 = vunpack.c.l.b16 %v99
  %v645 = vunpack.c.h.b16 %v99
  %v646 = vunpack.c.l.b16 %v100
  %v647 = vunpack.c.h.b16 %v100
  %v648 = vunpack.c.l.b16 %v101
  %v649 = vunpack.c.l.b16 %v102
  %v650 = vunpack.c.h.b16 %v102
  %v651 = vunpack.c.l.b16 %v103
  %v652 = vunpack.c.h.b16 %v103
  %v653 = vunpack.c.l.b16 %v104
  %v654 = vunpack.c.h.b16 %v104
  %v655 = vunpack.c.l.b16 %v105
  %v656 = vunpack.c.l.b16 %v106
  %v657 = vunpack.c.h.b16 %v106
  %v658 = vunpack.c.l.b16 %v107
  %v659 = vunpack.c.h.b16 %v107
  %v660 = vunpack.c.l.b16 %v108
  %v661 = vunpack.c.h.b16 %v108
  %v662 = vunpack.c.l.b16 %v109
  %v663 = vunpack.c.l.b16 %v110
  %v664 = vunpack.c.h.b16 %v110
  %v665 = vunpack.c.l.b16 %v111
  %v666 = vunpack.c.h.b16 %v111
  %v667 = vunpack.c.l.b16 %v112
  %v668 = vunpack.c.h.b16 %v112
  %v669 = vunpack.c.l.b16 %v113
  %v670 = vunpack.c.l.b16 %v114
  %v671 = vunpack.c.h.b16 %v114
  %v672 = vunpack.c.l.b16 %v115
  %v673 = vunpack.c.h.b16 %v115
  %v674 = vunpack.c.l.b16 %v116
  %v675 = vunpack.c.h.b16 %v116
  %v676 = vunpack.c.l.b16 %v117
  %v677 = vunpack.c.l.b16 %v118
  %v678 = vunpack.c.h.b16 %v118
  %v679 = vunpack.c.l.b16 %v119
  %v680 = vunpack.c.h.b16 %v119
  %v681 = vunpack.c.l.b16 %v120
  %v682 = vunpack.c.h.b16 %v120
  %v683 = vunpack.c.l.b16 %v121
  %v684 = vunpack.c.l.b16 %v122
  %v685 = vunpack.c.h.b16 %v122
  %v686 = vunpack.c.l.b16 %v123
  %v687 = vunpack.c.h.b16 %v123
  %v688 = vunpack.c.l.b16 %v124
  %v689 = vunpack.c.h.b16 %v124
  %v690 = vunpack.c.l.b16 %v125
  %v691 = vunpack.c.l.b16 %v126
  %v692 = vunpack.c.h.b16 %v126
  %v693 = vunpack.c.l.b16 %v127
  %v694 = vunpack.c.h.b16 %v127
  %v695 = vunpack.c.l.b16 %v128
  %v696 = vunpack.c.h.b16 %v128
  %v697 = vunpack.c.l.b16 %v129
  %v698 = vunpack.c.l.b16 %v130
  %v699 = vunpack.c.h.b16 %v130
  %v700 = vunpack.c.l.b16 %v131
  %v701 = vunpack.c.h.b16 %v131
  %v702 = vunpack.c.l.b16 %v132
  %v703 = vunpack.c.h.b16 %v132
  %v704 = vunpack.c.l.b16 %v133
  %v705 = vunpack.c.l.b16 %v134
  %v706 = vunpack.c.h.b16 %v134
  %v707 = vunpack.c.l.b16 %v135
  %v708 = vunpack.c.h.b16 %v135
  %v709 = vunpack.c.l.b16 %v136
  %v710 = vunpack.c.h.b16 %v136
  %v711 = vunpack.c.l.b16 %v137
  %v712 = vunpack.c.l.b16 %v138
  %v713 = vunpack.c.h.b16 %v138
  %v714 = vunpack.c.l.b16 %v139
  %v715 = vunpack.c.h.b16 %v139
  %v716 = vunpack.c.l.b16 %v140
  %v717 = vunpack.c.h.b16 %v140
  %v718 = vunpack.c.l.b16 %v141
  %v719 = vunpack.c.l.b16 %v142
  %v720 = vunpack.c.h.b16 %v142
  %v721 = vunpack.c.l.b16 %v143
  %v722 = vunpack.c.h.b16 %v143
  %v723 = vunpack.c.l.b16 %v144
  %v724 = vunpack.c.h.b16 %v144
  %v725 = vunpack.c.l.b16 %v145
  %v726 = vunpack.c.l.b16 %v146
  %v727 = vunpack.c.h.b16 %v146
  %v728 = vunpack.c.l.b16 %v147
  %v729 = vunpack.c.h.b16 %v147
  %v730 = vunpack.c.l.b16 %v148
  %v731 = vunpack.c.h.b16 %v148
  %v732 = vunpack.c.l.b16 %v149
  %v733 = vunpack.c.l.b16 %v150
  %v734 = vunpack.c.h.b16 %v150
  %v735 = vunpack.c.l.b16 %v151
  %v736 = vunpack.c.h.b16 %v151
  %v737 = vunpack.c.l.b16 %v152
  %v738 = vunpack.c.h.b16 %v152
  %v739 = vunpack.c.l.b16 %v153
  %v740 = vpack.c.b16 %v523, %v516
  %v741 = vpack.c.b16 %v524, %v517
  %v742 = vpack.c.b16 %v525, %v518
  %v743 = vpack.c.b16 %v526, %v519
  %v744 = vpack.c.b16 %v527, %v520
  %v745 = vpack.c.b16 %v528, %v521
  %v746 = vpack.c.b16 %v529, %v522
  %v747 = vpack.c.b16 %v537, %v530
  %v748 = vpack.c.b16 %v538, %v531
  %v749 = vpack.c.b16 %v539, %v532
  %v750 = vpack.c.b16 %v540, %v533
  %v751 = vpack.c.b16 %v541, %v534
  %v752 = vpack.c.b16 %v542, %v535
  %v753 = vpack.c.b16 %v543, %v536
  %v754 = vpack.c.b16 %v551, %v544
  %v755 = vpack.c.b16 %v552, %v545
  %v756 = vpack.c.b16 %v553, %v546
  %v757 = vpack.c.b16 %v554, %v547
  %v758 = vpack.c.b16 %v555, %v548
  %v759 = vpack.c.b16 %v556, %v549
  %v760 = vpack.c.b16 %v557, %v550
  %v761 = vpack.c.b16 %v565, %v558
  %v762 = vpack.c.b16 %v566, %v559
  %v763 = vpack.c.b16 %v567, %v560
  %v764 = vpack.c.b16 %v568, %v561
  %v765 = vpack.c.b16 %v569, %v562
  %v766 = vpack.c.b16 %v570, %v563
  %v767 = vpack.c.b16 %v571, %v564
  %v768 = vpack.c.b16 %v579, %v572
  %v769 = vpack.c.b16 %v580, %v573
  %v770 = vpack.c.b16 %v581, %v574
  %v771 = vpack.c.b16 %v582, %v575
  %v772 = vpack.c.b16 %v583, %v576
  %v773 = vpack.c.b16 %v584, %v577
  %v774 = vpack.c.b16 %v585, %v578
  %v775 = vpack.c.b16 %v593, %v586
  %v776 = vpack.c.b16 %v594, %v587
  %v777 = vpack.c.b16 %v595, %v588
  %v778 = vpack.c.b16 %v596, %v589
  %v779 = vpack.c.b16 %v597, %v590
  %v780 = vpack.c.b16 %v598, %v591
  %v781 = vpack.c.b16 %v599, %v592
  %v782 = vpack.c.b16 %v607, %v600
  %v783 = vpack.c.b16 %v608, %v601
  %v784 = vpack.c.b16 %v609, %v602
  %v785 = vpack.c.b16 %v610, %v603
  %v786 = vpack.c.b16 %v611, %v604
  %v787 = vpack.c.b16 %v612, %v605
  %v788 = vpack.c.b16 %v613, %v606
  %v789 = vpack.c.b16 %v621, %v614
  %v790 = vpack.c.b16 %v622, %v615
  %v791 = vpack.c.b16 %v623, %v616
  %v792 = vpack.c.b16 %v624, %v617
  %v793 = vpack.c.b16 %v625, %v618
  %v794 = vpack.c.b16 %v626, %v619
  %v795 = vpack.c.b16 %v627, %v620
  %v796 = vpack.c.b16 %v635, %v628
  %v797 = vpack.c.b16 %v636, %v629
  %v798 = vpack.c.b16 %v637, %v630
  %v799 = vpack.c.b16 %v638, %v631
  %v800 = vpack.c.b16 %v639, %v632
  %v801 = vpack.c.b16 %v640, %v633
  %v802 = vpack.c.b16 %v641, %v634
  %v803 = vpack.c.b16 %v649, %v642
  %v804 = vpack.c.b16 %v650, %v643
  %v805 = vpack.c.b16 %v651, %v644
  %v806 = vpack.c.b16 %v652, %v645
  %v807 = vpack.c.b16 %v653, %v646
  %v808 = vpack.c.b16 %v654, %v647
  %v809 = vpack.c.b16 %v655, %v648
  %v810 = vpack.c.b16 %v663, %v656
  %v811 = vpack.c.b16 %v664, %v657
  %v812 = vpack.c.b16 %v665, %v658
  %v813 = vpack.c.b16 %v666, %v659
  %v814 = vpack.c.b16 %v667, %v660
  %v815 = vpack.c.b16 %v668, %v661
  %v816 = vpack.c.b16 %v669, %v662
  %v817 = vpack.c.b16 %v677, %v670
  %v818 = vpack.c.b16 %v678, %v671
  %v819 = vpack.c.b16 %v679, %v672
  %v820 = vpack.c.b16 %v680, %v673
  %v821 = vpack.c.b16 %v681, %v674
  %v822 = vpack.c.b16 %v682, %v675
  %v823 = vpack.c.b16 %v683, %v676
  %v824 = vpack.c.b16 %v691, %v684
  %v825 = vpack.c.b16 %v692, %v685
  %v826 = vpack.c.b16 %v693, %v686
  %v827 = vpack.c.b16 %v694, %v687
  %v828 = vpack.c.b16 %v695, %v688
  %v829 = vpack.c.b16 %v696, %v689
  %v830 = vpack.c.b16 %v697, %v690
  %v831 = vpack.c.b16 %v705, %v698
  %v832 = vpack.c.b16 %v706, %v699
  %v833 = vpack.c.b16 %v707, %v700
  %v834 = vpack.c.b16 %v708, %v701
  %v835 = vpack.c.b16 %v709, %v702
  %v836 = vpack.c.b16 %v710, %v703
  %v837 = vpack.c.b16 %v711, %v704
  %v838 = vpack.c.b16 %v719, %v712
  %v839 = vpack.c.b16 %v720, %v713
  %v840 = vpack.c.b16 %v721, %v714
  %v841 = vpack.c.b16 %v722, %v715
  %v842 = vpack.c.b16 %v723, %v716
  %v843 = vpack.c.b16 %v724, %v717
  %v844 = vpack.c.b16 %v725, %v718
  %v845 = vpack.c.b16 %v733, %v726
  %v846 = vpack.c.b16 %v734, %v727
  %v847 = vpack.c.b16 %v735, %v728
  %v848 = vpack.c.b16 %v736, %v729
  %v849 = vpack.c.b16 %v737, %v730
  %v850 = vpack.c.b16 %v738, %v731
  %v851 = vpack.c.b16 %v739, %v732
  %v1188 = vunpack.c.l.b16 %v154
  %v1189 = vunpack.c.h.b16 %v154
  %v1190 = vunpack.c.l.b16 %v155
  %v1191 = vunpack.c.h.b16 %v155
  %v1192 = vunpack.c.l.b16 %v156
  %v1193 = vunpack.c.h.b16 %v156
  %v1194 = vunpack.c.l.b16 %v157
  %v1195 = vunpack.c.h.b16 %v157
  %v1196 = vunpack.c.l.b16 %v158
  %v1197 = vunpack.c.h.b16 %v158
  %v1198 = vunpack.c.l.b16 %v159
  %v1199 = vunpack.c.h.b16 %v159
  %v1200 = vunpack.c.l.b16 %v160
  %v1201 = vunpack.c.h.b16 %v160
  %v1202 = vunpack.c.l.b16 %v161
  %v1203 = vunpack.c.h.b16 %v161
  %v1204 = vunpack.c.l.b16 %v162
  %v1205 = vunpack.c.h.b16 %v162
  %v1206 = vunpack.c.l.b16 %v163
  %v1207 = vunpack.c.h.b16 %v163
  %v1208 = vunpack.c.l.b16 %v164
  %v1209 = vunpack.c.h.b16 %v164
  %v1210 = vunpack.c.l.b16 %v165
  %v1211 = vunpack.c.h.b16 %v165
  %v1212 = vunpack.c.l.b16 %v166
  %v1213 = vunpack.c.h.b16 %v166
  %v1214 = vunpack.c.l.b16 %v167
  %v1215 = vunpack.c.h.b16 %v167
  %v1216 = vunpack.c.l.b16 %v168
  %v1217 = vunpack.c.h.b16 %v168
  %v1218 = vunpack.c.l.b16 %v169
  %v1219 = vunpack.c.h.b16 %v169
  %v1220 = vunpack.c.l.b16 %v170
  %v1221 = vunpack.c.h.b16 %v170
  %v1222 = vunpack.c.l.b16 %v171
  %v1223 = vunpack.c.h.b16 %v171
  %v1224 = vunpack.c.l.b16 %v172
  %v1225 = vunpack.c.h.b16 %v172
  %v1226 = vunpack.c.l.b16 %v173
  %v1227 = vunpack.c.h.b16 %v173
  %v1228 = vunpack.c.l.b16 %v174
  %v1229 = vunpack.c.h.b16 %v174
  %v1230 = vunpack.c.l.b16 %v175
  %v1231 = vunpack.c.h.b16 %v175
  %v1232 = vunpack.c.l.b16 %v176
  %v1233 = vunpack.c.h.b16 %v176
  %v1234 = vunpack.c.l.b16 %v177
  %v1235 = vunpack.c.h.b16 %v177
  %v1236 = vunpack.c.l.b16 %v178
  %v1237 = vunpack.c.h.b16 %v178
  %v1238 = vunpack.c.l.b16 %v179
  %v1239 = vunpack.c.h.b16 %v179
  %v1240 = vunpack.c.l.b16 %v180
  %v1241 = vunpack.c.h.b16 %v180
  %v1242 = vunpack.c.l.b16 %v181
  %v1243 = vunpack.c.h.b16 %v181
  %v1244 = vunpack.c.l.b16 %v182
  %v1245 = vunpack.c.h.b16 %v182
  %v1246 = vunpack.c.l.b16 %v183
  %v1247 = vunpack.c.h.b16 %v183
  %v1248 = vunpack.c.l.b16 %v184
  %v1249 = vunpack.c.h.b16 %v184
  %v1250 = vunpack.c.l.b16 %v185
  %v1251 = vunpack.c.h.b16 %v185
  %v1252 = vunpack.c.l.b16 %v186
  %v1253 = vunpack.c.h.b16 %v186
  %v1254 = vunpack.c.l.b16 %v187
  %v1255 = vunpack.c.h.b16 %v187
  %v1256 = vunpack.c.l.b16 %v188
  %v1257 = vunpack.c.h.b16 %v188
  %v1258 = vunpack.c.l.b16 %v189
  %v1259 = vunpack.c.h.b16 %v189
  %v1260 = vunpack.c.l.b16 %v190
  %v1261 = vunpack.c.h.b16 %v190
  %v1262 = vunpack.c.l.b16 %v191
  %v1263 = vunpack.c.h.b16 %v191
  %v1264 = vunpack.c.l.b16 %v192
  %v1265 = vunpack.c.h.b16 %v192
  %v1266 = vunpack.c.l.b16 %v193
  %v1267 = vunpack.c.h.b16 %v193
  %v1268 = vunpack.c.l.b16 %v194
  %v1269 = vunpack.c.h.b16 %v194
  %v1270 = vunpack.c.l.b16 %v195
  %v1271 = vunpack.c.h.b16 %v195
  %v1272 = vunpack.c.l.b16 %v196
  %v1273 = vunpack.c.h.b16 %v196
  %v1274 = vunpack.c.l.b16 %v197
  %v1275 = vunpack.c.h.b16 %v197
  %v1276 = vunpack.c.l.b16 %v198
  %v1277 = vunpack.c.h.b16 %v198
  %v1278 = vunpack.c.l.b16 %v199
  %v1279 = vunpack.c.h.b16 %v199
  %v1280 = vunpack.c.l.b16 %v200
  %v1281 = vunpack.c.h.b16 %v200
  %v1282 = vunpack.c.l.b16 %v201
  %v1283 = vunpack.c.h.b16 %v201
  %v1284 = vunpack.c.l.b16 %v202
  %v1285 = vunpack.c.h.b16 %v202
  %v1286 = vunpack.c.l.b16 %v203
  %v1287 = vunpack.c.h.b16 %v203
  %v1288 = vunpack.c.l.b16 %v204
  %v1289 = vunpack.c.h.b16 %v204
  %v1290 = vunpack.c.l.b16 %v205
  %v1291 = vunpack.c.h.b16 %v205
  %v1292 = vunpack.c.l.b16 %v206
  %v1293 = vunpack.c.h.b16 %v206
  %v1294 = vunpack.c.l.b16 %v207
  %v1295 = vunpack.c.h.b16 %v207
  %v1296 = vunpack.c.l.b16 %v208
  %v1297 = vunpack.c.h.b16 %v208
  %v1298 = vunpack.c.l.b16 %v209
  %v1299 = vunpack.c.h.b16 %v209
  %v1300 = vunpack.c.l.b16 %v210
  %v1301 = vunpack.c.h.b16 %v210
  %v1302 = vunpack.c.l.b16 %v211
  %v1303 = vunpack.c.h.b16 %v211
  %v1304 = vunpack.c.l.b16 %v212
  %v1305 = vunpack.c.h.b16 %v212
  %v1306 = vunpack.c.l.b16 %v213
  %v1307 = vunpack.c.h.b16 %v213
  %v1308 = vunpack.c.l.b16 %v214
  %v1309 = vunpack.c.h.b16 %v214
  %v1310 = vunpack.c.l.b16 %v215
  %v1311 = vunpack.c.h.b16 %v215
  %v1312 = vunpack.c.l.b16 %v216
  %v1313 = vunpack.c.h.b16 %v216
  %v1314 = vunpack.c.l.b16 %v217
  %v1315 = vunpack.c.h.b16 %v217
  %v1316 = vunpack.c.l.b16 %v218
  %v1317 = vunpack.c.h.b16 %v218
  %v1318 = vunpack.c.l.b16 %v219
  %v1319 = vunpack.c.h.b16 %v219
  %v1320 = vunpack.c.l.b16 %v220
  %v1321 = vunpack.c.h.b16 %v220
  %v1322 = vunpack.c.l.b16 %v221
  %v1323 = vunpack.c.h.b16 %v221
  %v1324 = vunpack.c.l.b16 %v222
  %v1325 = vunpack.c.h.b16 %v222
  %v1326 = vunpack.c.l.b16 %v223
  %v1327 = vunpack.c.h.b16 %v223
  %v1328 = vunpack.c.l.b16 %v224
  %v1329 = vunpack.c.h.b16 %v224
  %v1330 = vunpack.c.l.b16 %v225
  %v1331 = vunpack.c.h.b16 %v225
  %v1332 = vunpack.c.l.b16 %v226
  %v1333 = vunpack.c.h.b16 %v226
  %v1334 = vunpack.c.l.b16 %v227
  %v1335 = vunpack.c.h.b16 %v227
  %v1336 = vunpack.c.l.b16 %v228
  %v1337 = vunpack.c.h.b16 %v228
  %v1338 = vunpack.c.l.b16 %v229
  %v1339 = vunpack.c.h.b16 %v229
  %v1340 = vunpack.c.l.b16 %v230
  %v1341 = vunpack.c.h.b16 %v230
  %v1342 = vunpack.c.l.b16 %v231
  %v1343 = vunpack.c.h.b16 %v231
  %v1344 = vunpack.c.l.b16 %v232
  %v1345 = vunpack.c.h.b16 %v232
  %v1346 = vunpack.c.l.b16 %v233
  %v1347 = vunpack.c.h.b16 %v233
  %v1348 = vunpack.c.l.b16 %v234
  %v1349 = vunpack.c.h.b16 %v234
  %v1350 = vunpack.c.l.b16 %v235
  %v1351 = vunpack.c.h.b16 %v235
  %v1352 = vunpack.c.l.b16 %v236
  %v1353 = vunpack.c.h.b16 %v236
  %v1354 = vunpack.c.l.b16 %v237
  %v1355 = vunpack.c.h.b16 %v237
  %v1356 = vunpack.c.l.b16 %v238
  %v1357 = vunpack.c.h.b16 %v238
  %v1358 = vunpack.c.l.b16 %v239
  %v1359 = vunpack.c.h.b16 %v239
  %v1360 = vunpack.c.l.b16 %v240
  %v1361 = vunpack.c.h.b16 %v240
  %v1362 = vunpack.c.l.b16 %v241
  %v1363 = vunpack.c.h.b16 %v241
  %v1364 = vunpack.c.l.b16 %v242
  %v1365 = vunpack.c.h.b16 %v242
  %v1366 = vunpack.c.l.b16 %v243
  %v1367 = vunpack.c.h.b16 %v243
  %v1368 = vunpack.c.l.b16 %v244
  %v1369 = vunpack.c.h.b16 %v244
  %v1370 = vunpack.c.l.b16 %v245
  %v1371 = vunpack.c.h.b16 %v245
  %v1372 = vunpack.c.l.b16 %v246
  %v1373 = vunpack.c.h.b16 %v246
  %v1374 = vunpack.c.l.b16 %v247
  %v1375 = vunpack.c.h.b16 %v247
  %v1376 = vunpack.c.l.b16 %v248
  %v1377 = vunpack.c.h.b16 %v248
  %v1378 = vunpack.c.l.b16 %v249
  %v1379 = vunpack.c.h.b16 %v249
  %v1380 = vunpack.c.l.b16 %v250
  %v1381 = vunpack.c.h.b16 %v250
  %v1382 = vunpack.c.l.b16 %v251
  %v1383 = vunpack.c.h.b16 %v251
  %v1384 = vunpack.c.l.b16 %v252
  %v1385 = vunpack.c.h.b16 %v252
  %v1386 = vunpack.c.l.b16 %v253
  %v1387 = vunpack.c.h.b16 %v253
  %v1388 = vunpack.c.l.b16 %v254
  %v1389 = vunpack.c.h.b16 %v254
  %v1390 = vunpack.c.l.b16 %v255
  %v1391 = vunpack.c.h.b16 %v255
  %v1392 = vunpack.c.l.b16 %v256
  %v1393 = vunpack.c.h.b16 %v256
  %v1394 = vunpack.c.l.b16 %v257
  %v1395 = vunpack.c.h.b16 %v257
  %v1396 = vunpack.c.l.b16 %v258
  %v1397 = vunpack.c.h.b16 %v258
  %v1398 = vunpack.c.l.b16 %v259
  %v1399 = vunpack.c.h.b16 %v259
  %v1400 = vunpack.c.l.b16 %v260
  %v1401 = vunpack.c.h.b16 %v260
  %v1402 = vunpack.c.l.b16 %v261
  %v1403 = vunpack.c.h.b16 %v261
  %v1404 = vunpack.c.l.b16 %v262
  %v1405 = vunpack.c.h.b16 %v262
  %v1406 = vunpack.c.l.b16 %v263
  %v1407 = vunpack.c.h.b16 %v263
  %v1408 = vunpack.c.l.b16 %v264
  %v1409 = vunpack.c.h.b16 %v264
  %v1410 = vunpack.c.l.b16 %v265
  %v1411 = vunpack.c.h.b16 %v265
  %v1412 = vunpack.c.l.b16 %v266
  %v1413 = vunpack.c.h.b16 %v266
  %v1414 = vunpack.c.l.b16 %v267
  %v1415 = vunpack.c.h.b16 %v267
  %v1416 = vunpack.c.l.b16 %v268
  %v1417 = vunpack.c.h.b16 %v268
  %v1418 = vunpack.c.l.b16 %v269
  %v1419 = vunpack.c.h.b16 %v269
  %v1420 = vunpack.c.l.b16 %v270
  %v1421 = vunpack.c.h.b16 %v270
  %v1422 = vunpack.c.l.b16 %v271
  %v1423 = vunpack.c.h.b16 %v271
  %v1424 = vunpack.c.l.b16 %v272
  %v1425 = vunpack.c.h.b16 %v272
  %v1426 = vunpack.c.l.b16 %v273
  %v1427 = vunpack.c.h.b16 %v273
  %v1428 = vunpack.c.l.b16 %v274
  %v1429 = vunpack.c.h.b16 %v274
  %v1430 = vunpack.c.l.b16 %v275
  %v1431 = vunpack.c.h.b16 %v275
  %v1432 = vunpack.c.l.b16 %v276
  %v1433 = vunpack.c.h.b16 %v276
  %v1434 = vunpack.c.l.b16 %v277
  %v1435 = vunpack.c.h.b16 %v277
  %v1436 = vunpack.c.l.b16 %v278
  %v1437 = vunpack.c.h.b16 %v278
  %v1438 = vunpack.c.l.b16 %v279
  %v1439 = vunpack.c.h.b16 %v279
  %v1440 = vunpack.c.l.b16 %v280
  %v1441 = vunpack.c.h.b16 %v280
  %v1442 = vunpack.c.l.b16 %v281
  %v1443 = vunpack.c.h.b16 %v281
  %v1444 = vunpack.c.l.b16 %v282
  %v1445 = vunpack.c.h.b16 %v282
  %v1446 = vunpack.c.l.b16 %v283
  %v1447 = vunpack.c.h.b16 %v283
  %v1448 = vunpack.c.l.b16 %v284
  %v1449 = vunpack.c.h.b16 %v284
  %v1450 = vunpack.c.l.b16 %v285
  %v1451 = vunpack.c.h.b16 %v285
  %v1452 = vunpack.c.l.b16 %v286
  %v1453 = vunpack.c.h.b16 %v286
  %v1454 = vunpack.c.l.b16 %v287
  %v1455 = vunpack.c.h.b16 %v287
  %v1456 = vunpack.c.l.b16 %v288
  %v1457 = vunpack.c.h.b16 %v288
  %v1458 = vunpack.c.l.b16 %v289
  %v1459 = vunpack.c.h.b16 %v289
  %v1460 = vunpack.c.l.b16 %v290
  %v1461 = vunpack.c.h.b16 %v290
  %v1462 = vunpack.c.l.b16 %v291
  %v1463 = vunpack.c.h.b16 %v291
  %v1464 = vunpack.c.l.b16 %v292
  %v1465 = vunpack.c.h.b16 %v292
  %v1466 = vunpack.c.l.b16 %v293
  %v1467 = vunpack.c.h.b16 %v293
  %v1468 = vunpack.c.l.b16 %v294
  %v1469 = vunpack.c.h.b16 %v294
  %v1470 = vunpack.c.l.b16 %v295
  %v1471 = vunpack.c.h.b16 %v295
  %v1472 = vunpack.c.l.b16 %v296
  %v1473 = vunpack.c.h.b16 %v296
  %v1474 = vunpack.c.l.b16 %v297
  %v1475 = vunpack.c.h.b16 %v297
  %v1476 = vunpack.c.l.b16 %v298
  %v1477 = vunpack.c.h.b16 %v298
  %v1478 = vunpack.c.l.b16 %v299
  %v1479 = vunpack.c.h.b16 %v299
  %v1480 = vunpack.c.l.b16 %v300
  %v1481 = vunpack.c.h.b16 %v300
  %v1482 = vunpack.c.l.b16 %v301
  %v1483 = vunpack.c.h.b16 %v301
  %v1484 = vunpack.c.l.b16 %v302
  %v1485 = vunpack.c.h.b16 %v302
  %v1486 = vunpack.c.l.b16 %v303
  %v1487 = vunpack.c.h.b16 %v303
  %v1488 = vunpack.c.l.b16 %v304
  %v1489 = vunpack.c.h.b16 %v304
  %v1490 = vunpack.c.l.b16 %v305
  %v1491 = vunpack.c.h.b16 %v305
  %v1492 = vunpack.c.l.b16 %v306
  %v1493 = vunpack.c.h.b16 %v306
  %v1494 = vunpack.c.l.b16 %v307
  %v1495 = vunpack.c.h.b16 %v307
  %v1496 = vunpack.c.l.b16 %v308
  %v1497 = vunpack.c.h.b16 %v308
  %v1498 = vunpack.c.l.b16 %v309
  %v1499 = vunpack.c.h.b16 %v309
  %v1500 = vunpack.c.l.b16 %v310
  %v1501 = vunpack.c.h.b16 %v310
  %v1502 = vunpack.c.l.b16 %v311
  %v1503 = vunpack.c.h.b16 %v311
  %v1504 = vunpack.c.l.b16 %v312
  %v1505 = vunpack.c.h.b16 %v312
  %v1506 = vunpack.c.l.b16 %v313
  %v1507 = vunpack.c.h.b16 %v313
  %v1508 = vunpack.c.l.b16 %v314
  %v1509 = vunpack.c.h.b16 %v314
  %v1510 = vunpack.c.l.b16 %v315
  %v1511 = vunpack.c.h.b16 %v315
  %v1512 = vunpack.c.l.b16 %v316
  %v1513 = vunpack.c.h.b16 %v316
  %v1514 = vunpack.c.l.b16 %v317
  %v1515 = vunpack.c.h.b16 %v317
  %v1516 = vunpack.c.l.b16 %v318
  %v1517 = vunpack.c.h.b16 %v318
  %v1518 = vunpack.c.l.b16 %v319
  %v1519 = vunpack.c.h.b16 %v319
  %v1520 = vunpack.c.l.b16 %v320
  %v1521 = vunpack.c.h.b16 %v320
  %v1522 = vunpack.c.l.b16 %v321
  %v1523 = vunpack.c.h.b16 %v321
  %v1524 = vunpack.c.l.b16 %v322
  %v1525 = vunpack.c.h.b16 %v322
  %v1526 = vunpack.c.l.b16 %v323
  %v1527 = vunpack.c.h.b16 %v323
  %v1528 = vunpack.c.l.b16 %v324
  %v1529 = vunpack.c.h.b16 %v324
  %v1530 = vunpack.c.l.b16 %v325
  %v1531 = vunpack.c.h.b16 %v325
  %v1532 = vunpack.c.l.b16 %v326
  %v1533 = vunpack.c.h.b16 %v326
  %v1534 = vunpack.c.l.b16 %v327
  %v1535 = vunpack.c.h.b16 %v327
  %v1536 = vunpack.c.l.b16 %v328
  %v1537 = vunpack.c.h.b16 %v328
  %v1538 = vunpack.c.l.b16 %v329
  %v1539 = vunpack.c.h.b16 %v329
  %v1540 = vunpack.c.l.b16 %v330
  %v1541 = vunpack.c.h.b16 %v330
  %v1542 = vunpack.c.l.b16 %v331
  %v1543 = vunpack.c.h.b16 %v331
  %v1544 = vunpack.c.l.b16 %v332
  %v1545 = vunpack.c.h.b16 %v332
  %v1546 = vunpack.c.l.b16 %v333
  %v1547 = vunpack.c.h.b16 %v333
  %v1548 = vunpack.c.l.b16 %v334
  %v1549 = vunpack.c.h.b16 %v334
  %v1550 = vunpack.c.l.b16 %v335
  %v1551 = vunpack.c.h.b16 %v335
  %v1552 = vunpack.c.l.b16 %v336
  %v1553 = vunpack.c.h.b16 %v336
  %v1554 = vunpack.c.l.b16 %v337
  %v1555 = vunpack.c.h.b16 %v337
  %v1556 = vunpack.c.l.b16 %v338
  %v1557 = vunpack.c.h.b16 %v338
  %v1558 = vunpack.c.l.b16 %v339
  %v1559 = vunpack.c.h.b16 %v339
  %v1560 = vunpack.c.l.b16 %v340
  %v1561 = vunpack.c.h.b16 %v340
  %v1562 = vunpack.c.l.b16 %v341
  %v1563 = vunpack.c.h.b16 %v341
  %v1564 = vunpack.c.l.b16 %v342
  %v1565 = vunpack.c.h.b16 %v342
  %v1566 = vunpack.c.l.b16 %v343
  %v1567 = vunpack.c.h.b16 %v343
  %v1568 = vunpack.c.l.b16 %v344
  %v1569 = vunpack.c.h.b16 %v344
  %v1570 = vunpack.c.l.b16 %v345
  %v1571 = vunpack.c.h.b16 %v345
  %v1572 = vunpack.c.l.b16 %v346
  %v1573 = vunpack.c.h.b16 %v346
  %v1574 = vunpack.c.l.b16 %v347
  %v1575 = vunpack.c.h.b16 %v347
  %v1576 = vunpack.c.l.b16 %v348
  %v1577 = vunpack.c.h.b16 %v348
  %v1578 = vunpack.c.l.b16 %v349
  %v1579 = vunpack.c.h.b16 %v349
  %v1580 = vunpack.c.l.b16 %v350
  %v1581 = vunpack.c.h.b16 %v350
  %v1582 = vunpack.c.l.b16 %v351
  %v1583 = vunpack.c.h.b16 %v351
  %v1584 = vunpack.c.l.b16 %v352
  %v1585 = vunpack.c.h.b16 %v352
  %v1586 = vunpack.c.l.b16 %v353
  %v1587 = vunpack.c.h.b16 %v353
  %v1588 = vunpack.c.l.b16 %v354
  %v1589 = vunpack.c.h.b16 %v354
  %v1590 = vunpack.c.l.b16 %v355
  %v1591 = vunpack.c.h.b16 %v355
  %v1592 = vunpack.c.l.b16 %v356
  %v1593 = vunpack.c.h.b16 %v356
  %v1594 = vunpack.c.l.b16 %v357
  %v1595 = vunpack.c.h.b16 %v357
  %v1596 = vunpack.c.l.b16 %v358
  %v1597 = vunpack.c.h.b16 %v358
  %v1598 = vunpack.c.l.b16 %v359
  %v1599 = vunpack.c.h.b16 %v359
  %v1600 = vunpack.c.l.b16 %v360
  %v1601 = vunpack.c.h.b16 %v360
  %v1602 = vunpack.c.l.b16 %v361
  %v1603 = vunpack.c.h.b16 %v361
  %v1604 = vunpack.c.l.b16 %v362
  %v1605 = vunpack.c.h.b16 %v362
  %v1606 = vunpack.c.l.b16 %v363
  %v1607 = vunpack.c.h.b16 %v363
  %v1608 = vunpack.c.l.b16 %v364
  %v1609 = vunpack.c.h.b16 %v364
  %v1610 = vunpack.c.l.b16 %v365
  %v1611 = vunpack.c.h.b16 %v365
  %v1612 = vunpack.c.l.b16 %v366
  %v1613 = vunpack.c.h.b16 %v366
  %v1614 = vunpack.c.l.b16 %v367
  %v1615 = vunpack.c.h.b16 %v367
  %v1616 = vunpack.c.l.b16 %v368
  %v1617 = vunpack.c.h.b16 %v368
  %v1618 = vunpack.c.l.b16 %v369
  %v1619 = vunpack.c.h.b16 %v369
  %v1620 = vunpack.c.l.b16 %v370
  %v1621 = vunpack.c.h.b16 %v370
  %v1622 = vunpack.c.l.b16 %v371
  %v1623 = vunpack.c.h.b16 %v371
  %v1624 = vunpack.c.l.b16 %v372
  %v1625 = vunpack.c.h.b16 %v372
  %v1626 = vunpack.c.l.b16 %v373
  %v1627 = vunpack.c.h.b16 %v373
  %v1628 = vunpack.c.l.b16 %v374
  %v1629 = vunpack.c.h.b16 %v374
  %v1630 = vunpack.c.l.b16 %v375
  %v1631 = vunpack.c.h.b16 %v375
  %v1632 = vunpack.c.l.b16 %v376
  %v1633 = vunpack.c.h.b16 %v376
  %v1634 = vunpack.c.l.b16 %v377
  %v1635 = vunpack.c.h.b16 %v377
  %v1636 = vpack.c.b16 %v1192, %v1188
  %v1637 = vpack.c.b16 %v1193, %v1189
  %v1638 = vpack.c.b16 %v1194, %v1190
  %v1639 = vpack.c.b16 %v1195, %v1191
  %v1640 = vpack.c.b16 %v1200, %v1196
  %v1641 = vpack.c.b16 %v1201, %v1197
  %v1642 = vpack.c.b16 %v1202, %v1198
  %v1643 = vpack.c.b16 %v1203, %v1199
  %v1644 = vpack.c.b16 %v1208, %v1204
  %v1645 = vpack.c.b16 %v1209, %v1205
  %v1646 = vpack.c.b16 %v1210, %v1206
  %v1647 = vpack.c.b16 %v1211, %v1207
  %v1648 = vpack.c.b16 %v1216, %v1212
  %v1649 = vpack.c.b16 %v1217, %v1213
  %v1650 = vpack.c.b16 %v1218, %v1214
  %v1651 = vpack.c.b16 %v1219, %v1215
  %v1652 = vpack.c.b16 %v1224, %v1220
  %v1653 = vpack.c.b16 %v1225, %v1221
  %v1654 = vpack.c.b16 %v1226, %v1222
  %v1655 = vpack.c.b16 %v1227, %v1223
  %v1656 = vpack.c.b16 %v1232, %v1228
  %v1657 = vpack.c.b16 %v1233, %v1229
  %v1658 = vpack.c.b16 %v1234, %v1230
  %v1659 = vpack.c.b16 %v1235, %v1231
  %v1660 = vpack.c.b16 %v1240, %v1236
  %v1661 = vpack.c.b16 %v1241, %v1237
  %v1662 = vpack.c.b16 %v1242, %v1238
  %v1663 = vpack.c.b16 %v1243, %v1239
  %v1664 = vpack.c.b16 %v1248, %v1244
  %v1665 = vpack.c.b16 %v1249, %v1245
  %v1666 = vpack.c.b16 %v1250, %v1246
  %v1667 = vpack.c.b16 %v1251, %v1247
  %v1668 = vpack.c.b16 %v1256, %v1252
  %v1669 = vpack.c.b16 %v1257, %v1253
  %v1670 = vpack.c.b16 %v1258, %v1254
  %v1671 = vpack.c.b16 %v1259, %v1255
  %v1672 = vpack.c.b16 %v1264, %v1260
  %v1673 = vpack.c.b16 %v1265, %v1261
  %v1674 = vpack.c.b16 %v1266, %v1262
  %v1675 = vpack.c.b16 %v1267, %v1263
  %v1676 = vpack.c.b16 %v1272, %v1268
  %v1677 = vpack.c.b16 %v1273, %v1269
  %v1678 = vpack.c.b16 %v1274, %v1270
  %v1679 = vpack.c.b16 %v1275, %v1271
  %v1680 = vpack.c.b16 %v1280, %v1276
  %v1681 = vpack.c.b16 %v1281, %v1277
  %v1682 = vpack.c.b16 %v1282, %v1278
  %v1683 = vpack.c.b16 %v1283, %v1279
  %v1684 = vpack.c.b16 %v1288, %v1284
  %v1685 = vpack.c.b16 %v1289, %v1285
  %v1686 = vpack.c.b16 %v1290, %v1286
  %v1687 = vpack.c.b16 %v1291, %v1287
  %v1688 = vpack.c.b16 %v1296, %v1292
  %v1689 = vpack.c.b16 %v1297, %v1293
  %v1690 = vpack.c.b16 %v1298, %v1294
  %v1691 = vpack.c.b16 %v1299, %v1295
  %v1692 = vpack.c.b16 %v1304, %v1300
  %v1693 = vpack.c.b16 %v1305, %v1301
  %v1694 = vpack.c.b16 %v1306, %v1302
  %v1695 = vpack.c.b16 %v1307, %v1303
  %v1696 = vpack.c.b16 %v1312, %v1308
  %v1697 = vpack.c.b16 %v1313, %v1309
  %v1698 = vpack.c.b16 %v1314, %v1310
  %v1699 = vpack.c.b16 %v1315, %v1311
  %v1700 = vpack.c.b16 %v1320, %v1316
  %v1701 = vpack.c.b16 %v1321, %v1317
  %v1702 = vpack.c.b16 %v1322, %v1318
  %v1703 = vpack.c.b16 %v1323, %v1319
  %v1704 = vpack.c.b16 %v1328, %v1324
  %v1705 = vpack.c.b16 %v1329, %v1325
  %v1706 = vpack.c.b16 %v1330, %v1326
  %v1707 = vpack.c.b16 %v1331, %v1327
  %v1708 = vpack.c.b16 %v1336, %v1332
  %v1709 = vpack.c.b16 %v1337, %v1333
  %v1710 = vpack.c.b16 %v1338, %v1334
  %v1711 = vpack.c.b16 %v1339, %v1335
  %v1712 = vpack.c.b16 %v1344, %v1340
  %v1713 = vpack.c.b16 %v1345, %v1341
  %v1714 = vpack.c.b16 %v1346, %v1342
  %v1715 = vpack.c.b16 %v1347, %v1343
  %v1716 = vpack.c.b16 %v1352, %v1348
  %v1717 = vpack.c.b16 %v1353, %v1349
  %v1718 = vpack.c.b16 %v1354, %v1350
  %v1719 = vpack.c.b16 %v1355, %v1351
  %v1720 = vpack.c.b16 %v1360, %v1356
  %v1721 = vpack.c.b16 %v1361, %v1357
  %v1722 = vpack.c.b16 %v1362, %v1358
  %v1723 = vpack.c.b16 %v1363, %v1359
  %v1724 = vpack.c.b16 %v1368, %v1364
  %v1725 = vpack.c.b16 %v1369, %v1365
  %v1726 = vpack.c.b16 %v1370, %v1366
  %v1727 = vpack.c.b16 %v1371, %v1367
  %v1728 = vpack.c.b16 %v1376, %v1372
  %v1729 = vpack.c.b16 %v1377, %v1373
  %v1730 = vpack.c.b16 %v1378, %v1374
  %v1731 = vpack.c.b16 %v1379, %v1375
  %v1732 = vpack.c.b16 %v1384, %v1380
  %v1733 = vpack.c.b16 %v1385, %v1381
  %v1734 = vpack.c.b16 %v1386, %v1382
  %v1735 = vpack.c.b16 %v1387, %v1383
  %v1736 = vpack.c.b16 %v1392, %v1388
  %v1737 = vpack.c.b16 %v1393, %v1389
  %v1738 = vpack.c.b16 %v1394, %v1390
  %v1739 = vpack.c.b16 %v1395, %v1391
  %v1740 = vpack.c.b16 %v1400, %v1396
  %v1741 = vpack.c.b16 %v1401, %v1397
  %v1742 = vpack.c.b16 %v1402, %v1398
  %v1743 = vpack.c.b16 %v1403, %v1399
  %v1744 = vpack.c.b16 %v1408, %v1404
  %v1745 = vpack.c.b16 %v1409, %v1405
  %v1746 = vpack.c.b16 %v1410, %v1406
  %v1747 = vpack.c.b16 %v1411, %v1407
  %v1748 = vpack.c.b16 %v1416, %v1412
  %v1749 = vpack.c.b16 %v1417, %v1413
  %v1750 = vpack.c.b16 %v1418, %v1414
  %v1751 = vpack.c.b16 %v1419, %v1415
  %v1752 = vpack.c.b16 %v1424, %v1420
  %v1753 = vpack.c.b16 %v1425, %v1421
  %v1754 = vpack.c.b16 %v1426, %v1422
  %v1755 = vpack.c.b16 %v1427, %v1423
  %v1756 = vpack.c.b16 %v1432, %v1428
  %v1757 = vpack.c.b16 %v1433, %v1429
  %v1758 = vpack.c.b16 %v1434, %v1430
  %v1759 = vpack.c.b16 %v1435, %v1431
  %v1760 = vpack.c.b16 %v1440, %v1436
  %v1761 = vpack.c.b16 %v1441, %v1437
  %v1762 = vpack.c.b16 %v1442, %v1438
  %v1763 = vpack.c.b16 %v1443, %v1439
  %v1764 = vpack.c.b16 %v1448, %v1444
  %v1765 = vpack.c.b16 %v1449, %v1445
  %v1766 = vpack.c.b16 %v1450, %v1446
  %v1767 = vpack.c.b16 %v1451, %v1447
  %v1768 = vpack.c.b16 %v1456, %v1452
  %v1769 = vpack.c.b16 %v1457, %v1453
  %v1770 = vpack.c.b16 %v1458, %v1454
  %v1771 = vpack.c.b16 %v1459, %v1455
  %v1772 = vpack.c.b16 %v1464, %v1460
  %v1773 = vpack.c.b16 %v1465, %v1461
  %v1774 = vpack.c.b16 %v1466, %v1462
  %v1775 = vpack.c.b16 %v1467, %v1463
  %v1776 = vpack.c.b16 %v1472, %v1468
  %v1777 = vpack.c.b16 %v1473, %v1469
  %v1778 = vpack.c.b16 %v1474, %v1470
  %v1779 = vpack.c.b16 %v1475, %v1471
  %v1780 = vpack.c.b16 %v1480, %v1476
  %v1781 = vpack.c.b16 %v1481, %v1477
  %v1782 = vpack.c.b16 %v1482, %v1478
  %v1783 = vpack.c.b16 %v1483, %v1479
  %v1784 = vpack.c.b16 %v1488, %v1484
  %v1785 = vpack.c.b16 %v1489, %v1485
  %v1786 = vpack.c.b16 %v1490, %v1486
  %v1787 = vpack.c.b16 %v1491, %v1487
  %v1788 = vpack.c.b16 %v1496, %v1492
  %v1789 = vpack.c.b16 %v1497, %v1493
  %v1790 = vpack.c.b16 %v1498, %v1494
  %v1791 = vpack.c.b16 %v1499, %v1495
  %v1792 = vpack.c.b16 %v1504, %v1500
  %v1793 = vpack.c.b16 %v1505, %v1501
  %v1794 = vpack.c.b16 %v1506, %v1502
  %v1795 = vpack.c.b16 %v1507, %v1503
  %v1796 = vpack.c.b16 %v1512, %v1508
  %v1797 = vpack.c.b16 %v1513, %v1509
  %v1798 = vpack.c.b16 %v1514, %v1510
  %v1799 = vpack.c.b16 %v1515, %v1511
  %v1800 = vpack.c.b16 %v1520, %v1516
  %v1801 = vpack.c.b16 %v1521, %v1517
  %v1802 = vpack.c.b16 %v1522, %v1518
  %v1803 = vpack.c.b16 %v1523, %v1519
  %v1804 = vpack.c.b16 %v1528, %v1524
  %v1805 = vpack.c.b16 %v1529, %v1525
  %v1806 = vpack.c.b16 %v1530, %v1526
  %v1807 = vpack.c.b16 %v1531, %v1527
  %v1808 = vpack.c.b16 %v1536, %v1532
  %v1809 = vpack.c.b16 %v1537, %v1533
  %v1810 = vpack.c.b16 %v1538, %v1534
  %v1811 = vpack.c.b16 %v1539, %v1535
  %v1812 = vpack.c.b16 %v1544, %v1540
  %v1813 = vpack.c.b16 %v1545, %v1541
  %v1814 = vpack.c.b16 %v1546, %v1542
  %v1815 = vpack.c.b16 %v1547, %v1543
  %v1816 = vpack.c.b16 %v1552, %v1548
  %v1817 = vpack.c.b16 %v1553, %v1549
  %v1818 = vpack.c.b16 %v1554, %v1550
  %v1819 = vpack.c.b16 %v1555, %v1551
  %v1820 = vpack.c.b16 %v1560, %v1556
  %v1821 = vpack.c.b16 %v1561, %v1557
  %v1822 = vpack.c.b16 %v1562, %v1558
  %v1823 = vpack.c.b16 %v1563, %v1559
  %v1824 = vpack.c.b16 %v1568, %v1564
  %v1825 = vpack.c.b16 %v1569, %v1565
  %v1826 = vpack.c.b16 %v1570, %v1566
  %v1827 = vpack.c.b16 %v1571, %v1567
  %v1828 = vpack.c.b16 %v1576, %v1572
  %v1829 = vpack.c.b16 %v1577, %v1573
  %v1830 = vpack.c.b16 %v1578, %v1574
  %v1831 = vpack.c.b16 %v1579, %v1575
  %v1832 = vpack.c.b16 %v1584, %v1580
  %v1833 = vpack.c.b16 %v1585, %v1581
  %v1834 = vpack.c.b16 %v1586, %v1582
  %v1835 = vpack.c.b16 %v1587, %v1583
  %v1836 = vpack.c.b16 %v1592, %v1588
  %v1837 = vpack.c.b16 %v1593, %v1589
  %v1838 = vpack.c.b16 %v1594, %v1590
  %v1839 = vpack.c.b16 %v1595, %v1591
  %v1840 = vpack.c.b16 %v1600, %v1596
  %v1841 = vpack.c.b16 %v1601, %v1597
  %v1842 = vpack.c.b16 %v1602, %v1598
  %v1843 = vpack.c.b16 %v1603, %v1599
  %v1844 = vpack.c.b16 %v1608, %v1604
  %v1845 = vpack.c.b16 %v1609, %v1605
  %v1846 = vpack.c.b16 %v1610, %v1606
  %v1847 = vpack.c.b16 %v1611, %v1607
  %v1848 = vpack.c.b16 %v1616, %v1612
  %v1849 = vpack.c.b16 %v1617, %v1613
  %v1850 = vpack.c.b16 %v1618, %v1614
  %v1851 = vpack.c.b16 %v1619, %v1615
  %v1852 = vpack.c.b16 %v1624, %v1620
  %v1853 = vpack.c.b16 %v1625, %v1621
  %v1854 = vpack.c.b16 %v1626, %v1622
  %v1855 = vpack.c.b16 %v1627, %v1623
  %v1856 = vpack.c.b16 %v1632, %v1628
  %v1857 = vpack.c.b16 %v1633, %v1629
  %v1858 = vpack.c.b16 %v1634, %v1630
  %v1859 = vpack.c.b16 %v1635, %v1631
  %2084 = vmatpush.bf16.msra.mxu0 %v1664
  %2085 = vmatpush.bf16.msra.mxu0 %v1660
  %2086 = vmatpush.bf16.msra.mxu0 %v1656
  %2087 = vmatpush.bf16.msra.mxu0 %v1652
  %2088 = vmatpush.bf16.msra.mxu0 %v1648
  %2089 = vmatpush.bf16.msra.mxu0 %v1644
  %2090 = vmatpush.bf16.msra.mxu0 %v1640
  %2091 = vmatpush.bf16.msra.mxu0 %v1636
  %2092 = vmatmul.bf16.gmra.mxu0 %v740
  %v2093 = vpop.f32.mrf.mxu0
  %v2094 = vadd.f32 %v380, %v2093
  %v2095 = vpop.f32.mrf.mxu0
  %v2096 = vadd.f32 %v380, %v2095
  %2097 = vmatmul.bf16.gmra.mxu0 %v747
  %v2098 = vpop.f32.mrf.mxu0
  %v2099 = vadd.f32 %v380, %v2098
  %v2100 = vpop.f32.mrf.mxu0
  %v2101 = vadd.f32 %v380, %v2100
  %2102 = vmatmul.bf16.gmra.mxu0 %v754
  %v2103 = vpop.f32.mrf.mxu0
  %v2104 = vadd.f32 %v380, %v2103
  %v2105 = vpop.f32.mrf.mxu0
  %v2106 = vadd.f32 %v380, %v2105
  %2107 = vmatmul.bf16.gmra.mxu0 %v761
  %v2108 = vpop.f32.mrf.mxu0
  %v2109 = vadd.f32 %v380, %v2108
  %v2110 = vpop.f32.mrf.mxu0
  %v2111 = vadd.f32 %v380, %v2110
  %2112 = vmatmul.bf16.gmra.mxu0 %v768
  %v2113 = vpop.f32.mrf.mxu0
  %v2114 = vadd.f32 %v380, %v2113
  %v2115 = vpop.f32.mrf.mxu0
  %v2116 = vadd.f32 %v380, %v2115
  %2117 = vmatmul.bf16.gmra.mxu0 %v775
  %v2118 = vpop.f32.mrf.mxu0
  %v2119 = vadd.f32 %v380, %v2118
  %v2120 = vpop.f32.mrf.mxu0
  %v2121 = vadd.f32 %v380, %v2120
  %2122 = vmatmul.bf16.gmra.mxu0 %v782
  %v2123 = vpop.f32.mrf.mxu0
  %v2124 = vadd.f32 %v380, %v2123
  %v2125 = vpop.f32.mrf.mxu0
  %v2126 = vadd.f32 %v380, %v2125
  %2127 = vmatmul.bf16.gmra.mxu0 %v789
  %v2128 = vpop.f32.mrf.mxu0
  %v2129 = vadd.f32 %v380, %v2128
  %v2130 = vpop.f32.mrf.mxu0
  %v2131 = vadd.f32 %v380, %v2130
  %2132 = vmatmul.bf16.gmra.mxu0 %v796
  %v2133 = vpop.f32.mrf.mxu0
  %v2134 = vadd.f32 %v380, %v2133
  %v2135 = vpop.f32.mrf.mxu0
  %v2136 = vadd.f32 %v380, %v2135
  %2137 = vmatmul.bf16.gmra.mxu0 %v803
  %v2138 = vpop.f32.mrf.mxu0
  %v2139 = vadd.f32 %v380, %v2138
  %v2140 = vpop.f32.mrf.mxu0
  %v2141 = vadd.f32 %v380, %v2140
  %2142 = vmatmul.bf16.gmra.mxu0 %v810
  %v2143 = vpop.f32.mrf.mxu0
  %v2144 = vadd.f32 %v380, %v2143
  %v2145 = vpop.f32.mrf.mxu0
  %v2146 = vadd.f32 %v380, %v2145
  %2147 = vmatmul.bf16.gmra.mxu0 %v817
  %v2148 = vpop.f32.mrf.mxu0
  %v2149 = vadd.f32 %v380, %v2148
  %v2150 = vpop.f32.mrf.mxu0
  %v2151 = vadd.f32 %v380, %v2150
  %2152 = vmatmul.bf16.gmra.mxu0 %v824
  %v2153 = vpop.f32.mrf.mxu0
  %v2154 = vadd.f32 %v380, %v2153
  %v2155 = vpop.f32.mrf.mxu0
  %v2156 = vadd.f32 %v380, %v2155
  %2157 = vmatmul.bf16.gmra.mxu0 %v831
  %v2158 = vpop.f32.mrf.mxu0
  %v2159 = vadd.f32 %v380, %v2158
  %v2160 = vpop.f32.mrf.mxu0
  %v2161 = vadd.f32 %v380, %v2160
  %2162 = vmatmul.bf16.gmra.mxu0 %v838
  %v2163 = vpop.f32.mrf.mxu0
  %v2164 = vadd.f32 %v380, %v2163
  %v2165 = vpop.f32.mrf.mxu0
  %v2166 = vadd.f32 %v380, %v2165
  %2167 = vmatmul.bf16.gmra.mxu0 %v845
  %v2168 = vpop.f32.mrf.mxu0
  %v2169 = vadd.f32 %v380, %v2168
  %v2170 = vpop.f32.mrf.mxu0
  %v2171 = vadd.f32 %v380, %v2170
  %2172 = vdwg.mxu0
  %2173 = vmatpush.bf16.msra.mxu0 %v1696
  %2174 = vmatpush.bf16.msra.mxu0 %v1692
  %2175 = vmatpush.bf16.msra.mxu0 %v1688
  %2176 = vmatpush.bf16.msra.mxu0 %v1684
  %2177 = vmatpush.bf16.msra.mxu0 %v1680
  %2178 = vmatpush.bf16.msra.mxu0 %v1676
  %2179 = vmatpush.bf16.msra.mxu0 %v1672
  %2180 = vmatpush.bf16.msra.mxu0 %v1668
  %2181 = vmatmul.bf16.gmra.mxu0 %v741
  %v2182 = vpop.f32.mrf.mxu0
  %v2183 = vadd.f32 %v2094, %v2182
  %v2184 = vpop.f32.mrf.mxu0
  %v2185 = vadd.f32 %v2096, %v2184
  %2186 = vmatmul.bf16.gmra.mxu0 %v748
  %v2187 = vpop.f32.mrf.mxu0
  %v2188 = vadd.f32 %v2099, %v2187
  %v2189 = vpop.f32.mrf.mxu0
  %v2190 = vadd.f32 %v2101, %v2189
  %2191 = vmatmul.bf16.gmra.mxu0 %v755
  %v2192 = vpop.f32.mrf.mxu0
  %v2193 = vadd.f32 %v2104, %v2192
  %v2194 = vpop.f32.mrf.mxu0
  %v2195 = vadd.f32 %v2106, %v2194
  %2196 = vmatmul.bf16.gmra.mxu0 %v762
  %v2197 = vpop.f32.mrf.mxu0
  %v2198 = vadd.f32 %v2109, %v2197
  %v2199 = vpop.f32.mrf.mxu0
  %v2200 = vadd.f32 %v2111, %v2199
  %2201 = vmatmul.bf16.gmra.mxu0 %v769
  %v2202 = vpop.f32.mrf.mxu0
  %v2203 = vadd.f32 %v2114, %v2202
  %v2204 = vpop.f32.mrf.mxu0
  %v2205 = vadd.f32 %v2116, %v2204
  %2206 = vmatmul.bf16.gmra.mxu0 %v776
  %v2207 = vpop.f32.mrf.mxu0
  %v2208 = vadd.f32 %v2119, %v2207
  %v2209 = vpop.f32.mrf.mxu0
  %v2210 = vadd.f32 %v2121, %v2209
  %2211 = vmatmul.bf16.gmra.mxu0 %v783
  %v2212 = vpop.f32.mrf.mxu0
  %v2213 = vadd.f32 %v2124, %v2212
  %v2214 = vpop.f32.mrf.mxu0
  %v2215 = vadd.f32 %v2126, %v2214
  %2216 = vmatmul.bf16.gmra.mxu0 %v790
  %v2217 = vpop.f32.mrf.mxu0
  %v2218 = vadd.f32 %v2129, %v2217
  %v2219 = vpop.f32.mrf.mxu0
  %v2220 = vadd.f32 %v2131, %v2219
  %2221 = vmatmul.bf16.gmra.mxu0 %v797
  %v2222 = vpop.f32.mrf.mxu0
  %v2223 = vadd.f32 %v2134, %v2222
  %v2224 = vpop.f32.mrf.mxu0
  %v2225 = vadd.f32 %v2136, %v2224
  %2226 = vmatmul.bf16.gmra.mxu0 %v804
  %v2227 = vpop.f32.mrf.mxu0
  %v2228 = vadd.f32 %v2139, %v2227
  %v2229 = vpop.f32.mrf.mxu0
  %v2230 = vadd.f32 %v2141, %v2229
  %2231 = vmatmul.bf16.gmra.mxu0 %v811
  %v2232 = vpop.f32.mrf.mxu0
  %v2233 = vadd.f32 %v2144, %v2232
  %v2234 = vpop.f32.mrf.mxu0
  %v2235 = vadd.f32 %v2146, %v2234
  %2236 = vmatmul.bf16.gmra.mxu0 %v818
  %v2237 = vpop.f32.mrf.mxu0
  %v2238 = vadd.f32 %v2149, %v2237
  %v2239 = vpop.f32.mrf.mxu0
  %v2240 = vadd.f32 %v2151, %v2239
  %2241 = vmatmul.bf16.gmra.mxu0 %v825
  %v2242 = vpop.f32.mrf.mxu0
  %v2243 = vadd.f32 %v2154, %v2242
  %v2244 = vpop.f32.mrf.mxu0
  %v2245 = vadd.f32 %v2156, %v2244
  %2246 = vmatmul.bf16.gmra.mxu0 %v832
  %v2247 = vpop.f32.mrf.mxu0
  %v2248 = vadd.f32 %v2159, %v2247
  %v2249 = vpop.f32.mrf.mxu0
  %v2250 = vadd.f32 %v2161, %v2249
  %2251 = vmatmul.bf16.gmra.mxu0 %v839
  %v2252 = vpop.f32.mrf.mxu0
  %v2253 = vadd.f32 %v2164, %v2252
  %v2254 = vpop.f32.mrf.mxu0
  %v2255 = vadd.f32 %v2166, %v2254
  %2256 = vmatmul.bf16.gmra.mxu0 %v846
  %v2257 = vpop.f32.mrf.mxu0
  %v2258 = vadd.f32 %v2169, %v2257
  %v2259 = vpop.f32.mrf.mxu0
  %v2260 = vadd.f32 %v2171, %v2259
  %2261 = vdwg.mxu0
  %2262 = vmatpush.bf16.msra.mxu0 %v1728
  %2263 = vmatpush.bf16.msra.mxu0 %v1724
  %2264 = vmatpush.bf16.msra.mxu0 %v1720
  %2265 = vmatpush.bf16.msra.mxu0 %v1716
  %2266 = vmatpush.bf16.msra.mxu0 %v1712
  %2267 = vmatpush.bf16.msra.mxu0 %v1708
  %2268 = vmatpush.bf16.msra.mxu0 %v1704
  %2269 = vmatpush.bf16.msra.mxu0 %v1700
  %2270 = vmatmul.bf16.gmra.mxu0 %v742
  %v2271 = vpop.f32.mrf.mxu0
  %v2272 = vadd.f32 %v2183, %v2271
  %v2273 = vpop.f32.mrf.mxu0
  %v2274 = vadd.f32 %v2185, %v2273
  %2275 = vmatmul.bf16.gmra.mxu0 %v749
  %v2276 = vpop.f32.mrf.mxu0
  %v2277 = vadd.f32 %v2188, %v2276
  %v2278 = vpop.f32.mrf.mxu0
  %v2279 = vadd.f32 %v2190, %v2278
  %2280 = vmatmul.bf16.gmra.mxu0 %v756
  %v2281 = vpop.f32.mrf.mxu0
  %v2282 = vadd.f32 %v2193, %v2281
  %v2283 = vpop.f32.mrf.mxu0
  %v2284 = vadd.f32 %v2195, %v2283
  %2285 = vmatmul.bf16.gmra.mxu0 %v763
  %v2286 = vpop.f32.mrf.mxu0
  %v2287 = vadd.f32 %v2198, %v2286
  %v2288 = vpop.f32.mrf.mxu0
  %v2289 = vadd.f32 %v2200, %v2288
  %2290 = vmatmul.bf16.gmra.mxu0 %v770
  %v2291 = vpop.f32.mrf.mxu0
  %v2292 = vadd.f32 %v2203, %v2291
  %v2293 = vpop.f32.mrf.mxu0
  %v2294 = vadd.f32 %v2205, %v2293
  %2295 = vmatmul.bf16.gmra.mxu0 %v777
  %v2296 = vpop.f32.mrf.mxu0
  %v2297 = vadd.f32 %v2208, %v2296
  %v2298 = vpop.f32.mrf.mxu0
  %v2299 = vadd.f32 %v2210, %v2298
  %2300 = vmatmul.bf16.gmra.mxu0 %v784
  %v2301 = vpop.f32.mrf.mxu0
  %v2302 = vadd.f32 %v2213, %v2301
  %v2303 = vpop.f32.mrf.mxu0
  %v2304 = vadd.f32 %v2215, %v2303
  %2305 = vmatmul.bf16.gmra.mxu0 %v791
  %v2306 = vpop.f32.mrf.mxu0
  %v2307 = vadd.f32 %v2218, %v2306
  %v2308 = vpop.f32.mrf.mxu0
  %v2309 = vadd.f32 %v2220, %v2308
  %2310 = vmatmul.bf16.gmra.mxu0 %v798
  %v2311 = vpop.f32.mrf.mxu0
  %v2312 = vadd.f32 %v2223, %v2311
  %v2313 = vpop.f32.mrf.mxu0
  %v2314 = vadd.f32 %v2225, %v2313
  %2315 = vmatmul.bf16.gmra.mxu0 %v805
  %v2316 = vpop.f32.mrf.mxu0
  %v2317 = vadd.f32 %v2228, %v2316
  %v2318 = vpop.f32.mrf.mxu0
  %v2319 = vadd.f32 %v2230, %v2318
  %2320 = vmatmul.bf16.gmra.mxu0 %v812
  %v2321 = vpop.f32.mrf.mxu0
  %v2322 = vadd.f32 %v2233, %v2321
  %v2323 = vpop.f32.mrf.mxu0
  %v2324 = vadd.f32 %v2235, %v2323
  %2325 = vmatmul.bf16.gmra.mxu0 %v819
  %v2326 = vpop.f32.mrf.mxu0
  %v2327 = vadd.f32 %v2238, %v2326
  %v2328 = vpop.f32.mrf.mxu0
  %v2329 = vadd.f32 %v2240, %v2328
  %2330 = vmatmul.bf16.gmra.mxu0 %v826
  %v2331 = vpop.f32.mrf.mxu0
  %v2332 = vadd.f32 %v2243, %v2331
  %v2333 = vpop.f32.mrf.mxu0
  %v2334 = vadd.f32 %v2245, %v2333
  %2335 = vmatmul.bf16.gmra.mxu0 %v833
  %v2336 = vpop.f32.mrf.mxu0
  %v2337 = vadd.f32 %v2248, %v2336
  %v2338 = vpop.f32.mrf.mxu0
  %v2339 = vadd.f32 %v2250, %v2338
  %2340 = vmatmul.bf16.gmra.mxu0 %v840
  %v2341 = vpop.f32.mrf.mxu0
  %v2342 = vadd.f32 %v2253, %v2341
  %v2343 = vpop.f32.mrf.mxu0
  %v2344 = vadd.f32 %v2255, %v2343
  %2345 = vmatmul.bf16.gmra.mxu0 %v847
  %v2346 = vpop.f32.mrf.mxu0
  %v2347 = vadd.f32 %v2258, %v2346
  %v2348 = vpop.f32.mrf.mxu0
  %v2349 = vadd.f32 %v2260, %v2348
  %2350 = vdwg.mxu0
  %2351 = vmatpush.bf16.msra.mxu0 %v1760
  %2352 = vmatpush.bf16.msra.mxu0 %v1756
  %2353 = vmatpush.bf16.msra.mxu0 %v1752
  %2354 = vmatpush.bf16.msra.mxu0 %v1748
  %2355 = vmatpush.bf16.msra.mxu0 %v1744
  %2356 = vmatpush.bf16.msra.mxu0 %v1740
  %2357 = vmatpush.bf16.msra.mxu0 %v1736
  %2358 = vmatpush.bf16.msra.mxu0 %v1732
  %2359 = vmatmul.bf16.gmra.mxu0 %v743
  %v2360 = vpop.f32.mrf.mxu0
  %v2361 = vadd.f32 %v2272, %v2360
  %v2362 = vpop.f32.mrf.mxu0
  %v2363 = vadd.f32 %v2274, %v2362
  %2364 = vmatmul.bf16.gmra.mxu0 %v750
  %v2365 = vpop.f32.mrf.mxu0
  %v2366 = vadd.f32 %v2277, %v2365
  %v2367 = vpop.f32.mrf.mxu0
  %v2368 = vadd.f32 %v2279, %v2367
  %2369 = vmatmul.bf16.gmra.mxu0 %v757
  %v2370 = vpop.f32.mrf.mxu0
  %v2371 = vadd.f32 %v2282, %v2370
  %v2372 = vpop.f32.mrf.mxu0
  %v2373 = vadd.f32 %v2284, %v2372
  %2374 = vmatmul.bf16.gmra.mxu0 %v764
  %v2375 = vpop.f32.mrf.mxu0
  %v2376 = vadd.f32 %v2287, %v2375
  %v2377 = vpop.f32.mrf.mxu0
  %v2378 = vadd.f32 %v2289, %v2377
  %2379 = vmatmul.bf16.gmra.mxu0 %v771
  %v2380 = vpop.f32.mrf.mxu0
  %v2381 = vadd.f32 %v2292, %v2380
  %v2382 = vpop.f32.mrf.mxu0
  %v2383 = vadd.f32 %v2294, %v2382
  %2384 = vmatmul.bf16.gmra.mxu0 %v778
  %v2385 = vpop.f32.mrf.mxu0
  %v2386 = vadd.f32 %v2297, %v2385
  %v2387 = vpop.f32.mrf.mxu0
  %v2388 = vadd.f32 %v2299, %v2387
  %2389 = vmatmul.bf16.gmra.mxu0 %v785
  %v2390 = vpop.f32.mrf.mxu0
  %v2391 = vadd.f32 %v2302, %v2390
  %v2392 = vpop.f32.mrf.mxu0
  %v2393 = vadd.f32 %v2304, %v2392
  %2394 = vmatmul.bf16.gmra.mxu0 %v792
  %v2395 = vpop.f32.mrf.mxu0
  %v2396 = vadd.f32 %v2307, %v2395
  %v2397 = vpop.f32.mrf.mxu0
  %v2398 = vadd.f32 %v2309, %v2397
  %2399 = vmatmul.bf16.gmra.mxu0 %v799
  %v2400 = vpop.f32.mrf.mxu0
  %v2401 = vadd.f32 %v2312, %v2400
  %v2402 = vpop.f32.mrf.mxu0
  %v2403 = vadd.f32 %v2314, %v2402
  %2404 = vmatmul.bf16.gmra.mxu0 %v806
  %v2405 = vpop.f32.mrf.mxu0
  %v2406 = vadd.f32 %v2317, %v2405
  %v2407 = vpop.f32.mrf.mxu0
  %v2408 = vadd.f32 %v2319, %v2407
  %2409 = vmatmul.bf16.gmra.mxu0 %v813
  %v2410 = vpop.f32.mrf.mxu0
  %v2411 = vadd.f32 %v2322, %v2410
  %v2412 = vpop.f32.mrf.mxu0
  %v2413 = vadd.f32 %v2324, %v2412
  %2414 = vmatmul.bf16.gmra.mxu0 %v820
  %v2415 = vpop.f32.mrf.mxu0
  %v2416 = vadd.f32 %v2327, %v2415
  %v2417 = vpop.f32.mrf.mxu0
  %v2418 = vadd.f32 %v2329, %v2417
  %2419 = vmatmul.bf16.gmra.mxu0 %v827
  %v2420 = vpop.f32.mrf.mxu0
  %v2421 = vadd.f32 %v2332, %v2420
  %v2422 = vpop.f32.mrf.mxu0
  %v2423 = vadd.f32 %v2334, %v2422
  %2424 = vmatmul.bf16.gmra.mxu0 %v834
  %v2425 = vpop.f32.mrf.mxu0
  %v2426 = vadd.f32 %v2337, %v2425
  %v2427 = vpop.f32.mrf.mxu0
  %v2428 = vadd.f32 %v2339, %v2427
  %2429 = vmatmul.bf16.gmra.mxu0 %v841
  %v2430 = vpop.f32.mrf.mxu0
  %v2431 = vadd.f32 %v2342, %v2430
  %v2432 = vpop.f32.mrf.mxu0
  %v2433 = vadd.f32 %v2344, %v2432
  %2434 = vmatmul.bf16.gmra.mxu0 %v848
  %v2435 = vpop.f32.mrf.mxu0
  %v2436 = vadd.f32 %v2347, %v2435
  %v2437 = vpop.f32.mrf.mxu0
  %v2438 = vadd.f32 %v2349, %v2437
  %2439 = vdwg.mxu0
  %2440 = vmatpush.bf16.msra.mxu0 %v1792
  %2441 = vmatpush.bf16.msra.mxu0 %v1788
  %2442 = vmatpush.bf16.msra.mxu0 %v1784
  %2443 = vmatpush.bf16.msra.mxu0 %v1780
  %2444 = vmatpush.bf16.msra.mxu0 %v1776
  %2445 = vmatpush.bf16.msra.mxu0 %v1772
  %2446 = vmatpush.bf16.msra.mxu0 %v1768
  %2447 = vmatpush.bf16.msra.mxu0 %v1764
  %2448 = vmatmul.bf16.gmra.mxu0 %v744
  %v2449 = vpop.f32.mrf.mxu0
  %v2450 = vadd.f32 %v2361, %v2449
  %v2451 = vpop.f32.mrf.mxu0
  %v2452 = vadd.f32 %v2363, %v2451
  %2453 = vmatmul.bf16.gmra.mxu0 %v751
  %v2454 = vpop.f32.mrf.mxu0
  %v2455 = vadd.f32 %v2366, %v2454
  %v2456 = vpop.f32.mrf.mxu0
  %v2457 = vadd.f32 %v2368, %v2456
  %2458 = vmatmul.bf16.gmra.mxu0 %v758
  %v2459 = vpop.f32.mrf.mxu0
  %v2460 = vadd.f32 %v2371, %v2459
  %v2461 = vpop.f32.mrf.mxu0
  %v2462 = vadd.f32 %v2373, %v2461
  %2463 = vmatmul.bf16.gmra.mxu0 %v765
  %v2464 = vpop.f32.mrf.mxu0
  %v2465 = vadd.f32 %v2376, %v2464
  %v2466 = vpop.f32.mrf.mxu0
  %v2467 = vadd.f32 %v2378, %v2466
  %2468 = vmatmul.bf16.gmra.mxu0 %v772
  %v2469 = vpop.f32.mrf.mxu0
  %v2470 = vadd.f32 %v2381, %v2469
  %v2471 = vpop.f32.mrf.mxu0
  %v2472 = vadd.f32 %v2383, %v2471
  %2473 = vmatmul.bf16.gmra.mxu0 %v779
  %v2474 = vpop.f32.mrf.mxu0
  %v2475 = vadd.f32 %v2386, %v2474
  %v2476 = vpop.f32.mrf.mxu0
  %v2477 = vadd.f32 %v2388, %v2476
  %2478 = vmatmul.bf16.gmra.mxu0 %v786
  %v2479 = vpop.f32.mrf.mxu0
  %v2480 = vadd.f32 %v2391, %v2479
  %v2481 = vpop.f32.mrf.mxu0
  %v2482 = vadd.f32 %v2393, %v2481
  %2483 = vmatmul.bf16.gmra.mxu0 %v793
  %v2484 = vpop.f32.mrf.mxu0
  %v2485 = vadd.f32 %v2396, %v2484
  %v2486 = vpop.f32.mrf.mxu0
  %v2487 = vadd.f32 %v2398, %v2486
  %2488 = vmatmul.bf16.gmra.mxu0 %v800
  %v2489 = vpop.f32.mrf.mxu0
  %v2490 = vadd.f32 %v2401, %v2489
  %v2491 = vpop.f32.mrf.mxu0
  %v2492 = vadd.f32 %v2403, %v2491
  %2493 = vmatmul.bf16.gmra.mxu0 %v807
  %v2494 = vpop.f32.mrf.mxu0
  %v2495 = vadd.f32 %v2406, %v2494
  %v2496 = vpop.f32.mrf.mxu0
  %v2497 = vadd.f32 %v2408, %v2496
  %2498 = vmatmul.bf16.gmra.mxu0 %v814
  %v2499 = vpop.f32.mrf.mxu0
  %v2500 = vadd.f32 %v2411, %v2499
  %v2501 = vpop.f32.mrf.mxu0
  %v2502 = vadd.f32 %v2413, %v2501
  %2503 = vmatmul.bf16.gmra.mxu0 %v821
  %v2504 = vpop.f32.mrf.mxu0
  %v2505 = vadd.f32 %v2416, %v2504
  %v2506 = vpop.f32.mrf.mxu0
  %v2507 = vadd.f32 %v2418, %v2506
  %2508 = vmatmul.bf16.gmra.mxu0 %v828
  %v2509 = vpop.f32.mrf.mxu0
  %v2510 = vadd.f32 %v2421, %v2509
  %v2511 = vpop.f32.mrf.mxu0
  %v2512 = vadd.f32 %v2423, %v2511
  %2513 = vmatmul.bf16.gmra.mxu0 %v835
  %v2514 = vpop.f32.mrf.mxu0
  %v2515 = vadd.f32 %v2426, %v2514
  %v2516 = vpop.f32.mrf.mxu0
  %v2517 = vadd.f32 %v2428, %v2516
  %2518 = vmatmul.bf16.gmra.mxu0 %v842
  %v2519 = vpop.f32.mrf.mxu0
  %v2520 = vadd.f32 %v2431, %v2519
  %v2521 = vpop.f32.mrf.mxu0
  %v2522 = vadd.f32 %v2433, %v2521
  %2523 = vmatmul.bf16.gmra.mxu0 %v849
  %v2524 = vpop.f32.mrf.mxu0
  %v2525 = vadd.f32 %v2436, %v2524
  %v2526 = vpop.f32.mrf.mxu0
  %v2527 = vadd.f32 %v2438, %v2526
  %2528 = vdwg.mxu0
  %2529 = vmatpush.bf16.msra.mxu0 %v1824
  %2530 = vmatpush.bf16.msra.mxu0 %v1820
  %2531 = vmatpush.bf16.msra.mxu0 %v1816
  %2532 = vmatpush.bf16.msra.mxu0 %v1812
  %2533 = vmatpush.bf16.msra.mxu0 %v1808
  %2534 = vmatpush.bf16.msra.mxu0 %v1804
  %2535 = vmatpush.bf16.msra.mxu0 %v1800
  %2536 = vmatpush.bf16.msra.mxu0 %v1796
  %2537 = vmatmul.bf16.gmra.mxu0 %v745
  %v2538 = vpop.f32.mrf.mxu0
  %v2539 = vadd.f32 %v2450, %v2538
  %v2540 = vpop.f32.mrf.mxu0
  %v2541 = vadd.f32 %v2452, %v2540
  %2542 = vmatmul.bf16.gmra.mxu0 %v752
  %v2543 = vpop.f32.mrf.mxu0
  %v2544 = vadd.f32 %v2455, %v2543
  %v2545 = vpop.f32.mrf.mxu0
  %v2546 = vadd.f32 %v2457, %v2545
  %2547 = vmatmul.bf16.gmra.mxu0 %v759
  %v2548 = vpop.f32.mrf.mxu0
  %v2549 = vadd.f32 %v2460, %v2548
  %v2550 = vpop.f32.mrf.mxu0
  %v2551 = vadd.f32 %v2462, %v2550
  %2552 = vmatmul.bf16.gmra.mxu0 %v766
  %v2553 = vpop.f32.mrf.mxu0
  %v2554 = vadd.f32 %v2465, %v2553
  %v2555 = vpop.f32.mrf.mxu0
  %v2556 = vadd.f32 %v2467, %v2555
  %2557 = vmatmul.bf16.gmra.mxu0 %v773
  %v2558 = vpop.f32.mrf.mxu0
  %v2559 = vadd.f32 %v2470, %v2558
  %v2560 = vpop.f32.mrf.mxu0
  %v2561 = vadd.f32 %v2472, %v2560
  %2562 = vmatmul.bf16.gmra.mxu0 %v780
  %v2563 = vpop.f32.mrf.mxu0
  %v2564 = vadd.f32 %v2475, %v2563
  %v2565 = vpop.f32.mrf.mxu0
  %v2566 = vadd.f32 %v2477, %v2565
  %2567 = vmatmul.bf16.gmra.mxu0 %v787
  %v2568 = vpop.f32.mrf.mxu0
  %v2569 = vadd.f32 %v2480, %v2568
  %v2570 = vpop.f32.mrf.mxu0
  %v2571 = vadd.f32 %v2482, %v2570
  %2572 = vmatmul.bf16.gmra.mxu0 %v794
  %v2573 = vpop.f32.mrf.mxu0
  %v2574 = vadd.f32 %v2485, %v2573
  %v2575 = vpop.f32.mrf.mxu0
  %v2576 = vadd.f32 %v2487, %v2575
  %2577 = vmatmul.bf16.gmra.mxu0 %v801
  %v2578 = vpop.f32.mrf.mxu0
  %v2579 = vadd.f32 %v2490, %v2578
  %v2580 = vpop.f32.mrf.mxu0
  %v2581 = vadd.f32 %v2492, %v2580
  %2582 = vmatmul.bf16.gmra.mxu0 %v808
  %v2583 = vpop.f32.mrf.mxu0
  %v2584 = vadd.f32 %v2495, %v2583
  %v2585 = vpop.f32.mrf.mxu0
  %v2586 = vadd.f32 %v2497, %v2585
  %2587 = vmatmul.bf16.gmra.mxu0 %v815
  %v2588 = vpop.f32.mrf.mxu0
  %v2589 = vadd.f32 %v2500, %v2588
  %v2590 = vpop.f32.mrf.mxu0
  %v2591 = vadd.f32 %v2502, %v2590
  %2592 = vmatmul.bf16.gmra.mxu0 %v822
  %v2593 = vpop.f32.mrf.mxu0
  %v2594 = vadd.f32 %v2505, %v2593
  %v2595 = vpop.f32.mrf.mxu0
  %v2596 = vadd.f32 %v2507, %v2595
  %2597 = vmatmul.bf16.gmra.mxu0 %v829
  %v2598 = vpop.f32.mrf.mxu0
  %v2599 = vadd.f32 %v2510, %v2598
  %v2600 = vpop.f32.mrf.mxu0
  %v2601 = vadd.f32 %v2512, %v2600
  %2602 = vmatmul.bf16.gmra.mxu0 %v836
  %v2603 = vpop.f32.mrf.mxu0
  %v2604 = vadd.f32 %v2515, %v2603
  %v2605 = vpop.f32.mrf.mxu0
  %v2606 = vadd.f32 %v2517, %v2605
  %2607 = vmatmul.bf16.gmra.mxu0 %v843
  %v2608 = vpop.f32.mrf.mxu0
  %v2609 = vadd.f32 %v2520, %v2608
  %v2610 = vpop.f32.mrf.mxu0
  %v2611 = vadd.f32 %v2522, %v2610
  %2612 = vmatmul.bf16.gmra.mxu0 %v850
  %v2613 = vpop.f32.mrf.mxu0
  %v2614 = vadd.f32 %v2525, %v2613
  %v2615 = vpop.f32.mrf.mxu0
  %v2616 = vadd.f32 %v2527, %v2615
  %2617 = vdwg.mxu0
  %2618 = vmatpush.bf16.msra.mxu0 %v1856
  %2619 = vmatpush.bf16.msra.mxu0 %v1852
  %2620 = vmatpush.bf16.msra.mxu0 %v1848
  %2621 = vmatpush.bf16.msra.mxu0 %v1844
  %2622 = vmatpush.bf16.msra.mxu0 %v1840
  %2623 = vmatpush.bf16.msra.mxu0 %v1836
  %2624 = vmatpush.bf16.msra.mxu0 %v1832
  %2625 = vmatpush.bf16.msra.mxu0 %v1828
  %2626 = vmatmul.bf16.gmra.mxu0 %v746
  %v2627 = vpop.f32.mrf.mxu0
  %v2628 = vadd.f32 %v2539, %v2627
  %v2629 = vpop.f32.mrf.mxu0
  %v2630 = vadd.f32 %v2541, %v2629
  %2631 = vmatmul.bf16.gmra.mxu0 %v753
  %v2632 = vpop.f32.mrf.mxu0
  %v2633 = vadd.f32 %v2544, %v2632
  %v2634 = vpop.f32.mrf.mxu0
  %v2635 = vadd.f32 %v2546, %v2634
  %2636 = vmatmul.bf16.gmra.mxu0 %v760
  %v2637 = vpop.f32.mrf.mxu0
  %v2638 = vadd.f32 %v2549, %v2637
  %v2639 = vpop.f32.mrf.mxu0
  %v2640 = vadd.f32 %v2551, %v2639
  %2641 = vmatmul.bf16.gmra.mxu0 %v767
  %v2642 = vpop.f32.mrf.mxu0
  %v2643 = vadd.f32 %v2554, %v2642
  %v2644 = vpop.f32.mrf.mxu0
  %v2645 = vadd.f32 %v2556, %v2644
  %2646 = vmatmul.bf16.gmra.mxu0 %v774
  %v2647 = vpop.f32.mrf.mxu0
  %v2648 = vadd.f32 %v2559, %v2647
  %v2649 = vpop.f32.mrf.mxu0
  %v2650 = vadd.f32 %v2561, %v2649
  %2651 = vmatmul.bf16.gmra.mxu0 %v781
  %v2652 = vpop.f32.mrf.mxu0
  %v2653 = vadd.f32 %v2564, %v2652
  %v2654 = vpop.f32.mrf.mxu0
  %v2655 = vadd.f32 %v2566, %v2654
  %2656 = vmatmul.bf16.gmra.mxu0 %v788
  %v2657 = vpop.f32.mrf.mxu0
  %v2658 = vadd.f32 %v2569, %v2657
  %v2659 = vpop.f32.mrf.mxu0
  %v2660 = vadd.f32 %v2571, %v2659
  %2661 = vmatmul.bf16.gmra.mxu0 %v795
  %v2662 = vpop.f32.mrf.mxu0
  %v2663 = vadd.f32 %v2574, %v2662
  %v2664 = vpop.f32.mrf.mxu0
  %v2665 = vadd.f32 %v2576, %v2664
  %2666 = vmatmul.bf16.gmra.mxu0 %v802
  %v2667 = vpop.f32.mrf.mxu0
  %v2668 = vadd.f32 %v2579, %v2667
  %v2669 = vpop.f32.mrf.mxu0
  %v2670 = vadd.f32 %v2581, %v2669
  %2671 = vmatmul.bf16.gmra.mxu0 %v809
  %v2672 = vpop.f32.mrf.mxu0
  %v2673 = vadd.f32 %v2584, %v2672
  %v2674 = vpop.f32.mrf.mxu0
  %v2675 = vadd.f32 %v2586, %v2674
  %2676 = vmatmul.bf16.gmra.mxu0 %v816
  %v2677 = vpop.f32.mrf.mxu0
  %v2678 = vadd.f32 %v2589, %v2677
  %v2679 = vpop.f32.mrf.mxu0
  %v2680 = vadd.f32 %v2591, %v2679
  %2681 = vmatmul.bf16.gmra.mxu0 %v823
  %v2682 = vpop.f32.mrf.mxu0
  %v2683 = vadd.f32 %v2594, %v2682
  %v2684 = vpop.f32.mrf.mxu0
  %v2685 = vadd.f32 %v2596, %v2684
  %2686 = vmatmul.bf16.gmra.mxu0 %v830
  %v2687 = vpop.f32.mrf.mxu0
  %v2688 = vadd.f32 %v2599, %v2687
  %v2689 = vpop.f32.mrf.mxu0
  %v2690 = vadd.f32 %v2601, %v2689
  %2691 = vmatmul.bf16.gmra.mxu0 %v837
  %v2692 = vpop.f32.mrf.mxu0
  %v2693 = vadd.f32 %v2604, %v2692
  %v2694 = vpop.f32.mrf.mxu0
  %v2695 = vadd.f32 %v2606, %v2694
  %2696 = vmatmul.bf16.gmra.mxu0 %v844
  %v2697 = vpop.f32.mrf.mxu0
  %v2698 = vadd.f32 %v2609, %v2697
  %v2699 = vpop.f32.mrf.mxu0
  %v2700 = vadd.f32 %v2611, %v2699
  %2701 = vmatmul.bf16.gmra.mxu0 %v851
  %v2702 = vpop.f32.mrf.mxu0
  %v2703 = vadd.f32 %v2614, %v2702
  %v2704 = vpop.f32.mrf.mxu0
  %v2705 = vadd.f32 %v2616, %v2704
  %2706 = vdwg.mxu0
  %2707 = vmatpush.bf16.msra.mxu0 %v1665
  %2708 = vmatpush.bf16.msra.mxu0 %v1661
  %2709 = vmatpush.bf16.msra.mxu0 %v1657
  %2710 = vmatpush.bf16.msra.mxu0 %v1653
  %2711 = vmatpush.bf16.msra.mxu0 %v1649
  %2712 = vmatpush.bf16.msra.mxu0 %v1645
  %2713 = vmatpush.bf16.msra.mxu0 %v1641
  %2714 = vmatpush.bf16.msra.mxu0 %v1637
  %2715 = vmatmul.bf16.gmra.mxu0 %v740
  %v2716 = vpop.f32.mrf.mxu0
  %v2717 = vadd.f32 %v381, %v2716
  %v2718 = vpop.f32.mrf.mxu0
  %v2719 = vadd.f32 %v381, %v2718
  %2720 = vmatmul.bf16.gmra.mxu0 %v747
  %v2721 = vpop.f32.mrf.mxu0
  %v2722 = vadd.f32 %v381, %v2721
  %v2723 = vpop.f32.mrf.mxu0
  %v2724 = vadd.f32 %v381, %v2723
  %2725 = vmatmul.bf16.gmra.mxu0 %v754
  %v2726 = vpop.f32.mrf.mxu0
  %v2727 = vadd.f32 %v381, %v2726
  %v2728 = vpop.f32.mrf.mxu0
  %v2729 = vadd.f32 %v381, %v2728
  %2730 = vmatmul.bf16.gmra.mxu0 %v761
  %v2731 = vpop.f32.mrf.mxu0
  %v2732 = vadd.f32 %v381, %v2731
  %v2733 = vpop.f32.mrf.mxu0
  %v2734 = vadd.f32 %v381, %v2733
  %2735 = vmatmul.bf16.gmra.mxu0 %v768
  %v2736 = vpop.f32.mrf.mxu0
  %v2737 = vadd.f32 %v381, %v2736
  %v2738 = vpop.f32.mrf.mxu0
  %v2739 = vadd.f32 %v381, %v2738
  %2740 = vmatmul.bf16.gmra.mxu0 %v775
  %v2741 = vpop.f32.mrf.mxu0
  %v2742 = vadd.f32 %v381, %v2741
  %v2743 = vpop.f32.mrf.mxu0
  %v2744 = vadd.f32 %v381, %v2743
  %2745 = vmatmul.bf16.gmra.mxu0 %v782
  %v2746 = vpop.f32.mrf.mxu0
  %v2747 = vadd.f32 %v381, %v2746
  %v2748 = vpop.f32.mrf.mxu0
  %v2749 = vadd.f32 %v381, %v2748
  %2750 = vmatmul.bf16.gmra.mxu0 %v789
  %v2751 = vpop.f32.mrf.mxu0
  %v2752 = vadd.f32 %v381, %v2751
  %v2753 = vpop.f32.mrf.mxu0
  %v2754 = vadd.f32 %v381, %v2753
  %2755 = vmatmul.bf16.gmra.mxu0 %v796
  %v2756 = vpop.f32.mrf.mxu0
  %v2757 = vadd.f32 %v381, %v2756
  %v2758 = vpop.f32.mrf.mxu0
  %v2759 = vadd.f32 %v381, %v2758
  %2760 = vmatmul.bf16.gmra.mxu0 %v803
  %v2761 = vpop.f32.mrf.mxu0
  %v2762 = vadd.f32 %v381, %v2761
  %v2763 = vpop.f32.mrf.mxu0
  %v2764 = vadd.f32 %v381, %v2763
  %2765 = vmatmul.bf16.gmra.mxu0 %v810
  %v2766 = vpop.f32.mrf.mxu0
  %v2767 = vadd.f32 %v381, %v2766
  %v2768 = vpop.f32.mrf.mxu0
  %v2769 = vadd.f32 %v381, %v2768
  %2770 = vmatmul.bf16.gmra.mxu0 %v817
  %v2771 = vpop.f32.mrf.mxu0
  %v2772 = vadd.f32 %v381, %v2771
  %v2773 = vpop.f32.mrf.mxu0
  %v2774 = vadd.f32 %v381, %v2773
  %2775 = vmatmul.bf16.gmra.mxu0 %v824
  %v2776 = vpop.f32.mrf.mxu0
  %v2777 = vadd.f32 %v381, %v2776
  %v2778 = vpop.f32.mrf.mxu0
  %v2779 = vadd.f32 %v381, %v2778
  %2780 = vmatmul.bf16.gmra.mxu0 %v831
  %v2781 = vpop.f32.mrf.mxu0
  %v2782 = vadd.f32 %v381, %v2781
  %v2783 = vpop.f32.mrf.mxu0
  %v2784 = vadd.f32 %v381, %v2783
  %2785 = vmatmul.bf16.gmra.mxu0 %v838
  %v2786 = vpop.f32.mrf.mxu0
  %v2787 = vadd.f32 %v381, %v2786
  %v2788 = vpop.f32.mrf.mxu0
  %v2789 = vadd.f32 %v381, %v2788
  %2790 = vmatmul.bf16.gmra.mxu0 %v845
  %v2791 = vpop.f32.mrf.mxu0
  %v2792 = vadd.f32 %v381, %v2791
  %v2793 = vpop.f32.mrf.mxu0
  %v2794 = vadd.f32 %v381, %v2793
  %2795 = vdwg.mxu0
  %2796 = vmatpush.bf16.msra.mxu0 %v1697
  %2797 = vmatpush.bf16.msra.mxu0 %v1693
  %2798 = vmatpush.bf16.msra.mxu0 %v1689
  %2799 = vmatpush.bf16.msra.mxu0 %v1685
  %2800 = vmatpush.bf16.msra.mxu0 %v1681
  %2801 = vmatpush.bf16.msra.mxu0 %v1677
  %2802 = vmatpush.bf16.msra.mxu0 %v1673
  %2803 = vmatpush.bf16.msra.mxu0 %v1669
  %2804 = vmatmul.bf16.gmra.mxu0 %v741
  %v2805 = vpop.f32.mrf.mxu0
  %v2806 = vadd.f32 %v2717, %v2805
  %v2807 = vpop.f32.mrf.mxu0
  %v2808 = vadd.f32 %v2719, %v2807
  %2809 = vmatmul.bf16.gmra.mxu0 %v748
  %v2810 = vpop.f32.mrf.mxu0
  %v2811 = vadd.f32 %v2722, %v2810
  %v2812 = vpop.f32.mrf.mxu0
  %v2813 = vadd.f32 %v2724, %v2812
  %2814 = vmatmul.bf16.gmra.mxu0 %v755
  %v2815 = vpop.f32.mrf.mxu0
  %v2816 = vadd.f32 %v2727, %v2815
  %v2817 = vpop.f32.mrf.mxu0
  %v2818 = vadd.f32 %v2729, %v2817
  %2819 = vmatmul.bf16.gmra.mxu0 %v762
  %v2820 = vpop.f32.mrf.mxu0
  %v2821 = vadd.f32 %v2732, %v2820
  %v2822 = vpop.f32.mrf.mxu0
  %v2823 = vadd.f32 %v2734, %v2822
  %2824 = vmatmul.bf16.gmra.mxu0 %v769
  %v2825 = vpop.f32.mrf.mxu0
  %v2826 = vadd.f32 %v2737, %v2825
  %v2827 = vpop.f32.mrf.mxu0
  %v2828 = vadd.f32 %v2739, %v2827
  %2829 = vmatmul.bf16.gmra.mxu0 %v776
  %v2830 = vpop.f32.mrf.mxu0
  %v2831 = vadd.f32 %v2742, %v2830
  %v2832 = vpop.f32.mrf.mxu0
  %v2833 = vadd.f32 %v2744, %v2832
  %2834 = vmatmul.bf16.gmra.mxu0 %v783
  %v2835 = vpop.f32.mrf.mxu0
  %v2836 = vadd.f32 %v2747, %v2835
  %v2837 = vpop.f32.mrf.mxu0
  %v2838 = vadd.f32 %v2749, %v2837
  %2839 = vmatmul.bf16.gmra.mxu0 %v790
  %v2840 = vpop.f32.mrf.mxu0
  %v2841 = vadd.f32 %v2752, %v2840
  %v2842 = vpop.f32.mrf.mxu0
  %v2843 = vadd.f32 %v2754, %v2842
  %2844 = vmatmul.bf16.gmra.mxu0 %v797
  %v2845 = vpop.f32.mrf.mxu0
  %v2846 = vadd.f32 %v2757, %v2845
  %v2847 = vpop.f32.mrf.mxu0
  %v2848 = vadd.f32 %v2759, %v2847
  %2849 = vmatmul.bf16.gmra.mxu0 %v804
  %v2850 = vpop.f32.mrf.mxu0
  %v2851 = vadd.f32 %v2762, %v2850
  %v2852 = vpop.f32.mrf.mxu0
  %v2853 = vadd.f32 %v2764, %v2852
  %2854 = vmatmul.bf16.gmra.mxu0 %v811
  %v2855 = vpop.f32.mrf.mxu0
  %v2856 = vadd.f32 %v2767, %v2855
  %v2857 = vpop.f32.mrf.mxu0
  %v2858 = vadd.f32 %v2769, %v2857
  %2859 = vmatmul.bf16.gmra.mxu0 %v818
  %v2860 = vpop.f32.mrf.mxu0
  %v2861 = vadd.f32 %v2772, %v2860
  %v2862 = vpop.f32.mrf.mxu0
  %v2863 = vadd.f32 %v2774, %v2862
  %2864 = vmatmul.bf16.gmra.mxu0 %v825
  %v2865 = vpop.f32.mrf.mxu0
  %v2866 = vadd.f32 %v2777, %v2865
  %v2867 = vpop.f32.mrf.mxu0
  %v2868 = vadd.f32 %v2779, %v2867
  %2869 = vmatmul.bf16.gmra.mxu0 %v832
  %v2870 = vpop.f32.mrf.mxu0
  %v2871 = vadd.f32 %v2782, %v2870
  %v2872 = vpop.f32.mrf.mxu0
  %v2873 = vadd.f32 %v2784, %v2872
  %2874 = vmatmul.bf16.gmra.mxu0 %v839
  %v2875 = vpop.f32.mrf.mxu0
  %v2876 = vadd.f32 %v2787, %v2875
  %v2877 = vpop.f32.mrf.mxu0
  %v2878 = vadd.f32 %v2789, %v2877
  %2879 = vmatmul.bf16.gmra.mxu0 %v846
  %v2880 = vpop.f32.mrf.mxu0
  %v2881 = vadd.f32 %v2792, %v2880
  %v2882 = vpop.f32.mrf.mxu0
  %v2883 = vadd.f32 %v2794, %v2882
  %2884 = vdwg.mxu0
  %2885 = vmatpush.bf16.msra.mxu0 %v1729
  %2886 = vmatpush.bf16.msra.mxu0 %v1725
  %2887 = vmatpush.bf16.msra.mxu0 %v1721
  %2888 = vmatpush.bf16.msra.mxu0 %v1717
  %2889 = vmatpush.bf16.msra.mxu0 %v1713
  %2890 = vmatpush.bf16.msra.mxu0 %v1709
  %2891 = vmatpush.bf16.msra.mxu0 %v1705
  %2892 = vmatpush.bf16.msra.mxu0 %v1701
  %2893 = vmatmul.bf16.gmra.mxu0 %v742
  %v2894 = vpop.f32.mrf.mxu0
  %v2895 = vadd.f32 %v2806, %v2894
  %v2896 = vpop.f32.mrf.mxu0
  %v2897 = vadd.f32 %v2808, %v2896
  %2898 = vmatmul.bf16.gmra.mxu0 %v749
  %v2899 = vpop.f32.mrf.mxu0
  %v2900 = vadd.f32 %v2811, %v2899
  %v2901 = vpop.f32.mrf.mxu0
  %v2902 = vadd.f32 %v2813, %v2901
  %2903 = vmatmul.bf16.gmra.mxu0 %v756
  %v2904 = vpop.f32.mrf.mxu0
  %v2905 = vadd.f32 %v2816, %v2904
  %v2906 = vpop.f32.mrf.mxu0
  %v2907 = vadd.f32 %v2818, %v2906
  %2908 = vmatmul.bf16.gmra.mxu0 %v763
  %v2909 = vpop.f32.mrf.mxu0
  %v2910 = vadd.f32 %v2821, %v2909
  %v2911 = vpop.f32.mrf.mxu0
  %v2912 = vadd.f32 %v2823, %v2911
  %2913 = vmatmul.bf16.gmra.mxu0 %v770
  %v2914 = vpop.f32.mrf.mxu0
  %v2915 = vadd.f32 %v2826, %v2914
  %v2916 = vpop.f32.mrf.mxu0
  %v2917 = vadd.f32 %v2828, %v2916
  %2918 = vmatmul.bf16.gmra.mxu0 %v777
  %v2919 = vpop.f32.mrf.mxu0
  %v2920 = vadd.f32 %v2831, %v2919
  %v2921 = vpop.f32.mrf.mxu0
  %v2922 = vadd.f32 %v2833, %v2921
  %2923 = vmatmul.bf16.gmra.mxu0 %v784
  %v2924 = vpop.f32.mrf.mxu0
  %v2925 = vadd.f32 %v2836, %v2924
  %v2926 = vpop.f32.mrf.mxu0
  %v2927 = vadd.f32 %v2838, %v2926
  %2928 = vmatmul.bf16.gmra.mxu0 %v791
  %v2929 = vpop.f32.mrf.mxu0
  %v2930 = vadd.f32 %v2841, %v2929
  %v2931 = vpop.f32.mrf.mxu0
  %v2932 = vadd.f32 %v2843, %v2931
  %2933 = vmatmul.bf16.gmra.mxu0 %v798
  %v2934 = vpop.f32.mrf.mxu0
  %v2935 = vadd.f32 %v2846, %v2934
  %v2936 = vpop.f32.mrf.mxu0
  %v2937 = vadd.f32 %v2848, %v2936
  %2938 = vmatmul.bf16.gmra.mxu0 %v805
  %v2939 = vpop.f32.mrf.mxu0
  %v2940 = vadd.f32 %v2851, %v2939
  %v2941 = vpop.f32.mrf.mxu0
  %v2942 = vadd.f32 %v2853, %v2941
  %2943 = vmatmul.bf16.gmra.mxu0 %v812
  %v2944 = vpop.f32.mrf.mxu0
  %v2945 = vadd.f32 %v2856, %v2944
  %v2946 = vpop.f32.mrf.mxu0
  %v2947 = vadd.f32 %v2858, %v2946
  %2948 = vmatmul.bf16.gmra.mxu0 %v819
  %v2949 = vpop.f32.mrf.mxu0
  %v2950 = vadd.f32 %v2861, %v2949
  %v2951 = vpop.f32.mrf.mxu0
  %v2952 = vadd.f32 %v2863, %v2951
  %2953 = vmatmul.bf16.gmra.mxu0 %v826
  %v2954 = vpop.f32.mrf.mxu0
  %v2955 = vadd.f32 %v2866, %v2954
  %v2956 = vpop.f32.mrf.mxu0
  %v2957 = vadd.f32 %v2868, %v2956
  %2958 = vmatmul.bf16.gmra.mxu0 %v833
  %v2959 = vpop.f32.mrf.mxu0
  %v2960 = vadd.f32 %v2871, %v2959
  %v2961 = vpop.f32.mrf.mxu0
  %v2962 = vadd.f32 %v2873, %v2961
  %2963 = vmatmul.bf16.gmra.mxu0 %v840
  %v2964 = vpop.f32.mrf.mxu0
  %v2965 = vadd.f32 %v2876, %v2964
  %v2966 = vpop.f32.mrf.mxu0
  %v2967 = vadd.f32 %v2878, %v2966
  %2968 = vmatmul.bf16.gmra.mxu0 %v847
  %v2969 = vpop.f32.mrf.mxu0
  %v2970 = vadd.f32 %v2881, %v2969
  %v2971 = vpop.f32.mrf.mxu0
  %v2972 = vadd.f32 %v2883, %v2971
  %2973 = vdwg.mxu0
  %2974 = vmatpush.bf16.msra.mxu0 %v1761
  %2975 = vmatpush.bf16.msra.mxu0 %v1757
  %2976 = vmatpush.bf16.msra.mxu0 %v1753
  %2977 = vmatpush.bf16.msra.mxu0 %v1749
  %2978 = vmatpush.bf16.msra.mxu0 %v1745
  %2979 = vmatpush.bf16.msra.mxu0 %v1741
  %2980 = vmatpush.bf16.msra.mxu0 %v1737
  %2981 = vmatpush.bf16.msra.mxu0 %v1733
  %2982 = vmatmul.bf16.gmra.mxu0 %v743
  %v2983 = vpop.f32.mrf.mxu0
  %v2984 = vadd.f32 %v2895, %v2983
  %v2985 = vpop.f32.mrf.mxu0
  %v2986 = vadd.f32 %v2897, %v2985
  %2987 = vmatmul.bf16.gmra.mxu0 %v750
  %v2988 = vpop.f32.mrf.mxu0
  %v2989 = vadd.f32 %v2900, %v2988
  %v2990 = vpop.f32.mrf.mxu0
  %v2991 = vadd.f32 %v2902, %v2990
  %2992 = vmatmul.bf16.gmra.mxu0 %v757
  %v2993 = vpop.f32.mrf.mxu0
  %v2994 = vadd.f32 %v2905, %v2993
  %v2995 = vpop.f32.mrf.mxu0
  %v2996 = vadd.f32 %v2907, %v2995
  %2997 = vmatmul.bf16.gmra.mxu0 %v764
  %v2998 = vpop.f32.mrf.mxu0
  %v2999 = vadd.f32 %v2910, %v2998
  %v3000 = vpop.f32.mrf.mxu0
  %v3001 = vadd.f32 %v2912, %v3000
  %3002 = vmatmul.bf16.gmra.mxu0 %v771
  %v3003 = vpop.f32.mrf.mxu0
  %v3004 = vadd.f32 %v2915, %v3003
  %v3005 = vpop.f32.mrf.mxu0
  %v3006 = vadd.f32 %v2917, %v3005
  %3007 = vmatmul.bf16.gmra.mxu0 %v778
  %v3008 = vpop.f32.mrf.mxu0
  %v3009 = vadd.f32 %v2920, %v3008
  %v3010 = vpop.f32.mrf.mxu0
  %v3011 = vadd.f32 %v2922, %v3010
  %3012 = vmatmul.bf16.gmra.mxu0 %v785
  %v3013 = vpop.f32.mrf.mxu0
  %v3014 = vadd.f32 %v2925, %v3013
  %v3015 = vpop.f32.mrf.mxu0
  %v3016 = vadd.f32 %v2927, %v3015
  %3017 = vmatmul.bf16.gmra.mxu0 %v792
  %v3018 = vpop.f32.mrf.mxu0
  %v3019 = vadd.f32 %v2930, %v3018
  %v3020 = vpop.f32.mrf.mxu0
  %v3021 = vadd.f32 %v2932, %v3020
  %3022 = vmatmul.bf16.gmra.mxu0 %v799
  %v3023 = vpop.f32.mrf.mxu0
  %v3024 = vadd.f32 %v2935, %v3023
  %v3025 = vpop.f32.mrf.mxu0
  %v3026 = vadd.f32 %v2937, %v3025
  %3027 = vmatmul.bf16.gmra.mxu0 %v806
  %v3028 = vpop.f32.mrf.mxu0
  %v3029 = vadd.f32 %v2940, %v3028
  %v3030 = vpop.f32.mrf.mxu0
  %v3031 = vadd.f32 %v2942, %v3030
  %3032 = vmatmul.bf16.gmra.mxu0 %v813
  %v3033 = vpop.f32.mrf.mxu0
  %v3034 = vadd.f32 %v2945, %v3033
  %v3035 = vpop.f32.mrf.mxu0
  %v3036 = vadd.f32 %v2947, %v3035
  %3037 = vmatmul.bf16.gmra.mxu0 %v820
  %v3038 = vpop.f32.mrf.mxu0
  %v3039 = vadd.f32 %v2950, %v3038
  %v3040 = vpop.f32.mrf.mxu0
  %v3041 = vadd.f32 %v2952, %v3040
  %3042 = vmatmul.bf16.gmra.mxu0 %v827
  %v3043 = vpop.f32.mrf.mxu0
  %v3044 = vadd.f32 %v2955, %v3043
  %v3045 = vpop.f32.mrf.mxu0
  %v3046 = vadd.f32 %v2957, %v3045
  %3047 = vmatmul.bf16.gmra.mxu0 %v834
  %v3048 = vpop.f32.mrf.mxu0
  %v3049 = vadd.f32 %v2960, %v3048
  %v3050 = vpop.f32.mrf.mxu0
  %v3051 = vadd.f32 %v2962, %v3050
  %3052 = vmatmul.bf16.gmra.mxu0 %v841
  %v3053 = vpop.f32.mrf.mxu0
  %v3054 = vadd.f32 %v2965, %v3053
  %v3055 = vpop.f32.mrf.mxu0
  %v3056 = vadd.f32 %v2967, %v3055
  %3057 = vmatmul.bf16.gmra.mxu0 %v848
  %v3058 = vpop.f32.mrf.mxu0
  %v3059 = vadd.f32 %v2970, %v3058
  %v3060 = vpop.f32.mrf.mxu0
  %v3061 = vadd.f32 %v2972, %v3060
  %3062 = vdwg.mxu0
  %3063 = vmatpush.bf16.msra.mxu0 %v1793
  %3064 = vmatpush.bf16.msra.mxu0 %v1789
  %3065 = vmatpush.bf16.msra.mxu0 %v1785
  %3066 = vmatpush.bf16.msra.mxu0 %v1781
  %3067 = vmatpush.bf16.msra.mxu0 %v1777
  %3068 = vmatpush.bf16.msra.mxu0 %v1773
  %3069 = vmatpush.bf16.msra.mxu0 %v1769
  %3070 = vmatpush.bf16.msra.mxu0 %v1765
  %3071 = vmatmul.bf16.gmra.mxu0 %v744
  %v3072 = vpop.f32.mrf.mxu0
  %v3073 = vadd.f32 %v2984, %v3072
  %v3074 = vpop.f32.mrf.mxu0
  %v3075 = vadd.f32 %v2986, %v3074
  %3076 = vmatmul.bf16.gmra.mxu0 %v751
  %v3077 = vpop.f32.mrf.mxu0
  %v3078 = vadd.f32 %v2989, %v3077
  %v3079 = vpop.f32.mrf.mxu0
  %v3080 = vadd.f32 %v2991, %v3079
  %3081 = vmatmul.bf16.gmra.mxu0 %v758
  %v3082 = vpop.f32.mrf.mxu0
  %v3083 = vadd.f32 %v2994, %v3082
  %v3084 = vpop.f32.mrf.mxu0
  %v3085 = vadd.f32 %v2996, %v3084
  %3086 = vmatmul.bf16.gmra.mxu0 %v765
  %v3087 = vpop.f32.mrf.mxu0
  %v3088 = vadd.f32 %v2999, %v3087
  %v3089 = vpop.f32.mrf.mxu0
  %v3090 = vadd.f32 %v3001, %v3089
  %3091 = vmatmul.bf16.gmra.mxu0 %v772
  %v3092 = vpop.f32.mrf.mxu0
  %v3093 = vadd.f32 %v3004, %v3092
  %v3094 = vpop.f32.mrf.mxu0
  %v3095 = vadd.f32 %v3006, %v3094
  %3096 = vmatmul.bf16.gmra.mxu0 %v779
  %v3097 = vpop.f32.mrf.mxu0
  %v3098 = vadd.f32 %v3009, %v3097
  %v3099 = vpop.f32.mrf.mxu0
  %v3100 = vadd.f32 %v3011, %v3099
  %3101 = vmatmul.bf16.gmra.mxu0 %v786
  %v3102 = vpop.f32.mrf.mxu0
  %v3103 = vadd.f32 %v3014, %v3102
  %v3104 = vpop.f32.mrf.mxu0
  %v3105 = vadd.f32 %v3016, %v3104
  %3106 = vmatmul.bf16.gmra.mxu0 %v793
  %v3107 = vpop.f32.mrf.mxu0
  %v3108 = vadd.f32 %v3019, %v3107
  %v3109 = vpop.f32.mrf.mxu0
  %v3110 = vadd.f32 %v3021, %v3109
  %3111 = vmatmul.bf16.gmra.mxu0 %v800
  %v3112 = vpop.f32.mrf.mxu0
  %v3113 = vadd.f32 %v3024, %v3112
  %v3114 = vpop.f32.mrf.mxu0
  %v3115 = vadd.f32 %v3026, %v3114
  %3116 = vmatmul.bf16.gmra.mxu0 %v807
  %v3117 = vpop.f32.mrf.mxu0
  %v3118 = vadd.f32 %v3029, %v3117
  %v3119 = vpop.f32.mrf.mxu0
  %v3120 = vadd.f32 %v3031, %v3119
  %3121 = vmatmul.bf16.gmra.mxu0 %v814
  %v3122 = vpop.f32.mrf.mxu0
  %v3123 = vadd.f32 %v3034, %v3122
  %v3124 = vpop.f32.mrf.mxu0
  %v3125 = vadd.f32 %v3036, %v3124
  %3126 = vmatmul.bf16.gmra.mxu0 %v821
  %v3127 = vpop.f32.mrf.mxu0
  %v3128 = vadd.f32 %v3039, %v3127
  %v3129 = vpop.f32.mrf.mxu0
  %v3130 = vadd.f32 %v3041, %v3129
  %3131 = vmatmul.bf16.gmra.mxu0 %v828
  %v3132 = vpop.f32.mrf.mxu0
  %v3133 = vadd.f32 %v3044, %v3132
  %v3134 = vpop.f32.mrf.mxu0
  %v3135 = vadd.f32 %v3046, %v3134
  %3136 = vmatmul.bf16.gmra.mxu0 %v835
  %v3137 = vpop.f32.mrf.mxu0
  %v3138 = vadd.f32 %v3049, %v3137
  %v3139 = vpop.f32.mrf.mxu0
  %v3140 = vadd.f32 %v3051, %v3139
  %3141 = vmatmul.bf16.gmra.mxu0 %v842
  %v3142 = vpop.f32.mrf.mxu0
  %v3143 = vadd.f32 %v3054, %v3142
  %v3144 = vpop.f32.mrf.mxu0
  %v3145 = vadd.f32 %v3056, %v3144
  %3146 = vmatmul.bf16.gmra.mxu0 %v849
  %v3147 = vpop.f32.mrf.mxu0
  %v3148 = vadd.f32 %v3059, %v3147
  %v3149 = vpop.f32.mrf.mxu0
  %v3150 = vadd.f32 %v3061, %v3149
  %3151 = vdwg.mxu0
  %3152 = vmatpush.bf16.msra.mxu0 %v1825
  %3153 = vmatpush.bf16.msra.mxu0 %v1821
  %3154 = vmatpush.bf16.msra.mxu0 %v1817
  %3155 = vmatpush.bf16.msra.mxu0 %v1813
  %3156 = vmatpush.bf16.msra.mxu0 %v1809
  %3157 = vmatpush.bf16.msra.mxu0 %v1805
  %3158 = vmatpush.bf16.msra.mxu0 %v1801
  %3159 = vmatpush.bf16.msra.mxu0 %v1797
  %3160 = vmatmul.bf16.gmra.mxu0 %v745
  %v3161 = vpop.f32.mrf.mxu0
  %v3162 = vadd.f32 %v3073, %v3161
  %v3163 = vpop.f32.mrf.mxu0
  %v3164 = vadd.f32 %v3075, %v3163
  %3165 = vmatmul.bf16.gmra.mxu0 %v752
  %v3166 = vpop.f32.mrf.mxu0
  %v3167 = vadd.f32 %v3078, %v3166
  %v3168 = vpop.f32.mrf.mxu0
  %v3169 = vadd.f32 %v3080, %v3168
  %3170 = vmatmul.bf16.gmra.mxu0 %v759
  %v3171 = vpop.f32.mrf.mxu0
  %v3172 = vadd.f32 %v3083, %v3171
  %v3173 = vpop.f32.mrf.mxu0
  %v3174 = vadd.f32 %v3085, %v3173
  %3175 = vmatmul.bf16.gmra.mxu0 %v766
  %v3176 = vpop.f32.mrf.mxu0
  %v3177 = vadd.f32 %v3088, %v3176
  %v3178 = vpop.f32.mrf.mxu0
  %v3179 = vadd.f32 %v3090, %v3178
  %3180 = vmatmul.bf16.gmra.mxu0 %v773
  %v3181 = vpop.f32.mrf.mxu0
  %v3182 = vadd.f32 %v3093, %v3181
  %v3183 = vpop.f32.mrf.mxu0
  %v3184 = vadd.f32 %v3095, %v3183
  %3185 = vmatmul.bf16.gmra.mxu0 %v780
  %v3186 = vpop.f32.mrf.mxu0
  %v3187 = vadd.f32 %v3098, %v3186
  %v3188 = vpop.f32.mrf.mxu0
  %v3189 = vadd.f32 %v3100, %v3188
  %3190 = vmatmul.bf16.gmra.mxu0 %v787
  %v3191 = vpop.f32.mrf.mxu0
  %v3192 = vadd.f32 %v3103, %v3191
  %v3193 = vpop.f32.mrf.mxu0
  %v3194 = vadd.f32 %v3105, %v3193
  %3195 = vmatmul.bf16.gmra.mxu0 %v794
  %v3196 = vpop.f32.mrf.mxu0
  %v3197 = vadd.f32 %v3108, %v3196
  %v3198 = vpop.f32.mrf.mxu0
  %v3199 = vadd.f32 %v3110, %v3198
  %3200 = vmatmul.bf16.gmra.mxu0 %v801
  %v3201 = vpop.f32.mrf.mxu0
  %v3202 = vadd.f32 %v3113, %v3201
  %v3203 = vpop.f32.mrf.mxu0
  %v3204 = vadd.f32 %v3115, %v3203
  %3205 = vmatmul.bf16.gmra.mxu0 %v808
  %v3206 = vpop.f32.mrf.mxu0
  %v3207 = vadd.f32 %v3118, %v3206
  %v3208 = vpop.f32.mrf.mxu0
  %v3209 = vadd.f32 %v3120, %v3208
  %3210 = vmatmul.bf16.gmra.mxu0 %v815
  %v3211 = vpop.f32.mrf.mxu0
  %v3212 = vadd.f32 %v3123, %v3211
  %v3213 = vpop.f32.mrf.mxu0
  %v3214 = vadd.f32 %v3125, %v3213
  %3215 = vmatmul.bf16.gmra.mxu0 %v822
  %v3216 = vpop.f32.mrf.mxu0
  %v3217 = vadd.f32 %v3128, %v3216
  %v3218 = vpop.f32.mrf.mxu0
  %v3219 = vadd.f32 %v3130, %v3218
  %3220 = vmatmul.bf16.gmra.mxu0 %v829
  %v3221 = vpop.f32.mrf.mxu0
  %v3222 = vadd.f32 %v3133, %v3221
  %v3223 = vpop.f32.mrf.mxu0
  %v3224 = vadd.f32 %v3135, %v3223
  %3225 = vmatmul.bf16.gmra.mxu0 %v836
  %v3226 = vpop.f32.mrf.mxu0
  %v3227 = vadd.f32 %v3138, %v3226
  %v3228 = vpop.f32.mrf.mxu0
  %v3229 = vadd.f32 %v3140, %v3228
  %3230 = vmatmul.bf16.gmra.mxu0 %v843
  %v3231 = vpop.f32.mrf.mxu0
  %v3232 = vadd.f32 %v3143, %v3231
  %v3233 = vpop.f32.mrf.mxu0
  %v3234 = vadd.f32 %v3145, %v3233
  %3235 = vmatmul.bf16.gmra.mxu0 %v850
  %v3236 = vpop.f32.mrf.mxu0
  %v3237 = vadd.f32 %v3148, %v3236
  %v3238 = vpop.f32.mrf.mxu0
  %v3239 = vadd.f32 %v3150, %v3238
  %3240 = vdwg.mxu0
  %3241 = vmatpush.bf16.msra.mxu0 %v1857
  %3242 = vmatpush.bf16.msra.mxu0 %v1853
  %3243 = vmatpush.bf16.msra.mxu0 %v1849
  %3244 = vmatpush.bf16.msra.mxu0 %v1845
  %3245 = vmatpush.bf16.msra.mxu0 %v1841
  %3246 = vmatpush.bf16.msra.mxu0 %v1837
  %3247 = vmatpush.bf16.msra.mxu0 %v1833
  %3248 = vmatpush.bf16.msra.mxu0 %v1829
  %3249 = vmatmul.bf16.gmra.mxu0 %v746
  %v3250 = vpop.f32.mrf.mxu0
  %v3251 = vadd.f32 %v3162, %v3250
  %v3252 = vpop.f32.mrf.mxu0
  %v3253 = vadd.f32 %v3164, %v3252
  %3254 = vmatmul.bf16.gmra.mxu0 %v753
  %v3255 = vpop.f32.mrf.mxu0
  %v3256 = vadd.f32 %v3167, %v3255
  %v3257 = vpop.f32.mrf.mxu0
  %v3258 = vadd.f32 %v3169, %v3257
  %3259 = vmatmul.bf16.gmra.mxu0 %v760
  %v3260 = vpop.f32.mrf.mxu0
  %v3261 = vadd.f32 %v3172, %v3260
  %v3262 = vpop.f32.mrf.mxu0
  %v3263 = vadd.f32 %v3174, %v3262
  %3264 = vmatmul.bf16.gmra.mxu0 %v767
  %v3265 = vpop.f32.mrf.mxu0
  %v3266 = vadd.f32 %v3177, %v3265
  %v3267 = vpop.f32.mrf.mxu0
  %v3268 = vadd.f32 %v3179, %v3267
  %3269 = vmatmul.bf16.gmra.mxu0 %v774
  %v3270 = vpop.f32.mrf.mxu0
  %v3271 = vadd.f32 %v3182, %v3270
  %v3272 = vpop.f32.mrf.mxu0
  %v3273 = vadd.f32 %v3184, %v3272
  %3274 = vmatmul.bf16.gmra.mxu0 %v781
  %v3275 = vpop.f32.mrf.mxu0
  %v3276 = vadd.f32 %v3187, %v3275
  %v3277 = vpop.f32.mrf.mxu0
  %v3278 = vadd.f32 %v3189, %v3277
  %3279 = vmatmul.bf16.gmra.mxu0 %v788
  %v3280 = vpop.f32.mrf.mxu0
  %v3281 = vadd.f32 %v3192, %v3280
  %v3282 = vpop.f32.mrf.mxu0
  %v3283 = vadd.f32 %v3194, %v3282
  %3284 = vmatmul.bf16.gmra.mxu0 %v795
  %v3285 = vpop.f32.mrf.mxu0
  %v3286 = vadd.f32 %v3197, %v3285
  %v3287 = vpop.f32.mrf.mxu0
  %v3288 = vadd.f32 %v3199, %v3287
  %3289 = vmatmul.bf16.gmra.mxu0 %v802
  %v3290 = vpop.f32.mrf.mxu0
  %v3291 = vadd.f32 %v3202, %v3290
  %v3292 = vpop.f32.mrf.mxu0
  %v3293 = vadd.f32 %v3204, %v3292
  %3294 = vmatmul.bf16.gmra.mxu0 %v809
  %v3295 = vpop.f32.mrf.mxu0
  %v3296 = vadd.f32 %v3207, %v3295
  %v3297 = vpop.f32.mrf.mxu0
  %v3298 = vadd.f32 %v3209, %v3297
  %3299 = vmatmul.bf16.gmra.mxu0 %v816
  %v3300 = vpop.f32.mrf.mxu0
  %v3301 = vadd.f32 %v3212, %v3300
  %v3302 = vpop.f32.mrf.mxu0
  %v3303 = vadd.f32 %v3214, %v3302
  %3304 = vmatmul.bf16.gmra.mxu0 %v823
  %v3305 = vpop.f32.mrf.mxu0
  %v3306 = vadd.f32 %v3217, %v3305
  %v3307 = vpop.f32.mrf.mxu0
  %v3308 = vadd.f32 %v3219, %v3307
  %3309 = vmatmul.bf16.gmra.mxu0 %v830
  %v3310 = vpop.f32.mrf.mxu0
  %v3311 = vadd.f32 %v3222, %v3310
  %v3312 = vpop.f32.mrf.mxu0
  %v3313 = vadd.f32 %v3224, %v3312
  %3314 = vmatmul.bf16.gmra.mxu0 %v837
  %v3315 = vpop.f32.mrf.mxu0
  %v3316 = vadd.f32 %v3227, %v3315
  %v3317 = vpop.f32.mrf.mxu0
  %v3318 = vadd.f32 %v3229, %v3317
  %3319 = vmatmul.bf16.gmra.mxu0 %v844
  %v3320 = vpop.f32.mrf.mxu0
  %v3321 = vadd.f32 %v3232, %v3320
  %v3322 = vpop.f32.mrf.mxu0
  %v3323 = vadd.f32 %v3234, %v3322
  %3324 = vmatmul.bf16.gmra.mxu0 %v851
  %v3325 = vpop.f32.mrf.mxu0
  %v3326 = vadd.f32 %v3237, %v3325
  %v3327 = vpop.f32.mrf.mxu0
  %v3328 = vadd.f32 %v3239, %v3327
  %3329 = vdwg.mxu0
  %3330 = vmatpush.bf16.msra.mxu0 %v1666
  %3331 = vmatpush.bf16.msra.mxu0 %v1662
  %3332 = vmatpush.bf16.msra.mxu0 %v1658
  %3333 = vmatpush.bf16.msra.mxu0 %v1654
  %3334 = vmatpush.bf16.msra.mxu0 %v1650
  %3335 = vmatpush.bf16.msra.mxu0 %v1646
  %3336 = vmatpush.bf16.msra.mxu0 %v1642
  %3337 = vmatpush.bf16.msra.mxu0 %v1638
  %3338 = vmatmul.bf16.gmra.mxu0 %v740
  %v3339 = vpop.f32.mrf.mxu0
  %v3340 = vadd.f32 %v382, %v3339
  %v3341 = vpop.f32.mrf.mxu0
  %v3342 = vadd.f32 %v382, %v3341
  %3343 = vmatmul.bf16.gmra.mxu0 %v747
  %v3344 = vpop.f32.mrf.mxu0
  %v3345 = vadd.f32 %v382, %v3344
  %v3346 = vpop.f32.mrf.mxu0
  %v3347 = vadd.f32 %v382, %v3346
  %3348 = vmatmul.bf16.gmra.mxu0 %v754
  %v3349 = vpop.f32.mrf.mxu0
  %v3350 = vadd.f32 %v382, %v3349
  %v3351 = vpop.f32.mrf.mxu0
  %v3352 = vadd.f32 %v382, %v3351
  %3353 = vmatmul.bf16.gmra.mxu0 %v761
  %v3354 = vpop.f32.mrf.mxu0
  %v3355 = vadd.f32 %v382, %v3354
  %v3356 = vpop.f32.mrf.mxu0
  %v3357 = vadd.f32 %v382, %v3356
  %3358 = vmatmul.bf16.gmra.mxu0 %v768
  %v3359 = vpop.f32.mrf.mxu0
  %v3360 = vadd.f32 %v382, %v3359
  %v3361 = vpop.f32.mrf.mxu0
  %v3362 = vadd.f32 %v382, %v3361
  %3363 = vmatmul.bf16.gmra.mxu0 %v775
  %v3364 = vpop.f32.mrf.mxu0
  %v3365 = vadd.f32 %v382, %v3364
  %v3366 = vpop.f32.mrf.mxu0
  %v3367 = vadd.f32 %v382, %v3366
  %3368 = vmatmul.bf16.gmra.mxu0 %v782
  %v3369 = vpop.f32.mrf.mxu0
  %v3370 = vadd.f32 %v382, %v3369
  %v3371 = vpop.f32.mrf.mxu0
  %v3372 = vadd.f32 %v382, %v3371
  %3373 = vmatmul.bf16.gmra.mxu0 %v789
  %v3374 = vpop.f32.mrf.mxu0
  %v3375 = vadd.f32 %v382, %v3374
  %v3376 = vpop.f32.mrf.mxu0
  %v3377 = vadd.f32 %v382, %v3376
  %3378 = vmatmul.bf16.gmra.mxu0 %v796
  %v3379 = vpop.f32.mrf.mxu0
  %v3380 = vadd.f32 %v382, %v3379
  %v3381 = vpop.f32.mrf.mxu0
  %v3382 = vadd.f32 %v382, %v3381
  %3383 = vmatmul.bf16.gmra.mxu0 %v803
  %v3384 = vpop.f32.mrf.mxu0
  %v3385 = vadd.f32 %v382, %v3384
  %v3386 = vpop.f32.mrf.mxu0
  %v3387 = vadd.f32 %v382, %v3386
  %3388 = vmatmul.bf16.gmra.mxu0 %v810
  %v3389 = vpop.f32.mrf.mxu0
  %v3390 = vadd.f32 %v382, %v3389
  %v3391 = vpop.f32.mrf.mxu0
  %v3392 = vadd.f32 %v382, %v3391
  %3393 = vmatmul.bf16.gmra.mxu0 %v817
  %v3394 = vpop.f32.mrf.mxu0
  %v3395 = vadd.f32 %v382, %v3394
  %v3396 = vpop.f32.mrf.mxu0
  %v3397 = vadd.f32 %v382, %v3396
  %3398 = vmatmul.bf16.gmra.mxu0 %v824
  %v3399 = vpop.f32.mrf.mxu0
  %v3400 = vadd.f32 %v382, %v3399
  %v3401 = vpop.f32.mrf.mxu0
  %v3402 = vadd.f32 %v382, %v3401
  %3403 = vmatmul.bf16.gmra.mxu0 %v831
  %v3404 = vpop.f32.mrf.mxu0
  %v3405 = vadd.f32 %v382, %v3404
  %v3406 = vpop.f32.mrf.mxu0
  %v3407 = vadd.f32 %v382, %v3406
  %3408 = vmatmul.bf16.gmra.mxu0 %v838
  %v3409 = vpop.f32.mrf.mxu0
  %v3410 = vadd.f32 %v382, %v3409
  %v3411 = vpop.f32.mrf.mxu0
  %v3412 = vadd.f32 %v382, %v3411
  %3413 = vmatmul.bf16.gmra.mxu0 %v845
  %v3414 = vpop.f32.mrf.mxu0
  %v3415 = vadd.f32 %v382, %v3414
  %v3416 = vpop.f32.mrf.mxu0
  %v3417 = vadd.f32 %v382, %v3416
  %3418 = vdwg.mxu0
  %3419 = vmatpush.bf16.msra.mxu0 %v1698
  %3420 = vmatpush.bf16.msra.mxu0 %v1694
  %3421 = vmatpush.bf16.msra.mxu0 %v1690
  %3422 = vmatpush.bf16.msra.mxu0 %v1686
  %3423 = vmatpush.bf16.msra.mxu0 %v1682
  %3424 = vmatpush.bf16.msra.mxu0 %v1678
  %3425 = vmatpush.bf16.msra.mxu0 %v1674
  %3426 = vmatpush.bf16.msra.mxu0 %v1670
  %3427 = vmatmul.bf16.gmra.mxu0 %v741
  %v3428 = vpop.f32.mrf.mxu0
  %v3429 = vadd.f32 %v3340, %v3428
  %v3430 = vpop.f32.mrf.mxu0
  %v3431 = vadd.f32 %v3342, %v3430
  %3432 = vmatmul.bf16.gmra.mxu0 %v748
  %v3433 = vpop.f32.mrf.mxu0
  %v3434 = vadd.f32 %v3345, %v3433
  %v3435 = vpop.f32.mrf.mxu0
  %v3436 = vadd.f32 %v3347, %v3435
  %3437 = vmatmul.bf16.gmra.mxu0 %v755
  %v3438 = vpop.f32.mrf.mxu0
  %v3439 = vadd.f32 %v3350, %v3438
  %v3440 = vpop.f32.mrf.mxu0
  %v3441 = vadd.f32 %v3352, %v3440
  %3442 = vmatmul.bf16.gmra.mxu0 %v762
  %v3443 = vpop.f32.mrf.mxu0
  %v3444 = vadd.f32 %v3355, %v3443
  %v3445 = vpop.f32.mrf.mxu0
  %v3446 = vadd.f32 %v3357, %v3445
  %3447 = vmatmul.bf16.gmra.mxu0 %v769
  %v3448 = vpop.f32.mrf.mxu0
  %v3449 = vadd.f32 %v3360, %v3448
  %v3450 = vpop.f32.mrf.mxu0
  %v3451 = vadd.f32 %v3362, %v3450
  %3452 = vmatmul.bf16.gmra.mxu0 %v776
  %v3453 = vpop.f32.mrf.mxu0
  %v3454 = vadd.f32 %v3365, %v3453
  %v3455 = vpop.f32.mrf.mxu0
  %v3456 = vadd.f32 %v3367, %v3455
  %3457 = vmatmul.bf16.gmra.mxu0 %v783
  %v3458 = vpop.f32.mrf.mxu0
  %v3459 = vadd.f32 %v3370, %v3458
  %v3460 = vpop.f32.mrf.mxu0
  %v3461 = vadd.f32 %v3372, %v3460
  %3462 = vmatmul.bf16.gmra.mxu0 %v790
  %v3463 = vpop.f32.mrf.mxu0
  %v3464 = vadd.f32 %v3375, %v3463
  %v3465 = vpop.f32.mrf.mxu0
  %v3466 = vadd.f32 %v3377, %v3465
  %3467 = vmatmul.bf16.gmra.mxu0 %v797
  %v3468 = vpop.f32.mrf.mxu0
  %v3469 = vadd.f32 %v3380, %v3468
  %v3470 = vpop.f32.mrf.mxu0
  %v3471 = vadd.f32 %v3382, %v3470
  %3472 = vmatmul.bf16.gmra.mxu0 %v804
  %v3473 = vpop.f32.mrf.mxu0
  %v3474 = vadd.f32 %v3385, %v3473
  %v3475 = vpop.f32.mrf.mxu0
  %v3476 = vadd.f32 %v3387, %v3475
  %3477 = vmatmul.bf16.gmra.mxu0 %v811
  %v3478 = vpop.f32.mrf.mxu0
  %v3479 = vadd.f32 %v3390, %v3478
  %v3480 = vpop.f32.mrf.mxu0
  %v3481 = vadd.f32 %v3392, %v3480
  %3482 = vmatmul.bf16.gmra.mxu0 %v818
  %v3483 = vpop.f32.mrf.mxu0
  %v3484 = vadd.f32 %v3395, %v3483
  %v3485 = vpop.f32.mrf.mxu0
  %v3486 = vadd.f32 %v3397, %v3485
  %3487 = vmatmul.bf16.gmra.mxu0 %v825
  %v3488 = vpop.f32.mrf.mxu0
  %v3489 = vadd.f32 %v3400, %v3488
  %v3490 = vpop.f32.mrf.mxu0
  %v3491 = vadd.f32 %v3402, %v3490
  %3492 = vmatmul.bf16.gmra.mxu0 %v832
  %v3493 = vpop.f32.mrf.mxu0
  %v3494 = vadd.f32 %v3405, %v3493
  %v3495 = vpop.f32.mrf.mxu0
  %v3496 = vadd.f32 %v3407, %v3495
  %3497 = vmatmul.bf16.gmra.mxu0 %v839
  %v3498 = vpop.f32.mrf.mxu0
  %v3499 = vadd.f32 %v3410, %v3498
  %v3500 = vpop.f32.mrf.mxu0
  %v3501 = vadd.f32 %v3412, %v3500
  %3502 = vmatmul.bf16.gmra.mxu0 %v846
  %v3503 = vpop.f32.mrf.mxu0
  %v3504 = vadd.f32 %v3415, %v3503
  %v3505 = vpop.f32.mrf.mxu0
  %v3506 = vadd.f32 %v3417, %v3505
  %3507 = vdwg.mxu0
  %3508 = vmatpush.bf16.msra.mxu0 %v1730
  %3509 = vmatpush.bf16.msra.mxu0 %v1726
  %3510 = vmatpush.bf16.msra.mxu0 %v1722
  %3511 = vmatpush.bf16.msra.mxu0 %v1718
  %3512 = vmatpush.bf16.msra.mxu0 %v1714
  %3513 = vmatpush.bf16.msra.mxu0 %v1710
  %3514 = vmatpush.bf16.msra.mxu0 %v1706
  %3515 = vmatpush.bf16.msra.mxu0 %v1702
  %3516 = vmatmul.bf16.gmra.mxu0 %v742
  %v3517 = vpop.f32.mrf.mxu0
  %v3518 = vadd.f32 %v3429, %v3517
  %v3519 = vpop.f32.mrf.mxu0
  %v3520 = vadd.f32 %v3431, %v3519
  %3521 = vmatmul.bf16.gmra.mxu0 %v749
  %v3522 = vpop.f32.mrf.mxu0
  %v3523 = vadd.f32 %v3434, %v3522
  %v3524 = vpop.f32.mrf.mxu0
  %v3525 = vadd.f32 %v3436, %v3524
  %3526 = vmatmul.bf16.gmra.mxu0 %v756
  %v3527 = vpop.f32.mrf.mxu0
  %v3528 = vadd.f32 %v3439, %v3527
  %v3529 = vpop.f32.mrf.mxu0
  %v3530 = vadd.f32 %v3441, %v3529
  %3531 = vmatmul.bf16.gmra.mxu0 %v763
  %v3532 = vpop.f32.mrf.mxu0
  %v3533 = vadd.f32 %v3444, %v3532
  %v3534 = vpop.f32.mrf.mxu0
  %v3535 = vadd.f32 %v3446, %v3534
  %3536 = vmatmul.bf16.gmra.mxu0 %v770
  %v3537 = vpop.f32.mrf.mxu0
  %v3538 = vadd.f32 %v3449, %v3537
  %v3539 = vpop.f32.mrf.mxu0
  %v3540 = vadd.f32 %v3451, %v3539
  %3541 = vmatmul.bf16.gmra.mxu0 %v777
  %v3542 = vpop.f32.mrf.mxu0
  %v3543 = vadd.f32 %v3454, %v3542
  %v3544 = vpop.f32.mrf.mxu0
  %v3545 = vadd.f32 %v3456, %v3544
  %3546 = vmatmul.bf16.gmra.mxu0 %v784
  %v3547 = vpop.f32.mrf.mxu0
  %v3548 = vadd.f32 %v3459, %v3547
  %v3549 = vpop.f32.mrf.mxu0
  %v3550 = vadd.f32 %v3461, %v3549
  %3551 = vmatmul.bf16.gmra.mxu0 %v791
  %v3552 = vpop.f32.mrf.mxu0
  %v3553 = vadd.f32 %v3464, %v3552
  %v3554 = vpop.f32.mrf.mxu0
  %v3555 = vadd.f32 %v3466, %v3554
  %3556 = vmatmul.bf16.gmra.mxu0 %v798
  %v3557 = vpop.f32.mrf.mxu0
  %v3558 = vadd.f32 %v3469, %v3557
  %v3559 = vpop.f32.mrf.mxu0
  %v3560 = vadd.f32 %v3471, %v3559
  %3561 = vmatmul.bf16.gmra.mxu0 %v805
  %v3562 = vpop.f32.mrf.mxu0
  %v3563 = vadd.f32 %v3474, %v3562
  %v3564 = vpop.f32.mrf.mxu0
  %v3565 = vadd.f32 %v3476, %v3564
  %3566 = vmatmul.bf16.gmra.mxu0 %v812
  %v3567 = vpop.f32.mrf.mxu0
  %v3568 = vadd.f32 %v3479, %v3567
  %v3569 = vpop.f32.mrf.mxu0
  %v3570 = vadd.f32 %v3481, %v3569
  %3571 = vmatmul.bf16.gmra.mxu0 %v819
  %v3572 = vpop.f32.mrf.mxu0
  %v3573 = vadd.f32 %v3484, %v3572
  %v3574 = vpop.f32.mrf.mxu0
  %v3575 = vadd.f32 %v3486, %v3574
  %3576 = vmatmul.bf16.gmra.mxu0 %v826
  %v3577 = vpop.f32.mrf.mxu0
  %v3578 = vadd.f32 %v3489, %v3577
  %v3579 = vpop.f32.mrf.mxu0
  %v3580 = vadd.f32 %v3491, %v3579
  %3581 = vmatmul.bf16.gmra.mxu0 %v833
  %v3582 = vpop.f32.mrf.mxu0
  %v3583 = vadd.f32 %v3494, %v3582
  %v3584 = vpop.f32.mrf.mxu0
  %v3585 = vadd.f32 %v3496, %v3584
  %3586 = vmatmul.bf16.gmra.mxu0 %v840
  %v3587 = vpop.f32.mrf.mxu0
  %v3588 = vadd.f32 %v3499, %v3587
  %v3589 = vpop.f32.mrf.mxu0
  %v3590 = vadd.f32 %v3501, %v3589
  %3591 = vmatmul.bf16.gmra.mxu0 %v847
  %v3592 = vpop.f32.mrf.mxu0
  %v3593 = vadd.f32 %v3504, %v3592
  %v3594 = vpop.f32.mrf.mxu0
  %v3595 = vadd.f32 %v3506, %v3594
  %3596 = vdwg.mxu0
  %3597 = vmatpush.bf16.msra.mxu0 %v1762
  %3598 = vmatpush.bf16.msra.mxu0 %v1758
  %3599 = vmatpush.bf16.msra.mxu0 %v1754
  %3600 = vmatpush.bf16.msra.mxu0 %v1750
  %3601 = vmatpush.bf16.msra.mxu0 %v1746
  %3602 = vmatpush.bf16.msra.mxu0 %v1742
  %3603 = vmatpush.bf16.msra.mxu0 %v1738
  %3604 = vmatpush.bf16.msra.mxu0 %v1734
  %3605 = vmatmul.bf16.gmra.mxu0 %v743
  %v3606 = vpop.f32.mrf.mxu0
  %v3607 = vadd.f32 %v3518, %v3606
  %v3608 = vpop.f32.mrf.mxu0
  %v3609 = vadd.f32 %v3520, %v3608
  %3610 = vmatmul.bf16.gmra.mxu0 %v750
  %v3611 = vpop.f32.mrf.mxu0
  %v3612 = vadd.f32 %v3523, %v3611
  %v3613 = vpop.f32.mrf.mxu0
  %v3614 = vadd.f32 %v3525, %v3613
  %3615 = vmatmul.bf16.gmra.mxu0 %v757
  %v3616 = vpop.f32.mrf.mxu0
  %v3617 = vadd.f32 %v3528, %v3616
  %v3618 = vpop.f32.mrf.mxu0
  %v3619 = vadd.f32 %v3530, %v3618
  %3620 = vmatmul.bf16.gmra.mxu0 %v764
  %v3621 = vpop.f32.mrf.mxu0
  %v3622 = vadd.f32 %v3533, %v3621
  %v3623 = vpop.f32.mrf.mxu0
  %v3624 = vadd.f32 %v3535, %v3623
  %3625 = vmatmul.bf16.gmra.mxu0 %v771
  %v3626 = vpop.f32.mrf.mxu0
  %v3627 = vadd.f32 %v3538, %v3626
  %v3628 = vpop.f32.mrf.mxu0
  %v3629 = vadd.f32 %v3540, %v3628
  %3630 = vmatmul.bf16.gmra.mxu0 %v778
  %v3631 = vpop.f32.mrf.mxu0
  %v3632 = vadd.f32 %v3543, %v3631
  %v3633 = vpop.f32.mrf.mxu0
  %v3634 = vadd.f32 %v3545, %v3633
  %3635 = vmatmul.bf16.gmra.mxu0 %v785
  %v3636 = vpop.f32.mrf.mxu0
  %v3637 = vadd.f32 %v3548, %v3636
  %v3638 = vpop.f32.mrf.mxu0
  %v3639 = vadd.f32 %v3550, %v3638
  %3640 = vmatmul.bf16.gmra.mxu0 %v792
  %v3641 = vpop.f32.mrf.mxu0
  %v3642 = vadd.f32 %v3553, %v3641
  %v3643 = vpop.f32.mrf.mxu0
  %v3644 = vadd.f32 %v3555, %v3643
  %3645 = vmatmul.bf16.gmra.mxu0 %v799
  %v3646 = vpop.f32.mrf.mxu0
  %v3647 = vadd.f32 %v3558, %v3646
  %v3648 = vpop.f32.mrf.mxu0
  %v3649 = vadd.f32 %v3560, %v3648
  %3650 = vmatmul.bf16.gmra.mxu0 %v806
  %v3651 = vpop.f32.mrf.mxu0
  %v3652 = vadd.f32 %v3563, %v3651
  %v3653 = vpop.f32.mrf.mxu0
  %v3654 = vadd.f32 %v3565, %v3653
  %3655 = vmatmul.bf16.gmra.mxu0 %v813
  %v3656 = vpop.f32.mrf.mxu0
  %v3657 = vadd.f32 %v3568, %v3656
  %v3658 = vpop.f32.mrf.mxu0
  %v3659 = vadd.f32 %v3570, %v3658
  %3660 = vmatmul.bf16.gmra.mxu0 %v820
  %v3661 = vpop.f32.mrf.mxu0
  %v3662 = vadd.f32 %v3573, %v3661
  %v3663 = vpop.f32.mrf.mxu0
  %v3664 = vadd.f32 %v3575, %v3663
  %3665 = vmatmul.bf16.gmra.mxu0 %v827
  %v3666 = vpop.f32.mrf.mxu0
  %v3667 = vadd.f32 %v3578, %v3666
  %v3668 = vpop.f32.mrf.mxu0
  %v3669 = vadd.f32 %v3580, %v3668
  %3670 = vmatmul.bf16.gmra.mxu0 %v834
  %v3671 = vpop.f32.mrf.mxu0
  %v3672 = vadd.f32 %v3583, %v3671
  %v3673 = vpop.f32.mrf.mxu0
  %v3674 = vadd.f32 %v3585, %v3673
  %3675 = vmatmul.bf16.gmra.mxu0 %v841
  %v3676 = vpop.f32.mrf.mxu0
  %v3677 = vadd.f32 %v3588, %v3676
  %v3678 = vpop.f32.mrf.mxu0
  %v3679 = vadd.f32 %v3590, %v3678
  %3680 = vmatmul.bf16.gmra.mxu0 %v848
  %v3681 = vpop.f32.mrf.mxu0
  %v3682 = vadd.f32 %v3593, %v3681
  %v3683 = vpop.f32.mrf.mxu0
  %v3684 = vadd.f32 %v3595, %v3683
  %3685 = vdwg.mxu0
  %3686 = vmatpush.bf16.msra.mxu0 %v1794
  %3687 = vmatpush.bf16.msra.mxu0 %v1790
  %3688 = vmatpush.bf16.msra.mxu0 %v1786
  %3689 = vmatpush.bf16.msra.mxu0 %v1782
  %3690 = vmatpush.bf16.msra.mxu0 %v1778
  %3691 = vmatpush.bf16.msra.mxu0 %v1774
  %3692 = vmatpush.bf16.msra.mxu0 %v1770
  %3693 = vmatpush.bf16.msra.mxu0 %v1766
  %3694 = vmatmul.bf16.gmra.mxu0 %v744
  %v3695 = vpop.f32.mrf.mxu0
  %v3696 = vadd.f32 %v3607, %v3695
  %v3697 = vpop.f32.mrf.mxu0
  %v3698 = vadd.f32 %v3609, %v3697
  %3699 = vmatmul.bf16.gmra.mxu0 %v751
  %v3700 = vpop.f32.mrf.mxu0
  %v3701 = vadd.f32 %v3612, %v3700
  %v3702 = vpop.f32.mrf.mxu0
  %v3703 = vadd.f32 %v3614, %v3702
  %3704 = vmatmul.bf16.gmra.mxu0 %v758
  %v3705 = vpop.f32.mrf.mxu0
  %v3706 = vadd.f32 %v3617, %v3705
  %v3707 = vpop.f32.mrf.mxu0
  %v3708 = vadd.f32 %v3619, %v3707
  %3709 = vmatmul.bf16.gmra.mxu0 %v765
  %v3710 = vpop.f32.mrf.mxu0
  %v3711 = vadd.f32 %v3622, %v3710
  %v3712 = vpop.f32.mrf.mxu0
  %v3713 = vadd.f32 %v3624, %v3712
  %3714 = vmatmul.bf16.gmra.mxu0 %v772
  %v3715 = vpop.f32.mrf.mxu0
  %v3716 = vadd.f32 %v3627, %v3715
  %v3717 = vpop.f32.mrf.mxu0
  %v3718 = vadd.f32 %v3629, %v3717
  %3719 = vmatmul.bf16.gmra.mxu0 %v779
  %v3720 = vpop.f32.mrf.mxu0
  %v3721 = vadd.f32 %v3632, %v3720
  %v3722 = vpop.f32.mrf.mxu0
  %v3723 = vadd.f32 %v3634, %v3722
  %3724 = vmatmul.bf16.gmra.mxu0 %v786
  %v3725 = vpop.f32.mrf.mxu0
  %v3726 = vadd.f32 %v3637, %v3725
  %v3727 = vpop.f32.mrf.mxu0
  %v3728 = vadd.f32 %v3639, %v3727
  %3729 = vmatmul.bf16.gmra.mxu0 %v793
  %v3730 = vpop.f32.mrf.mxu0
  %v3731 = vadd.f32 %v3642, %v3730
  %v3732 = vpop.f32.mrf.mxu0
  %v3733 = vadd.f32 %v3644, %v3732
  %3734 = vmatmul.bf16.gmra.mxu0 %v800
  %v3735 = vpop.f32.mrf.mxu0
  %v3736 = vadd.f32 %v3647, %v3735
  %v3737 = vpop.f32.mrf.mxu0
  %v3738 = vadd.f32 %v3649, %v3737
  %3739 = vmatmul.bf16.gmra.mxu0 %v807
  %v3740 = vpop.f32.mrf.mxu0
  %v3741 = vadd.f32 %v3652, %v3740
  %v3742 = vpop.f32.mrf.mxu0
  %v3743 = vadd.f32 %v3654, %v3742
  %3744 = vmatmul.bf16.gmra.mxu0 %v814
  %v3745 = vpop.f32.mrf.mxu0
  %v3746 = vadd.f32 %v3657, %v3745
  %v3747 = vpop.f32.mrf.mxu0
  %v3748 = vadd.f32 %v3659, %v3747
  %3749 = vmatmul.bf16.gmra.mxu0 %v821
  %v3750 = vpop.f32.mrf.mxu0
  %v3751 = vadd.f32 %v3662, %v3750
  %v3752 = vpop.f32.mrf.mxu0
  %v3753 = vadd.f32 %v3664, %v3752
  %3754 = vmatmul.bf16.gmra.mxu0 %v828
  %v3755 = vpop.f32.mrf.mxu0
  %v3756 = vadd.f32 %v3667, %v3755
  %v3757 = vpop.f32.mrf.mxu0
  %v3758 = vadd.f32 %v3669, %v3757
  %3759 = vmatmul.bf16.gmra.mxu0 %v835
  %v3760 = vpop.f32.mrf.mxu0
  %v3761 = vadd.f32 %v3672, %v3760
  %v3762 = vpop.f32.mrf.mxu0
  %v3763 = vadd.f32 %v3674, %v3762
  %3764 = vmatmul.bf16.gmra.mxu0 %v842
  %v3765 = vpop.f32.mrf.mxu0
  %v3766 = vadd.f32 %v3677, %v3765
  %v3767 = vpop.f32.mrf.mxu0
  %v3768 = vadd.f32 %v3679, %v3767
  %3769 = vmatmul.bf16.gmra.mxu0 %v849
  %v3770 = vpop.f32.mrf.mxu0
  %v3771 = vadd.f32 %v3682, %v3770
  %v3772 = vpop.f32.mrf.mxu0
  %v3773 = vadd.f32 %v3684, %v3772
  %3774 = vdwg.mxu0
  %3775 = vmatpush.bf16.msra.mxu0 %v1826
  %3776 = vmatpush.bf16.msra.mxu0 %v1822
  %3777 = vmatpush.bf16.msra.mxu0 %v1818
  %3778 = vmatpush.bf16.msra.mxu0 %v1814
  %3779 = vmatpush.bf16.msra.mxu0 %v1810
  %3780 = vmatpush.bf16.msra.mxu0 %v1806
  %3781 = vmatpush.bf16.msra.mxu0 %v1802
  %3782 = vmatpush.bf16.msra.mxu0 %v1798
  %3783 = vmatmul.bf16.gmra.mxu0 %v745
  %v3784 = vpop.f32.mrf.mxu0
  %v3785 = vadd.f32 %v3696, %v3784
  %v3786 = vpop.f32.mrf.mxu0
  %v3787 = vadd.f32 %v3698, %v3786
  %3788 = vmatmul.bf16.gmra.mxu0 %v752
  %v3789 = vpop.f32.mrf.mxu0
  %v3790 = vadd.f32 %v3701, %v3789
  %v3791 = vpop.f32.mrf.mxu0
  %v3792 = vadd.f32 %v3703, %v3791
  %3793 = vmatmul.bf16.gmra.mxu0 %v759
  %v3794 = vpop.f32.mrf.mxu0
  %v3795 = vadd.f32 %v3706, %v3794
  %v3796 = vpop.f32.mrf.mxu0
  %v3797 = vadd.f32 %v3708, %v3796
  %3798 = vmatmul.bf16.gmra.mxu0 %v766
  %v3799 = vpop.f32.mrf.mxu0
  %v3800 = vadd.f32 %v3711, %v3799
  %v3801 = vpop.f32.mrf.mxu0
  %v3802 = vadd.f32 %v3713, %v3801
  %3803 = vmatmul.bf16.gmra.mxu0 %v773
  %v3804 = vpop.f32.mrf.mxu0
  %v3805 = vadd.f32 %v3716, %v3804
  %v3806 = vpop.f32.mrf.mxu0
  %v3807 = vadd.f32 %v3718, %v3806
  %3808 = vmatmul.bf16.gmra.mxu0 %v780
  %v3809 = vpop.f32.mrf.mxu0
  %v3810 = vadd.f32 %v3721, %v3809
  %v3811 = vpop.f32.mrf.mxu0
  %v3812 = vadd.f32 %v3723, %v3811
  %3813 = vmatmul.bf16.gmra.mxu0 %v787
  %v3814 = vpop.f32.mrf.mxu0
  %v3815 = vadd.f32 %v3726, %v3814
  %v3816 = vpop.f32.mrf.mxu0
  %v3817 = vadd.f32 %v3728, %v3816
  %3818 = vmatmul.bf16.gmra.mxu0 %v794
  %v3819 = vpop.f32.mrf.mxu0
  %v3820 = vadd.f32 %v3731, %v3819
  %v3821 = vpop.f32.mrf.mxu0
  %v3822 = vadd.f32 %v3733, %v3821
  %3823 = vmatmul.bf16.gmra.mxu0 %v801
  %v3824 = vpop.f32.mrf.mxu0
  %v3825 = vadd.f32 %v3736, %v3824
  %v3826 = vpop.f32.mrf.mxu0
  %v3827 = vadd.f32 %v3738, %v3826
  %3828 = vmatmul.bf16.gmra.mxu0 %v808
  %v3829 = vpop.f32.mrf.mxu0
  %v3830 = vadd.f32 %v3741, %v3829
  %v3831 = vpop.f32.mrf.mxu0
  %v3832 = vadd.f32 %v3743, %v3831
  %3833 = vmatmul.bf16.gmra.mxu0 %v815
  %v3834 = vpop.f32.mrf.mxu0
  %v3835 = vadd.f32 %v3746, %v3834
  %v3836 = vpop.f32.mrf.mxu0
  %v3837 = vadd.f32 %v3748, %v3836
  %3838 = vmatmul.bf16.gmra.mxu0 %v822
  %v3839 = vpop.f32.mrf.mxu0
  %v3840 = vadd.f32 %v3751, %v3839
  %v3841 = vpop.f32.mrf.mxu0
  %v3842 = vadd.f32 %v3753, %v3841
  %3843 = vmatmul.bf16.gmra.mxu0 %v829
  %v3844 = vpop.f32.mrf.mxu0
  %v3845 = vadd.f32 %v3756, %v3844
  %v3846 = vpop.f32.mrf.mxu0
  %v3847 = vadd.f32 %v3758, %v3846
  %3848 = vmatmul.bf16.gmra.mxu0 %v836
  %v3849 = vpop.f32.mrf.mxu0
  %v3850 = vadd.f32 %v3761, %v3849
  %v3851 = vpop.f32.mrf.mxu0
  %v3852 = vadd.f32 %v3763, %v3851
  %3853 = vmatmul.bf16.gmra.mxu0 %v843
  %v3854 = vpop.f32.mrf.mxu0
  %v3855 = vadd.f32 %v3766, %v3854
  %v3856 = vpop.f32.mrf.mxu0
  %v3857 = vadd.f32 %v3768, %v3856
  %3858 = vmatmul.bf16.gmra.mxu0 %v850
  %v3859 = vpop.f32.mrf.mxu0
  %v3860 = vadd.f32 %v3771, %v3859
  %v3861 = vpop.f32.mrf.mxu0
  %v3862 = vadd.f32 %v3773, %v3861
  %3863 = vdwg.mxu0
  %3864 = vmatpush.bf16.msra.mxu0 %v1858
  %3865 = vmatpush.bf16.msra.mxu0 %v1854
  %3866 = vmatpush.bf16.msra.mxu0 %v1850
  %3867 = vmatpush.bf16.msra.mxu0 %v1846
  %3868 = vmatpush.bf16.msra.mxu0 %v1842
  %3869 = vmatpush.bf16.msra.mxu0 %v1838
  %3870 = vmatpush.bf16.msra.mxu0 %v1834
  %3871 = vmatpush.bf16.msra.mxu0 %v1830
  %3872 = vmatmul.bf16.gmra.mxu0 %v746
  %v3873 = vpop.f32.mrf.mxu0
  %v3874 = vadd.f32 %v3785, %v3873
  %v3875 = vpop.f32.mrf.mxu0
  %v3876 = vadd.f32 %v3787, %v3875
  %3877 = vmatmul.bf16.gmra.mxu0 %v753
  %v3878 = vpop.f32.mrf.mxu0
  %v3879 = vadd.f32 %v3790, %v3878
  %v3880 = vpop.f32.mrf.mxu0
  %v3881 = vadd.f32 %v3792, %v3880
  %3882 = vmatmul.bf16.gmra.mxu0 %v760
  %v3883 = vpop.f32.mrf.mxu0
  %v3884 = vadd.f32 %v3795, %v3883
  %v3885 = vpop.f32.mrf.mxu0
  %v3886 = vadd.f32 %v3797, %v3885
  %3887 = vmatmul.bf16.gmra.mxu0 %v767
  %v3888 = vpop.f32.mrf.mxu0
  %v3889 = vadd.f32 %v3800, %v3888
  %v3890 = vpop.f32.mrf.mxu0
  %v3891 = vadd.f32 %v3802, %v3890
  %3892 = vmatmul.bf16.gmra.mxu0 %v774
  %v3893 = vpop.f32.mrf.mxu0
  %v3894 = vadd.f32 %v3805, %v3893
  %v3895 = vpop.f32.mrf.mxu0
  %v3896 = vadd.f32 %v3807, %v3895
  %3897 = vmatmul.bf16.gmra.mxu0 %v781
  %v3898 = vpop.f32.mrf.mxu0
  %v3899 = vadd.f32 %v3810, %v3898
  %v3900 = vpop.f32.mrf.mxu0
  %v3901 = vadd.f32 %v3812, %v3900
  %3902 = vmatmul.bf16.gmra.mxu0 %v788
  %v3903 = vpop.f32.mrf.mxu0
  %v3904 = vadd.f32 %v3815, %v3903
  %v3905 = vpop.f32.mrf.mxu0
  %v3906 = vadd.f32 %v3817, %v3905
  %3907 = vmatmul.bf16.gmra.mxu0 %v795
  %v3908 = vpop.f32.mrf.mxu0
  %v3909 = vadd.f32 %v3820, %v3908
  %v3910 = vpop.f32.mrf.mxu0
  %v3911 = vadd.f32 %v3822, %v3910
  %3912 = vmatmul.bf16.gmra.mxu0 %v802
  %v3913 = vpop.f32.mrf.mxu0
  %v3914 = vadd.f32 %v3825, %v3913
  %v3915 = vpop.f32.mrf.mxu0
  %v3916 = vadd.f32 %v3827, %v3915
  %3917 = vmatmul.bf16.gmra.mxu0 %v809
  %v3918 = vpop.f32.mrf.mxu0
  %v3919 = vadd.f32 %v3830, %v3918
  %v3920 = vpop.f32.mrf.mxu0
  %v3921 = vadd.f32 %v3832, %v3920
  %3922 = vmatmul.bf16.gmra.mxu0 %v816
  %v3923 = vpop.f32.mrf.mxu0
  %v3924 = vadd.f32 %v3835, %v3923
  %v3925 = vpop.f32.mrf.mxu0
  %v3926 = vadd.f32 %v3837, %v3925
  %3927 = vmatmul.bf16.gmra.mxu0 %v823
  %v3928 = vpop.f32.mrf.mxu0
  %v3929 = vadd.f32 %v3840, %v3928
  %v3930 = vpop.f32.mrf.mxu0
  %v3931 = vadd.f32 %v3842, %v3930
  %3932 = vmatmul.bf16.gmra.mxu0 %v830
  %v3933 = vpop.f32.mrf.mxu0
  %v3934 = vadd.f32 %v3845, %v3933
  %v3935 = vpop.f32.mrf.mxu0
  %v3936 = vadd.f32 %v3847, %v3935
  %3937 = vmatmul.bf16.gmra.mxu0 %v837
  %v3938 = vpop.f32.mrf.mxu0
  %v3939 = vadd.f32 %v3850, %v3938
  %v3940 = vpop.f32.mrf.mxu0
  %v3941 = vadd.f32 %v3852, %v3940
  %3942 = vmatmul.bf16.gmra.mxu0 %v844
  %v3943 = vpop.f32.mrf.mxu0
  %v3944 = vadd.f32 %v3855, %v3943
  %v3945 = vpop.f32.mrf.mxu0
  %v3946 = vadd.f32 %v3857, %v3945
  %3947 = vmatmul.bf16.gmra.mxu0 %v851
  %v3948 = vpop.f32.mrf.mxu0
  %v3949 = vadd.f32 %v3860, %v3948
  %v3950 = vpop.f32.mrf.mxu0
  %v3951 = vadd.f32 %v3862, %v3950
  %3952 = vdwg.mxu0
  %3953 = vmatpush.bf16.msra.mxu0 %v1667
  %3954 = vmatpush.bf16.msra.mxu0 %v1663
  %3955 = vmatpush.bf16.msra.mxu0 %v1659
  %3956 = vmatpush.bf16.msra.mxu0 %v1655
  %3957 = vmatpush.bf16.msra.mxu0 %v1651
  %3958 = vmatpush.bf16.msra.mxu0 %v1647
  %3959 = vmatpush.bf16.msra.mxu0 %v1643
  %3960 = vmatpush.bf16.msra.mxu0 %v1639
  %3961 = vmatmul.bf16.gmra.mxu0 %v740
  %v3962 = vpop.f32.mrf.mxu0
  %v3963 = vadd.f32 %v383, %v3962
  %v3964 = vpop.f32.mrf.mxu0
  %v3965 = vadd.f32 %v383, %v3964
  %3966 = vmatmul.bf16.gmra.mxu0 %v747
  %v3967 = vpop.f32.mrf.mxu0
  %v3968 = vadd.f32 %v383, %v3967
  %v3969 = vpop.f32.mrf.mxu0
  %v3970 = vadd.f32 %v383, %v3969
  %3971 = vmatmul.bf16.gmra.mxu0 %v754
  %v3972 = vpop.f32.mrf.mxu0
  %v3973 = vadd.f32 %v383, %v3972
  %v3974 = vpop.f32.mrf.mxu0
  %v3975 = vadd.f32 %v383, %v3974
  %3976 = vmatmul.bf16.gmra.mxu0 %v761
  %v3977 = vpop.f32.mrf.mxu0
  %v3978 = vadd.f32 %v383, %v3977
  %v3979 = vpop.f32.mrf.mxu0
  %v3980 = vadd.f32 %v383, %v3979
  %3981 = vmatmul.bf16.gmra.mxu0 %v768
  %v3982 = vpop.f32.mrf.mxu0
  %v3983 = vadd.f32 %v383, %v3982
  %v3984 = vpop.f32.mrf.mxu0
  %v3985 = vadd.f32 %v383, %v3984
  %3986 = vmatmul.bf16.gmra.mxu0 %v775
  %v3987 = vpop.f32.mrf.mxu0
  %v3988 = vadd.f32 %v383, %v3987
  %v3989 = vpop.f32.mrf.mxu0
  %v3990 = vadd.f32 %v383, %v3989
  %3991 = vmatmul.bf16.gmra.mxu0 %v782
  %v3992 = vpop.f32.mrf.mxu0
  %v3993 = vadd.f32 %v383, %v3992
  %v3994 = vpop.f32.mrf.mxu0
  %v3995 = vadd.f32 %v383, %v3994
  %3996 = vmatmul.bf16.gmra.mxu0 %v789
  %v3997 = vpop.f32.mrf.mxu0
  %v3998 = vadd.f32 %v383, %v3997
  %v3999 = vpop.f32.mrf.mxu0
  %v4000 = vadd.f32 %v383, %v3999
  %4001 = vmatmul.bf16.gmra.mxu0 %v796
  %v4002 = vpop.f32.mrf.mxu0
  %v4003 = vadd.f32 %v383, %v4002
  %v4004 = vpop.f32.mrf.mxu0
  %v4005 = vadd.f32 %v383, %v4004
  %4006 = vmatmul.bf16.gmra.mxu0 %v803
  %v4007 = vpop.f32.mrf.mxu0
  %v4008 = vadd.f32 %v383, %v4007
  %v4009 = vpop.f32.mrf.mxu0
  %v4010 = vadd.f32 %v383, %v4009
  %4011 = vmatmul.bf16.gmra.mxu0 %v810
  %v4012 = vpop.f32.mrf.mxu0
  %v4013 = vadd.f32 %v383, %v4012
  %v4014 = vpop.f32.mrf.mxu0
  %v4015 = vadd.f32 %v383, %v4014
  %4016 = vmatmul.bf16.gmra.mxu0 %v817
  %v4017 = vpop.f32.mrf.mxu0
  %v4018 = vadd.f32 %v383, %v4017
  %v4019 = vpop.f32.mrf.mxu0
  %v4020 = vadd.f32 %v383, %v4019
  %4021 = vmatmul.bf16.gmra.mxu0 %v824
  %v4022 = vpop.f32.mrf.mxu0
  %v4023 = vadd.f32 %v383, %v4022
  %v4024 = vpop.f32.mrf.mxu0
  %v4025 = vadd.f32 %v383, %v4024
  %4026 = vmatmul.bf16.gmra.mxu0 %v831
  %v4027 = vpop.f32.mrf.mxu0
  %v4028 = vadd.f32 %v383, %v4027
  %v4029 = vpop.f32.mrf.mxu0
  %v4030 = vadd.f32 %v383, %v4029
  %4031 = vmatmul.bf16.gmra.mxu0 %v838
  %v4032 = vpop.f32.mrf.mxu0
  %v4033 = vadd.f32 %v383, %v4032
  %v4034 = vpop.f32.mrf.mxu0
  %v4035 = vadd.f32 %v383, %v4034
  %4036 = vmatmul.bf16.gmra.mxu0 %v845
  %v4037 = vpop.f32.mrf.mxu0
  %v4038 = vadd.f32 %v383, %v4037
  %v4039 = vpop.f32.mrf.mxu0
  %v4040 = vadd.f32 %v383, %v4039
  %4041 = vdwg.mxu0
  %4042 = vmatpush.bf16.msra.mxu0 %v1699
  %4043 = vmatpush.bf16.msra.mxu0 %v1695
  %4044 = vmatpush.bf16.msra.mxu0 %v1691
  %4045 = vmatpush.bf16.msra.mxu0 %v1687
  %4046 = vmatpush.bf16.msra.mxu0 %v1683
  %4047 = vmatpush.bf16.msra.mxu0 %v1679
  %4048 = vmatpush.bf16.msra.mxu0 %v1675
  %4049 = vmatpush.bf16.msra.mxu0 %v1671
  %4050 = vmatmul.bf16.gmra.mxu0 %v741
  %v4051 = vpop.f32.mrf.mxu0
  %v4052 = vadd.f32 %v3963, %v4051
  %v4053 = vpop.f32.mrf.mxu0
  %v4054 = vadd.f32 %v3965, %v4053
  %4055 = vmatmul.bf16.gmra.mxu0 %v748
  %v4056 = vpop.f32.mrf.mxu0
  %v4057 = vadd.f32 %v3968, %v4056
  %v4058 = vpop.f32.mrf.mxu0
  %v4059 = vadd.f32 %v3970, %v4058
  %4060 = vmatmul.bf16.gmra.mxu0 %v755
  %v4061 = vpop.f32.mrf.mxu0
  %v4062 = vadd.f32 %v3973, %v4061
  %v4063 = vpop.f32.mrf.mxu0
  %v4064 = vadd.f32 %v3975, %v4063
  %4065 = vmatmul.bf16.gmra.mxu0 %v762
  %v4066 = vpop.f32.mrf.mxu0
  %v4067 = vadd.f32 %v3978, %v4066
  %v4068 = vpop.f32.mrf.mxu0
  %v4069 = vadd.f32 %v3980, %v4068
  %4070 = vmatmul.bf16.gmra.mxu0 %v769
  %v4071 = vpop.f32.mrf.mxu0
  %v4072 = vadd.f32 %v3983, %v4071
  %v4073 = vpop.f32.mrf.mxu0
  %v4074 = vadd.f32 %v3985, %v4073
  %4075 = vmatmul.bf16.gmra.mxu0 %v776
  %v4076 = vpop.f32.mrf.mxu0
  %v4077 = vadd.f32 %v3988, %v4076
  %v4078 = vpop.f32.mrf.mxu0
  %v4079 = vadd.f32 %v3990, %v4078
  %4080 = vmatmul.bf16.gmra.mxu0 %v783
  %v4081 = vpop.f32.mrf.mxu0
  %v4082 = vadd.f32 %v3993, %v4081
  %v4083 = vpop.f32.mrf.mxu0
  %v4084 = vadd.f32 %v3995, %v4083
  %4085 = vmatmul.bf16.gmra.mxu0 %v790
  %v4086 = vpop.f32.mrf.mxu0
  %v4087 = vadd.f32 %v3998, %v4086
  %v4088 = vpop.f32.mrf.mxu0
  %v4089 = vadd.f32 %v4000, %v4088
  %4090 = vmatmul.bf16.gmra.mxu0 %v797
  %v4091 = vpop.f32.mrf.mxu0
  %v4092 = vadd.f32 %v4003, %v4091
  %v4093 = vpop.f32.mrf.mxu0
  %v4094 = vadd.f32 %v4005, %v4093
  %4095 = vmatmul.bf16.gmra.mxu0 %v804
  %v4096 = vpop.f32.mrf.mxu0
  %v4097 = vadd.f32 %v4008, %v4096
  %v4098 = vpop.f32.mrf.mxu0
  %v4099 = vadd.f32 %v4010, %v4098
  %4100 = vmatmul.bf16.gmra.mxu0 %v811
  %v4101 = vpop.f32.mrf.mxu0
  %v4102 = vadd.f32 %v4013, %v4101
  %v4103 = vpop.f32.mrf.mxu0
  %v4104 = vadd.f32 %v4015, %v4103
  %4105 = vmatmul.bf16.gmra.mxu0 %v818
  %v4106 = vpop.f32.mrf.mxu0
  %v4107 = vadd.f32 %v4018, %v4106
  %v4108 = vpop.f32.mrf.mxu0
  %v4109 = vadd.f32 %v4020, %v4108
  %4110 = vmatmul.bf16.gmra.mxu0 %v825
  %v4111 = vpop.f32.mrf.mxu0
  %v4112 = vadd.f32 %v4023, %v4111
  %v4113 = vpop.f32.mrf.mxu0
  %v4114 = vadd.f32 %v4025, %v4113
  %4115 = vmatmul.bf16.gmra.mxu0 %v832
  %v4116 = vpop.f32.mrf.mxu0
  %v4117 = vadd.f32 %v4028, %v4116
  %v4118 = vpop.f32.mrf.mxu0
  %v4119 = vadd.f32 %v4030, %v4118
  %4120 = vmatmul.bf16.gmra.mxu0 %v839
  %v4121 = vpop.f32.mrf.mxu0
  %v4122 = vadd.f32 %v4033, %v4121
  %v4123 = vpop.f32.mrf.mxu0
  %v4124 = vadd.f32 %v4035, %v4123
  %4125 = vmatmul.bf16.gmra.mxu0 %v846
  %v4126 = vpop.f32.mrf.mxu0
  %v4127 = vadd.f32 %v4038, %v4126
  %v4128 = vpop.f32.mrf.mxu0
  %v4129 = vadd.f32 %v4040, %v4128
  %4130 = vdwg.mxu0
  %4131 = vmatpush.bf16.msra.mxu0 %v1731
  %4132 = vmatpush.bf16.msra.mxu0 %v1727
  %4133 = vmatpush.bf16.msra.mxu0 %v1723
  %4134 = vmatpush.bf16.msra.mxu0 %v1719
  %4135 = vmatpush.bf16.msra.mxu0 %v1715
  %4136 = vmatpush.bf16.msra.mxu0 %v1711
  %4137 = vmatpush.bf16.msra.mxu0 %v1707
  %4138 = vmatpush.bf16.msra.mxu0 %v1703
  %4139 = vmatmul.bf16.gmra.mxu0 %v742
  %v4140 = vpop.f32.mrf.mxu0
  %v4141 = vadd.f32 %v4052, %v4140
  %v4142 = vpop.f32.mrf.mxu0
  %v4143 = vadd.f32 %v4054, %v4142
  %4144 = vmatmul.bf16.gmra.mxu0 %v749
  %v4145 = vpop.f32.mrf.mxu0
  %v4146 = vadd.f32 %v4057, %v4145
  %v4147 = vpop.f32.mrf.mxu0
  %v4148 = vadd.f32 %v4059, %v4147
  %4149 = vmatmul.bf16.gmra.mxu0 %v756
  %v4150 = vpop.f32.mrf.mxu0
  %v4151 = vadd.f32 %v4062, %v4150
  %v4152 = vpop.f32.mrf.mxu0
  %v4153 = vadd.f32 %v4064, %v4152
  %4154 = vmatmul.bf16.gmra.mxu0 %v763
  %v4155 = vpop.f32.mrf.mxu0
  %v4156 = vadd.f32 %v4067, %v4155
  %v4157 = vpop.f32.mrf.mxu0
  %v4158 = vadd.f32 %v4069, %v4157
  %4159 = vmatmul.bf16.gmra.mxu0 %v770
  %v4160 = vpop.f32.mrf.mxu0
  %v4161 = vadd.f32 %v4072, %v4160
  %v4162 = vpop.f32.mrf.mxu0
  %v4163 = vadd.f32 %v4074, %v4162
  %4164 = vmatmul.bf16.gmra.mxu0 %v777
  %v4165 = vpop.f32.mrf.mxu0
  %v4166 = vadd.f32 %v4077, %v4165
  %v4167 = vpop.f32.mrf.mxu0
  %v4168 = vadd.f32 %v4079, %v4167
  %4169 = vmatmul.bf16.gmra.mxu0 %v784
  %v4170 = vpop.f32.mrf.mxu0
  %v4171 = vadd.f32 %v4082, %v4170
  %v4172 = vpop.f32.mrf.mxu0
  %v4173 = vadd.f32 %v4084, %v4172
  %4174 = vmatmul.bf16.gmra.mxu0 %v791
  %v4175 = vpop.f32.mrf.mxu0
  %v4176 = vadd.f32 %v4087, %v4175
  %v4177 = vpop.f32.mrf.mxu0
  %v4178 = vadd.f32 %v4089, %v4177
  %4179 = vmatmul.bf16.gmra.mxu0 %v798
  %v4180 = vpop.f32.mrf.mxu0
  %v4181 = vadd.f32 %v4092, %v4180
  %v4182 = vpop.f32.mrf.mxu0
  %v4183 = vadd.f32 %v4094, %v4182
  %4184 = vmatmul.bf16.gmra.mxu0 %v805
  %v4185 = vpop.f32.mrf.mxu0
  %v4186 = vadd.f32 %v4097, %v4185
  %v4187 = vpop.f32.mrf.mxu0
  %v4188 = vadd.f32 %v4099, %v4187
  %4189 = vmatmul.bf16.gmra.mxu0 %v812
  %v4190 = vpop.f32.mrf.mxu0
  %v4191 = vadd.f32 %v4102, %v4190
  %v4192 = vpop.f32.mrf.mxu0
  %v4193 = vadd.f32 %v4104, %v4192
  %4194 = vmatmul.bf16.gmra.mxu0 %v819
  %v4195 = vpop.f32.mrf.mxu0
  %v4196 = vadd.f32 %v4107, %v4195
  %v4197 = vpop.f32.mrf.mxu0
  %v4198 = vadd.f32 %v4109, %v4197
  %4199 = vmatmul.bf16.gmra.mxu0 %v826
  %v4200 = vpop.f32.mrf.mxu0
  %v4201 = vadd.f32 %v4112, %v4200
  %v4202 = vpop.f32.mrf.mxu0
  %v4203 = vadd.f32 %v4114, %v4202
  %4204 = vmatmul.bf16.gmra.mxu0 %v833
  %v4205 = vpop.f32.mrf.mxu0
  %v4206 = vadd.f32 %v4117, %v4205
  %v4207 = vpop.f32.mrf.mxu0
  %v4208 = vadd.f32 %v4119, %v4207
  %4209 = vmatmul.bf16.gmra.mxu0 %v840
  %v4210 = vpop.f32.mrf.mxu0
  %v4211 = vadd.f32 %v4122, %v4210
  %v4212 = vpop.f32.mrf.mxu0
  %v4213 = vadd.f32 %v4124, %v4212
  %4214 = vmatmul.bf16.gmra.mxu0 %v847
  %v4215 = vpop.f32.mrf.mxu0
  %v4216 = vadd.f32 %v4127, %v4215
  %v4217 = vpop.f32.mrf.mxu0
  %v4218 = vadd.f32 %v4129, %v4217
  %4219 = vdwg.mxu0
  %4220 = vmatpush.bf16.msra.mxu0 %v1763
  %4221 = vmatpush.bf16.msra.mxu0 %v1759
  %4222 = vmatpush.bf16.msra.mxu0 %v1755
  %4223 = vmatpush.bf16.msra.mxu0 %v1751
  %4224 = vmatpush.bf16.msra.mxu0 %v1747
  %4225 = vmatpush.bf16.msra.mxu0 %v1743
  %4226 = vmatpush.bf16.msra.mxu0 %v1739
  %4227 = vmatpush.bf16.msra.mxu0 %v1735
  %4228 = vmatmul.bf16.gmra.mxu0 %v743
  %v4229 = vpop.f32.mrf.mxu0
  %v4230 = vadd.f32 %v4141, %v4229
  %v4231 = vpop.f32.mrf.mxu0
  %v4232 = vadd.f32 %v4143, %v4231
  %4233 = vmatmul.bf16.gmra.mxu0 %v750
  %v4234 = vpop.f32.mrf.mxu0
  %v4235 = vadd.f32 %v4146, %v4234
  %v4236 = vpop.f32.mrf.mxu0
  %v4237 = vadd.f32 %v4148, %v4236
  %4238 = vmatmul.bf16.gmra.mxu0 %v757
  %v4239 = vpop.f32.mrf.mxu0
  %v4240 = vadd.f32 %v4151, %v4239
  %v4241 = vpop.f32.mrf.mxu0
  %v4242 = vadd.f32 %v4153, %v4241
  %4243 = vmatmul.bf16.gmra.mxu0 %v764
  %v4244 = vpop.f32.mrf.mxu0
  %v4245 = vadd.f32 %v4156, %v4244
  %v4246 = vpop.f32.mrf.mxu0
  %v4247 = vadd.f32 %v4158, %v4246
  %4248 = vmatmul.bf16.gmra.mxu0 %v771
  %v4249 = vpop.f32.mrf.mxu0
  %v4250 = vadd.f32 %v4161, %v4249
  %v4251 = vpop.f32.mrf.mxu0
  %v4252 = vadd.f32 %v4163, %v4251
  %4253 = vmatmul.bf16.gmra.mxu0 %v778
  %v4254 = vpop.f32.mrf.mxu0
  %v4255 = vadd.f32 %v4166, %v4254
  %v4256 = vpop.f32.mrf.mxu0
  %v4257 = vadd.f32 %v4168, %v4256
  %4258 = vmatmul.bf16.gmra.mxu0 %v785
  %v4259 = vpop.f32.mrf.mxu0
  %v4260 = vadd.f32 %v4171, %v4259
  %v4261 = vpop.f32.mrf.mxu0
  %v4262 = vadd.f32 %v4173, %v4261
  %4263 = vmatmul.bf16.gmra.mxu0 %v792
  %v4264 = vpop.f32.mrf.mxu0
  %v4265 = vadd.f32 %v4176, %v4264
  %v4266 = vpop.f32.mrf.mxu0
  %v4267 = vadd.f32 %v4178, %v4266
  %4268 = vmatmul.bf16.gmra.mxu0 %v799
  %v4269 = vpop.f32.mrf.mxu0
  %v4270 = vadd.f32 %v4181, %v4269
  %v4271 = vpop.f32.mrf.mxu0
  %v4272 = vadd.f32 %v4183, %v4271
  %4273 = vmatmul.bf16.gmra.mxu0 %v806
  %v4274 = vpop.f32.mrf.mxu0
  %v4275 = vadd.f32 %v4186, %v4274
  %v4276 = vpop.f32.mrf.mxu0
  %v4277 = vadd.f32 %v4188, %v4276
  %4278 = vmatmul.bf16.gmra.mxu0 %v813
  %v4279 = vpop.f32.mrf.mxu0
  %v4280 = vadd.f32 %v4191, %v4279
  %v4281 = vpop.f32.mrf.mxu0
  %v4282 = vadd.f32 %v4193, %v4281
  %4283 = vmatmul.bf16.gmra.mxu0 %v820
  %v4284 = vpop.f32.mrf.mxu0
  %v4285 = vadd.f32 %v4196, %v4284
  %v4286 = vpop.f32.mrf.mxu0
  %v4287 = vadd.f32 %v4198, %v4286
  %4288 = vmatmul.bf16.gmra.mxu0 %v827
  %v4289 = vpop.f32.mrf.mxu0
  %v4290 = vadd.f32 %v4201, %v4289
  %v4291 = vpop.f32.mrf.mxu0
  %v4292 = vadd.f32 %v4203, %v4291
  %4293 = vmatmul.bf16.gmra.mxu0 %v834
  %v4294 = vpop.f32.mrf.mxu0
  %v4295 = vadd.f32 %v4206, %v4294
  %v4296 = vpop.f32.mrf.mxu0
  %v4297 = vadd.f32 %v4208, %v4296
  %4298 = vmatmul.bf16.gmra.mxu0 %v841
  %v4299 = vpop.f32.mrf.mxu0
  %v4300 = vadd.f32 %v4211, %v4299
  %v4301 = vpop.f32.mrf.mxu0
  %v4302 = vadd.f32 %v4213, %v4301
  %4303 = vmatmul.bf16.gmra.mxu0 %v848
  %v4304 = vpop.f32.mrf.mxu0
  %v4305 = vadd.f32 %v4216, %v4304
  %v4306 = vpop.f32.mrf.mxu0
  %v4307 = vadd.f32 %v4218, %v4306
  %4308 = vdwg.mxu0
  %4309 = vmatpush.bf16.msra.mxu0 %v1795
  %4310 = vmatpush.bf16.msra.mxu0 %v1791
  %4311 = vmatpush.bf16.msra.mxu0 %v1787
  %4312 = vmatpush.bf16.msra.mxu0 %v1783
  %4313 = vmatpush.bf16.msra.mxu0 %v1779
  %4314 = vmatpush.bf16.msra.mxu0 %v1775
  %4315 = vmatpush.bf16.msra.mxu0 %v1771
  %4316 = vmatpush.bf16.msra.mxu0 %v1767
  %4317 = vmatmul.bf16.gmra.mxu0 %v744
  %v4318 = vpop.f32.mrf.mxu0
  %v4319 = vadd.f32 %v4230, %v4318
  %v4320 = vpop.f32.mrf.mxu0
  %v4321 = vadd.f32 %v4232, %v4320
  %4322 = vmatmul.bf16.gmra.mxu0 %v751
  %v4323 = vpop.f32.mrf.mxu0
  %v4324 = vadd.f32 %v4235, %v4323
  %v4325 = vpop.f32.mrf.mxu0
  %v4326 = vadd.f32 %v4237, %v4325
  %4327 = vmatmul.bf16.gmra.mxu0 %v758
  %v4328 = vpop.f32.mrf.mxu0
  %v4329 = vadd.f32 %v4240, %v4328
  %v4330 = vpop.f32.mrf.mxu0
  %v4331 = vadd.f32 %v4242, %v4330
  %4332 = vmatmul.bf16.gmra.mxu0 %v765
  %v4333 = vpop.f32.mrf.mxu0
  %v4334 = vadd.f32 %v4245, %v4333
  %v4335 = vpop.f32.mrf.mxu0
  %v4336 = vadd.f32 %v4247, %v4335
  %4337 = vmatmul.bf16.gmra.mxu0 %v772
  %v4338 = vpop.f32.mrf.mxu0
  %v4339 = vadd.f32 %v4250, %v4338
  %v4340 = vpop.f32.mrf.mxu0
  %v4341 = vadd.f32 %v4252, %v4340
  %4342 = vmatmul.bf16.gmra.mxu0 %v779
  %v4343 = vpop.f32.mrf.mxu0
  %v4344 = vadd.f32 %v4255, %v4343
  %v4345 = vpop.f32.mrf.mxu0
  %v4346 = vadd.f32 %v4257, %v4345
  %4347 = vmatmul.bf16.gmra.mxu0 %v786
  %v4348 = vpop.f32.mrf.mxu0
  %v4349 = vadd.f32 %v4260, %v4348
  %v4350 = vpop.f32.mrf.mxu0
  %v4351 = vadd.f32 %v4262, %v4350
  %4352 = vmatmul.bf16.gmra.mxu0 %v793
  %v4353 = vpop.f32.mrf.mxu0
  %v4354 = vadd.f32 %v4265, %v4353
  %v4355 = vpop.f32.mrf.mxu0
  %v4356 = vadd.f32 %v4267, %v4355
  %4357 = vmatmul.bf16.gmra.mxu0 %v800
  %v4358 = vpop.f32.mrf.mxu0
  %v4359 = vadd.f32 %v4270, %v4358
  %v4360 = vpop.f32.mrf.mxu0
  %v4361 = vadd.f32 %v4272, %v4360
  %4362 = vmatmul.bf16.gmra.mxu0 %v807
  %v4363 = vpop.f32.mrf.mxu0
  %v4364 = vadd.f32 %v4275, %v4363
  %v4365 = vpop.f32.mrf.mxu0
  %v4366 = vadd.f32 %v4277, %v4365
  %4367 = vmatmul.bf16.gmra.mxu0 %v814
  %v4368 = vpop.f32.mrf.mxu0
  %v4369 = vadd.f32 %v4280, %v4368
  %v4370 = vpop.f32.mrf.mxu0
  %v4371 = vadd.f32 %v4282, %v4370
  %4372 = vmatmul.bf16.gmra.mxu0 %v821
  %v4373 = vpop.f32.mrf.mxu0
  %v4374 = vadd.f32 %v4285, %v4373
  %v4375 = vpop.f32.mrf.mxu0
  %v4376 = vadd.f32 %v4287, %v4375
  %4377 = vmatmul.bf16.gmra.mxu0 %v828
  %v4378 = vpop.f32.mrf.mxu0
  %v4379 = vadd.f32 %v4290, %v4378
  %v4380 = vpop.f32.mrf.mxu0
  %v4381 = vadd.f32 %v4292, %v4380
  %4382 = vmatmul.bf16.gmra.mxu0 %v835
  %v4383 = vpop.f32.mrf.mxu0
  %v4384 = vadd.f32 %v4295, %v4383
  %v4385 = vpop.f32.mrf.mxu0
  %v4386 = vadd.f32 %v4297, %v4385
  %4387 = vmatmul.bf16.gmra.mxu0 %v842
  %v4388 = vpop.f32.mrf.mxu0
  %v4389 = vadd.f32 %v4300, %v4388
  %v4390 = vpop.f32.mrf.mxu0
  %v4391 = vadd.f32 %v4302, %v4390
  %4392 = vmatmul.bf16.gmra.mxu0 %v849
  %v4393 = vpop.f32.mrf.mxu0
  %v4394 = vadd.f32 %v4305, %v4393
  %v4395 = vpop.f32.mrf.mxu0
  %v4396 = vadd.f32 %v4307, %v4395
  %4397 = vdwg.mxu0
  %4398 = vmatpush.bf16.msra.mxu0 %v1827
  %4399 = vmatpush.bf16.msra.mxu0 %v1823
  %4400 = vmatpush.bf16.msra.mxu0 %v1819
  %4401 = vmatpush.bf16.msra.mxu0 %v1815
  %4402 = vmatpush.bf16.msra.mxu0 %v1811
  %4403 = vmatpush.bf16.msra.mxu0 %v1807
  %4404 = vmatpush.bf16.msra.mxu0 %v1803
  %4405 = vmatpush.bf16.msra.mxu0 %v1799
  %4406 = vmatmul.bf16.gmra.mxu0 %v745
  %v4407 = vpop.f32.mrf.mxu0
  %v4408 = vadd.f32 %v4319, %v4407
  %v4409 = vpop.f32.mrf.mxu0
  %v4410 = vadd.f32 %v4321, %v4409
  %4411 = vmatmul.bf16.gmra.mxu0 %v752
  %v4412 = vpop.f32.mrf.mxu0
  %v4413 = vadd.f32 %v4324, %v4412
  %v4414 = vpop.f32.mrf.mxu0
  %v4415 = vadd.f32 %v4326, %v4414
  %4416 = vmatmul.bf16.gmra.mxu0 %v759
  %v4417 = vpop.f32.mrf.mxu0
  %v4418 = vadd.f32 %v4329, %v4417
  %v4419 = vpop.f32.mrf.mxu0
  %v4420 = vadd.f32 %v4331, %v4419
  %4421 = vmatmul.bf16.gmra.mxu0 %v766
  %v4422 = vpop.f32.mrf.mxu0
  %v4423 = vadd.f32 %v4334, %v4422
  %v4424 = vpop.f32.mrf.mxu0
  %v4425 = vadd.f32 %v4336, %v4424
  %4426 = vmatmul.bf16.gmra.mxu0 %v773
  %v4427 = vpop.f32.mrf.mxu0
  %v4428 = vadd.f32 %v4339, %v4427
  %v4429 = vpop.f32.mrf.mxu0
  %v4430 = vadd.f32 %v4341, %v4429
  %4431 = vmatmul.bf16.gmra.mxu0 %v780
  %v4432 = vpop.f32.mrf.mxu0
  %v4433 = vadd.f32 %v4344, %v4432
  %v4434 = vpop.f32.mrf.mxu0
  %v4435 = vadd.f32 %v4346, %v4434
  %4436 = vmatmul.bf16.gmra.mxu0 %v787
  %v4437 = vpop.f32.mrf.mxu0
  %v4438 = vadd.f32 %v4349, %v4437
  %v4439 = vpop.f32.mrf.mxu0
  %v4440 = vadd.f32 %v4351, %v4439
  %4441 = vmatmul.bf16.gmra.mxu0 %v794
  %v4442 = vpop.f32.mrf.mxu0
  %v4443 = vadd.f32 %v4354, %v4442
  %v4444 = vpop.f32.mrf.mxu0
  %v4445 = vadd.f32 %v4356, %v4444
  %4446 = vmatmul.bf16.gmra.mxu0 %v801
  %v4447 = vpop.f32.mrf.mxu0
  %v4448 = vadd.f32 %v4359, %v4447
  %v4449 = vpop.f32.mrf.mxu0
  %v4450 = vadd.f32 %v4361, %v4449
  %4451 = vmatmul.bf16.gmra.mxu0 %v808
  %v4452 = vpop.f32.mrf.mxu0
  %v4453 = vadd.f32 %v4364, %v4452
  %v4454 = vpop.f32.mrf.mxu0
  %v4455 = vadd.f32 %v4366, %v4454
  %4456 = vmatmul.bf16.gmra.mxu0 %v815
  %v4457 = vpop.f32.mrf.mxu0
  %v4458 = vadd.f32 %v4369, %v4457
  %v4459 = vpop.f32.mrf.mxu0
  %v4460 = vadd.f32 %v4371, %v4459
  %4461 = vmatmul.bf16.gmra.mxu0 %v822
  %v4462 = vpop.f32.mrf.mxu0
  %v4463 = vadd.f32 %v4374, %v4462
  %v4464 = vpop.f32.mrf.mxu0
  %v4465 = vadd.f32 %v4376, %v4464
  %4466 = vmatmul.bf16.gmra.mxu0 %v829
  %v4467 = vpop.f32.mrf.mxu0
  %v4468 = vadd.f32 %v4379, %v4467
  %v4469 = vpop.f32.mrf.mxu0
  %v4470 = vadd.f32 %v4381, %v4469
  %4471 = vmatmul.bf16.gmra.mxu0 %v836
  %v4472 = vpop.f32.mrf.mxu0
  %v4473 = vadd.f32 %v4384, %v4472
  %v4474 = vpop.f32.mrf.mxu0
  %v4475 = vadd.f32 %v4386, %v4474
  %4476 = vmatmul.bf16.gmra.mxu0 %v843
  %v4477 = vpop.f32.mrf.mxu0
  %v4478 = vadd.f32 %v4389, %v4477
  %v4479 = vpop.f32.mrf.mxu0
  %v4480 = vadd.f32 %v4391, %v4479
  %4481 = vmatmul.bf16.gmra.mxu0 %v850
  %v4482 = vpop.f32.mrf.mxu0
  %v4483 = vadd.f32 %v4394, %v4482
  %v4484 = vpop.f32.mrf.mxu0
  %v4485 = vadd.f32 %v4396, %v4484
  %4486 = vdwg.mxu0
  %4487 = vmatpush.bf16.msra.mxu0 %v1859
  %4488 = vmatpush.bf16.msra.mxu0 %v1855
  %4489 = vmatpush.bf16.msra.mxu0 %v1851
  %4490 = vmatpush.bf16.msra.mxu0 %v1847
  %4491 = vmatpush.bf16.msra.mxu0 %v1843
  %4492 = vmatpush.bf16.msra.mxu0 %v1839
  %4493 = vmatpush.bf16.msra.mxu0 %v1835
  %4494 = vmatpush.bf16.msra.mxu0 %v1831
  %4495 = vmatmul.bf16.gmra.mxu0 %v746
  %v4496 = vpop.f32.mrf.mxu0
  %v4497 = vadd.f32 %v4408, %v4496
  %v4498 = vpop.f32.mrf.mxu0
  %v4499 = vadd.f32 %v4410, %v4498
  %4500 = vmatmul.bf16.gmra.mxu0 %v753
  %v4501 = vpop.f32.mrf.mxu0
  %v4502 = vadd.f32 %v4413, %v4501
  %v4503 = vpop.f32.mrf.mxu0
  %v4504 = vadd.f32 %v4415, %v4503
  %4505 = vmatmul.bf16.gmra.mxu0 %v760
  %v4506 = vpop.f32.mrf.mxu0
  %v4507 = vadd.f32 %v4418, %v4506
  %v4508 = vpop.f32.mrf.mxu0
  %v4509 = vadd.f32 %v4420, %v4508
  %4510 = vmatmul.bf16.gmra.mxu0 %v767
  %v4511 = vpop.f32.mrf.mxu0
  %v4512 = vadd.f32 %v4423, %v4511
  %v4513 = vpop.f32.mrf.mxu0
  %v4514 = vadd.f32 %v4425, %v4513
  %4515 = vmatmul.bf16.gmra.mxu0 %v774
  %v4516 = vpop.f32.mrf.mxu0
  %v4517 = vadd.f32 %v4428, %v4516
  %v4518 = vpop.f32.mrf.mxu0
  %v4519 = vadd.f32 %v4430, %v4518
  %4520 = vmatmul.bf16.gmra.mxu0 %v781
  %v4521 = vpop.f32.mrf.mxu0
  %v4522 = vadd.f32 %v4433, %v4521
  %v4523 = vpop.f32.mrf.mxu0
  %v4524 = vadd.f32 %v4435, %v4523
  %4525 = vmatmul.bf16.gmra.mxu0 %v788
  %v4526 = vpop.f32.mrf.mxu0
  %v4527 = vadd.f32 %v4438, %v4526
  %v4528 = vpop.f32.mrf.mxu0
  %v4529 = vadd.f32 %v4440, %v4528
  %4530 = vmatmul.bf16.gmra.mxu0 %v795
  %v4531 = vpop.f32.mrf.mxu0
  %v4532 = vadd.f32 %v4443, %v4531
  %v4533 = vpop.f32.mrf.mxu0
  %v4534 = vadd.f32 %v4445, %v4533
  %4535 = vmatmul.bf16.gmra.mxu0 %v802
  %v4536 = vpop.f32.mrf.mxu0
  %v4537 = vadd.f32 %v4448, %v4536
  %v4538 = vpop.f32.mrf.mxu0
  %v4539 = vadd.f32 %v4450, %v4538
  %4540 = vmatmul.bf16.gmra.mxu0 %v809
  %v4541 = vpop.f32.mrf.mxu0
  %v4542 = vadd.f32 %v4453, %v4541
  %v4543 = vpop.f32.mrf.mxu0
  %v4544 = vadd.f32 %v4455, %v4543
  %4545 = vmatmul.bf16.gmra.mxu0 %v816
  %v4546 = vpop.f32.mrf.mxu0
  %v4547 = vadd.f32 %v4458, %v4546
  %v4548 = vpop.f32.mrf.mxu0
  %v4549 = vadd.f32 %v4460, %v4548
  %4550 = vmatmul.bf16.gmra.mxu0 %v823
  %v4551 = vpop.f32.mrf.mxu0
  %v4552 = vadd.f32 %v4463, %v4551
  %v4553 = vpop.f32.mrf.mxu0
  %v4554 = vadd.f32 %v4465, %v4553
  %4555 = vmatmul.bf16.gmra.mxu0 %v830
  %v4556 = vpop.f32.mrf.mxu0
  %v4557 = vadd.f32 %v4468, %v4556
  %v4558 = vpop.f32.mrf.mxu0
  %v4559 = vadd.f32 %v4470, %v4558
  %4560 = vmatmul.bf16.gmra.mxu0 %v837
  %v4561 = vpop.f32.mrf.mxu0
  %v4562 = vadd.f32 %v4473, %v4561
  %v4563 = vpop.f32.mrf.mxu0
  %v4564 = vadd.f32 %v4475, %v4563
  %4565 = vmatmul.bf16.gmra.mxu0 %v844
  %v4566 = vpop.f32.mrf.mxu0
  %v4567 = vadd.f32 %v4478, %v4566
  %v4568 = vpop.f32.mrf.mxu0
  %v4569 = vadd.f32 %v4480, %v4568
  %4570 = vmatmul.bf16.gmra.mxu0 %v851
  %v4571 = vpop.f32.mrf.mxu0
  %v4572 = vadd.f32 %v4483, %v4571
  %v4573 = vpop.f32.mrf.mxu0
  %v4574 = vadd.f32 %v4485, %v4573
  %4575 = vdwg.mxu0
  %v4576 = vmax.f32 %v2628, 0.0
  %v4577 = vmax.f32 %v3251, 0.0
  %v4578 = vmax.f32 %v3874, 0.0
  %v4579 = vmax.f32 %v4497, 0.0
  %v4580 = vmax.f32 %v2630, 0.0
  %v4581 = vmax.f32 %v3253, 0.0
  %v4582 = vmax.f32 %v3876, 0.0
  %v4583 = vmax.f32 %v4499, 0.0
  %v4584 = vmax.f32 %v2633, 0.0
  %v4585 = vmax.f32 %v3256, 0.0
  %v4586 = vmax.f32 %v3879, 0.0
  %v4587 = vmax.f32 %v4502, 0.0
  %v4588 = vmax.f32 %v2635, 0.0
  %v4589 = vmax.f32 %v3258, 0.0
  %v4590 = vmax.f32 %v3881, 0.0
  %v4591 = vmax.f32 %v4504, 0.0
  %v4592 = vmax.f32 %v2638, 0.0
  %v4593 = vmax.f32 %v3261, 0.0
  %v4594 = vmax.f32 %v3884, 0.0
  %v4595 = vmax.f32 %v4507, 0.0
  %v4596 = vmax.f32 %v2640, 0.0
  %v4597 = vmax.f32 %v3263, 0.0
  %v4598 = vmax.f32 %v3886, 0.0
  %v4599 = vmax.f32 %v4509, 0.0
  %v4600 = vmax.f32 %v2643, 0.0
  %v4601 = vmax.f32 %v3266, 0.0
  %v4602 = vmax.f32 %v3889, 0.0
  %v4603 = vmax.f32 %v4512, 0.0
  %v4604 = vmax.f32 %v2645, 0.0
  %v4605 = vmax.f32 %v3268, 0.0
  %v4606 = vmax.f32 %v3891, 0.0
  %v4607 = vmax.f32 %v4514, 0.0
  %v4608 = vmax.f32 %v2648, 0.0
  %v4609 = vmax.f32 %v3271, 0.0
  %v4610 = vmax.f32 %v3894, 0.0
  %v4611 = vmax.f32 %v4517, 0.0
  %v4612 = vmax.f32 %v2650, 0.0
  %v4613 = vmax.f32 %v3273, 0.0
  %v4614 = vmax.f32 %v3896, 0.0
  %v4615 = vmax.f32 %v4519, 0.0
  %v4616 = vmax.f32 %v2653, 0.0
  %v4617 = vmax.f32 %v3276, 0.0
  %v4618 = vmax.f32 %v3899, 0.0
  %v4619 = vmax.f32 %v4522, 0.0
  %v4620 = vmax.f32 %v2655, 0.0
  %v4621 = vmax.f32 %v3278, 0.0
  %v4622 = vmax.f32 %v3901, 0.0
  %v4623 = vmax.f32 %v4524, 0.0
  %v4624 = vmax.f32 %v2658, 0.0
  %v4625 = vmax.f32 %v3281, 0.0
  %v4626 = vmax.f32 %v3904, 0.0
  %v4627 = vmax.f32 %v4527, 0.0
  %v4628 = vmax.f32 %v2660, 0.0
  %v4629 = vmax.f32 %v3283, 0.0
  %v4630 = vmax.f32 %v3906, 0.0
  %v4631 = vmax.f32 %v4529, 0.0
  %v4632 = vmax.f32 %v2663, 0.0
  %v4633 = vmax.f32 %v3286, 0.0
  %v4634 = vmax.f32 %v3909, 0.0
  %v4635 = vmax.f32 %v4532, 0.0
  %v4636 = vmax.f32 %v2665, 0.0
  %v4637 = vmax.f32 %v3288, 0.0
  %v4638 = vmax.f32 %v3911, 0.0
  %v4639 = vmax.f32 %v4534, 0.0
  %v4640 = vmax.f32 %v2668, 0.0
  %v4641 = vmax.f32 %v3291, 0.0
  %v4642 = vmax.f32 %v3914, 0.0
  %v4643 = vmax.f32 %v4537, 0.0
  %v4644 = vmax.f32 %v2670, 0.0
  %v4645 = vmax.f32 %v3293, 0.0
  %v4646 = vmax.f32 %v3916, 0.0
  %v4647 = vmax.f32 %v4539, 0.0
  %v4648 = vmax.f32 %v2673, 0.0
  %v4649 = vmax.f32 %v3296, 0.0
  %v4650 = vmax.f32 %v3919, 0.0
  %v4651 = vmax.f32 %v4542, 0.0
  %v4652 = vmax.f32 %v2675, 0.0
  %v4653 = vmax.f32 %v3298, 0.0
  %v4654 = vmax.f32 %v3921, 0.0
  %v4655 = vmax.f32 %v4544, 0.0
  %v4656 = vmax.f32 %v2678, 0.0
  %v4657 = vmax.f32 %v3301, 0.0
  %v4658 = vmax.f32 %v3924, 0.0
  %v4659 = vmax.f32 %v4547, 0.0
  %v4660 = vmax.f32 %v2680, 0.0
  %v4661 = vmax.f32 %v3303, 0.0
  %v4662 = vmax.f32 %v3926, 0.0
  %v4663 = vmax.f32 %v4549, 0.0
  %v4664 = vmax.f32 %v2683, 0.0
  %v4665 = vmax.f32 %v3306, 0.0
  %v4666 = vmax.f32 %v3929, 0.0
  %v4667 = vmax.f32 %v4552, 0.0
  %v4668 = vmax.f32 %v2685, 0.0
  %v4669 = vmax.f32 %v3308, 0.0
  %v4670 = vmax.f32 %v3931, 0.0
  %v4671 = vmax.f32 %v4554, 0.0
  %v4672 = vmax.f32 %v2688, 0.0
  %v4673 = vmax.f32 %v3311, 0.0
  %v4674 = vmax.f32 %v3934, 0.0
  %v4675 = vmax.f32 %v4557, 0.0
  %v4676 = vmax.f32 %v2690, 0.0
  %v4677 = vmax.f32 %v3313, 0.0
  %v4678 = vmax.f32 %v3936, 0.0
  %v4679 = vmax.f32 %v4559, 0.0
  %v4680 = vmax.f32 %v2693, 0.0
  %v4681 = vmax.f32 %v3316, 0.0
  %v4682 = vmax.f32 %v3939, 0.0
  %v4683 = vmax.f32 %v4562, 0.0
  %v4684 = vmax.f32 %v2695, 0.0
  %v4685 = vmax.f32 %v3318, 0.0
  %v4686 = vmax.f32 %v3941, 0.0
  %v4687 = vmax.f32 %v4564, 0.0
  %v4688 = vmax.f32 %v2698, 0.0
  %v4689 = vmax.f32 %v3321, 0.0
  %v4690 = vmax.f32 %v3944, 0.0
  %v4691 = vmax.f32 %v4567, 0.0
  %v4692 = vmax.f32 %v2700, 0.0
  %v4693 = vmax.f32 %v3323, 0.0
  %v4694 = vmax.f32 %v3946, 0.0
  %v4695 = vmax.f32 %v4569, 0.0
  %v4696 = vmax.f32 %v2703, 0.0
  %v4697 = vmax.f32 %v3326, 0.0
  %v4698 = vmax.f32 %v3949, 0.0
  %v4699 = vmax.f32 %v4572, 0.0
  %v4700 = vmax.f32 %v2705, 0.0
  %v4701 = vmax.f32 %v3328, 0.0
  %v4702 = vmax.f32 %v3951, 0.0
  %v4703 = vmax.f32 %v4574, 0.0
  %v4704 = vpack.c.bf16 %v4580, %v4576
  %v4705 = vpack.c.bf16 %v4581, %v4577
  %v4706 = vpack.c.bf16 %v4582, %v4578
  %v4707 = vpack.c.bf16 %v4583, %v4579
  %v4708 = vpack.c.bf16 %v4588, %v4584
  %v4709 = vpack.c.bf16 %v4589, %v4585
  %v4710 = vpack.c.bf16 %v4590, %v4586
  %v4711 = vpack.c.bf16 %v4591, %v4587
  %v4712 = vpack.c.bf16 %v4596, %v4592
  %v4713 = vpack.c.bf16 %v4597, %v4593
  %v4714 = vpack.c.bf16 %v4598, %v4594
  %v4715 = vpack.c.bf16 %v4599, %v4595
  %v4716 = vpack.c.bf16 %v4604, %v4600
  %v4717 = vpack.c.bf16 %v4605, %v4601
  %v4718 = vpack.c.bf16 %v4606, %v4602
  %v4719 = vpack.c.bf16 %v4607, %v4603
  %v4720 = vpack.c.bf16 %v4612, %v4608
  %v4721 = vpack.c.bf16 %v4613, %v4609
  %v4722 = vpack.c.bf16 %v4614, %v4610
  %v4723 = vpack.c.bf16 %v4615, %v4611
  %v4724 = vpack.c.bf16 %v4620, %v4616
  %v4725 = vpack.c.bf16 %v4621, %v4617
  %v4726 = vpack.c.bf16 %v4622, %v4618
  %v4727 = vpack.c.bf16 %v4623, %v4619
  %v4728 = vpack.c.bf16 %v4628, %v4624
  %v4729 = vpack.c.bf16 %v4629, %v4625
  %v4730 = vpack.c.bf16 %v4630, %v4626
  %v4731 = vpack.c.bf16 %v4631, %v4627
  %v4732 = vpack.c.bf16 %v4636, %v4632
  %v4733 = vpack.c.bf16 %v4637, %v4633
  %v4734 = vpack.c.bf16 %v4638, %v4634
  %v4735 = vpack.c.bf16 %v4639, %v4635
  %v4736 = vpack.c.bf16 %v4644, %v4640
  %v4737 = vpack.c.bf16 %v4645, %v4641
  %v4738 = vpack.c.bf16 %v4646, %v4642
  %v4739 = vpack.c.bf16 %v4647, %v4643
  %v4740 = vpack.c.bf16 %v4652, %v4648
  %v4741 = vpack.c.bf16 %v4653, %v4649
  %v4742 = vpack.c.bf16 %v4654, %v4650
  %v4743 = vpack.c.bf16 %v4655, %v4651
  %v4744 = vpack.c.bf16 %v4660, %v4656
  %v4745 = vpack.c.bf16 %v4661, %v4657
  %v4746 = vpack.c.bf16 %v4662, %v4658
  %v4747 = vpack.c.bf16 %v4663, %v4659
  %v4748 = vpack.c.bf16 %v4668, %v4664
  %v4749 = vpack.c.bf16 %v4669, %v4665
  %v4750 = vpack.c.bf16 %v4670, %v4666
  %v4751 = vpack.c.bf16 %v4671, %v4667
  %v4752 = vpack.c.bf16 %v4676, %v4672
  %v4753 = vpack.c.bf16 %v4677, %v4673
  %v4754 = vpack.c.bf16 %v4678, %v4674
  %v4755 = vpack.c.bf16 %v4679, %v4675
  %v4756 = vpack.c.bf16 %v4684, %v4680
  %v4757 = vpack.c.bf16 %v4685, %v4681
  %v4758 = vpack.c.bf16 %v4686, %v4682
  %v4759 = vpack.c.bf16 %v4687, %v4683
  %v4760 = vpack.c.bf16 %v4692, %v4688
  %v4761 = vpack.c.bf16 %v4693, %v4689
  %v4762 = vpack.c.bf16 %v4694, %v4690
  %v4763 = vpack.c.bf16 %v4695, %v4691
  %v4764 = vpack.c.bf16 %v4700, %v4696
  %v4765 = vpack.c.bf16 %v4701, %v4697
  %v4766 = vpack.c.bf16 %v4702, %v4698
  %v4767 = vpack.c.bf16 %v4703, %v4699
  %v4768 = vld [vmem:[%s3] sm:$0xf]
  %v4769 = vld [vmem:[%s3 + $0x4] sm:$0xf]
  %v4770 = vld [vmem:[%s3 + $0x8] sm:$0xf]
  %v4771 = vld [vmem:[%s3 + $0xc] sm:$0xf]
  %v4772 = vld [vmem:[%s3 + $0x10] sm:$0xf]
  %v4773 = vld [vmem:[%s3 + $0x14] sm:$0xf]
  %v4774 = vld [vmem:[%s3 + $0x18] sm:$0xf]
  %v4775 = vld [vmem:[%s3 + $0x1c] sm:$0xf]
  %v4776 = vld [vmem:[%s3 + $0x20] sm:$0xf]
  %v4777 = vld [vmem:[%s3 + $0x24] sm:$0xf]
  %v4778 = vld [vmem:[%s3 + $0x28] sm:$0xf]
  %v4779 = vld [vmem:[%s3 + $0x2c] sm:$0xf]
  %v4780 = vld [vmem:[%s3 + $0x30] sm:$0xf]
  %v4781 = vld [vmem:[%s3 + $0x34] sm:$0xf]
  %v4782 = vld [vmem:[%s3 + $0x38] sm:$0xf]
  %v4783 = vld [vmem:[%s3 + $0x3c] sm:$0xf]
  %v4784 = vld [vmem:[%s3 + $0x40] sm:$0xf]
  %v4785 = vld [vmem:[%s3 + $0x44] sm:$0xf]
  %v4786 = vld [vmem:[%s3 + $0x48] sm:$0xf]
  %v4787 = vld [vmem:[%s3 + $0x4c] sm:$0xf]
  %v4788 = vld [vmem:[%s3 + $0x50] sm:$0xf]
  %v4789 = vld [vmem:[%s3 + $0x54] sm:$0xf]
  %v4790 = vld [vmem:[%s3 + $0x58] sm:$0xf]
  %v4791 = vld [vmem:[%s3 + $0x5c] sm:$0xf]
  %v4792 = vld [vmem:[%s3 + $0x60] sm:$0xf]
  %v4793 = vld [vmem:[%s3 + $0x64] sm:$0xf]
  %v4794 = vld [vmem:[%s3 + $0x68] sm:$0xf]
  %v4795 = vld [vmem:[%s3 + $0x6c] sm:$0xf]
  %v4796 = vld [vmem:[%s3 + $0x70] sm:$0xf]
  %v4797 = vld [vmem:[%s3 + $0x74] sm:$0xf]
  %v4798 = vld [vmem:[%s3 + $0x78] sm:$0xf]
  %v4799 = vld [vmem:[%s3 + $0x7c] sm:$0xf]
  %v4800 = vld [vmem:[%s3 + $0x80] sm:$0xf]
  %v4801 = vld [vmem:[%s3 + $0x84] sm:$0xf]
  %v4802 = vld [vmem:[%s3 + $0x88] sm:$0xf]
  %v4803 = vld [vmem:[%s3 + $0x8c] sm:$0xf]
  %v4804 = vld [vmem:[%s3 + $0x90] sm:$0xf]
  %v4805 = vld [vmem:[%s3 + $0x94] sm:$0xf]
  %v4806 = vld [vmem:[%s3 + $0x98] sm:$0xf]
  %v4807 = vld [vmem:[%s3 + $0x9c] sm:$0xf]
  %v4808 = vld [vmem:[%s3 + $0xa0] sm:$0xf]
  %v4809 = vld [vmem:[%s3 + $0xa4] sm:$0xf]
  %v4810 = vld [vmem:[%s3 + $0xa8] sm:$0xf]
  %v4811 = vld [vmem:[%s3 + $0xac] sm:$0xf]
  %v4812 = vld [vmem:[%s3 + $0xb0] sm:$0xf]
  %v4813 = vld [vmem:[%s3 + $0xb4] sm:$0xf]
  %v4814 = vld [vmem:[%s3 + $0xb8] sm:$0xf]
  %v4815 = vld [vmem:[%s3 + $0xbc] sm:$0xf]
  %v4816 = vld [vmem:[%s3 + $0xc0] sm:$0xf]
  %v4817 = vld [vmem:[%s3 + $0xc4] sm:$0xf]
  %v4818 = vld [vmem:[%s3 + $0xc8] sm:$0xf]
  %v4819 = vld [vmem:[%s3 + $0xcc] sm:$0xf]
  %v4820 = vld [vmem:[%s3 + $0xd0] sm:$0xf]
  %v4821 = vld [vmem:[%s3 + $0xd4] sm:$0xf]
  %v4822 = vld [vmem:[%s3 + $0xd8] sm:$0xf]
  %v4823 = vld [vmem:[%s3 + $0xdc] sm:$0xf]
  %v4824 = vld [vmem:[%s3 + $0xe0] sm:$0xf]
  %v4825 = vld [vmem:[%s3 + $0xe4] sm:$0xf]
  %v4826 = vld [vmem:[%s3 + $0xe8] sm:$0xf]
  %v4827 = vld [vmem:[%s3 + $0xec] sm:$0xf]
  %v4828 = vld [vmem:[%s3 + $0xf0] sm:$0xf]
  %v4829 = vld [vmem:[%s3 + $0xf4] sm:$0xf]
  %v4830 = vld [vmem:[%s3 + $0xf8] sm:$0xf]
  %v4831 = vld [vmem:[%s3 + $0xfc] sm:$0xf]
  %v4832 = vld [vmem:[%s4] sm:$0x1]
  %v4834 = vperm.slane %v4832, 0
  %v4900 = vunpack.c.l.b16 %v4768
  %v4901 = vunpack.c.l.b16 %v4769
  %v4902 = vunpack.c.l.b16 %v4770
  %v4903 = vunpack.c.l.b16 %v4771
  %v4904 = vunpack.c.l.b16 %v4772
  %v4905 = vunpack.c.l.b16 %v4773
  %v4906 = vunpack.c.l.b16 %v4774
  %v4907 = vunpack.c.l.b16 %v4775
  %v4908 = vunpack.c.l.b16 %v4776
  %v4909 = vunpack.c.l.b16 %v4777
  %v4910 = vunpack.c.l.b16 %v4778
  %v4911 = vunpack.c.l.b16 %v4779
  %v4912 = vunpack.c.l.b16 %v4780
  %v4913 = vunpack.c.l.b16 %v4781
  %v4914 = vunpack.c.l.b16 %v4782
  %v4915 = vunpack.c.l.b16 %v4783
  %v4916 = vunpack.c.l.b16 %v4784
  %v4917 = vunpack.c.l.b16 %v4785
  %v4918 = vunpack.c.l.b16 %v4786
  %v4919 = vunpack.c.l.b16 %v4787
  %v4920 = vunpack.c.l.b16 %v4788
  %v4921 = vunpack.c.l.b16 %v4789
  %v4922 = vunpack.c.l.b16 %v4790
  %v4923 = vunpack.c.l.b16 %v4791
  %v4924 = vunpack.c.l.b16 %v4792
  %v4925 = vunpack.c.l.b16 %v4793
  %v4926 = vunpack.c.l.b16 %v4794
  %v4927 = vunpack.c.l.b16 %v4795
  %v4928 = vunpack.c.l.b16 %v4796
  %v4929 = vunpack.c.l.b16 %v4797
  %v4930 = vunpack.c.l.b16 %v4798
  %v4931 = vunpack.c.l.b16 %v4799
  %v4932 = vunpack.c.l.b16 %v4800
  %v4933 = vunpack.c.l.b16 %v4801
  %v4934 = vunpack.c.l.b16 %v4802
  %v4935 = vunpack.c.l.b16 %v4803
  %v4936 = vunpack.c.l.b16 %v4804
  %v4937 = vunpack.c.l.b16 %v4805
  %v4938 = vunpack.c.l.b16 %v4806
  %v4939 = vunpack.c.l.b16 %v4807
  %v4940 = vunpack.c.l.b16 %v4808
  %v4941 = vunpack.c.l.b16 %v4809
  %v4942 = vunpack.c.l.b16 %v4810
  %v4943 = vunpack.c.l.b16 %v4811
  %v4944 = vunpack.c.l.b16 %v4812
  %v4945 = vunpack.c.l.b16 %v4813
  %v4946 = vunpack.c.l.b16 %v4814
  %v4947 = vunpack.c.l.b16 %v4815
  %v4948 = vunpack.c.l.b16 %v4816
  %v4949 = vunpack.c.l.b16 %v4817
  %v4950 = vunpack.c.l.b16 %v4818
  %v4951 = vunpack.c.l.b16 %v4819
  %v4952 = vunpack.c.l.b16 %v4820
  %v4953 = vunpack.c.l.b16 %v4821
  %v4954 = vunpack.c.l.b16 %v4822
  %v4955 = vunpack.c.l.b16 %v4823
  %v4956 = vunpack.c.l.b16 %v4824
  %v4957 = vunpack.c.l.b16 %v4825
  %v4958 = vunpack.c.l.b16 %v4826
  %v4959 = vunpack.c.l.b16 %v4827
  %v4960 = vunpack.c.l.b16 %v4828
  %v4961 = vunpack.c.l.b16 %v4829
  %v4962 = vunpack.c.l.b16 %v4830
  %v4963 = vunpack.c.l.b16 %v4831
  %v4964 = vpack.c.b16 %v4901, %v4900
  %v4965 = vpack.c.b16 %v4903, %v4902
  %v4966 = vpack.c.b16 %v4905, %v4904
  %v4967 = vpack.c.b16 %v4907, %v4906
  %v4968 = vpack.c.b16 %v4909, %v4908
  %v4969 = vpack.c.b16 %v4911, %v4910
  %v4970 = vpack.c.b16 %v4913, %v4912
  %v4971 = vpack.c.b16 %v4915, %v4914
  %v4972 = vpack.c.b16 %v4917, %v4916
  %v4973 = vpack.c.b16 %v4919, %v4918
  %v4974 = vpack.c.b16 %v4921, %v4920
  %v4975 = vpack.c.b16 %v4923, %v4922
  %v4976 = vpack.c.b16 %v4925, %v4924
  %v4977 = vpack.c.b16 %v4927, %v4926
  %v4978 = vpack.c.b16 %v4929, %v4928
  %v4979 = vpack.c.b16 %v4931, %v4930
  %v4980 = vpack.c.b16 %v4933, %v4932
  %v4981 = vpack.c.b16 %v4935, %v4934
  %v4982 = vpack.c.b16 %v4937, %v4936
  %v4983 = vpack.c.b16 %v4939, %v4938
  %v4984 = vpack.c.b16 %v4941, %v4940
  %v4985 = vpack.c.b16 %v4943, %v4942
  %v4986 = vpack.c.b16 %v4945, %v4944
  %v4987 = vpack.c.b16 %v4947, %v4946
  %v4988 = vpack.c.b16 %v4949, %v4948
  %v4989 = vpack.c.b16 %v4951, %v4950
  %v4990 = vpack.c.b16 %v4953, %v4952
  %v4991 = vpack.c.b16 %v4955, %v4954
  %v4992 = vpack.c.b16 %v4957, %v4956
  %v4993 = vpack.c.b16 %v4959, %v4958
  %v4994 = vpack.c.b16 %v4961, %v4960
  %v4995 = vpack.c.b16 %v4963, %v4962
  %5028 = vmatpush.bf16.msra.mxu0 %v4971
  %5029 = vmatpush.bf16.msra.mxu0 %v4970
  %5030 = vmatpush.bf16.msra.mxu0 %v4969
  %5031 = vmatpush.bf16.msra.mxu0 %v4968
  %5032 = vmatpush.bf16.msra.mxu0 %v4967
  %5033 = vmatpush.bf16.msra.mxu0 %v4966
  %5034 = vmatpush.bf16.msra.mxu0 %v4965
  %5035 = vmatpush.bf16.msra.mxu0 %v4964
  %5036 = vmatmul.bf16.gmra.mxu0 %v4704
  %v5037 = vpop.f32.mrf.mxu0
  %v5038 = vadd.f32 %v4834, %v5037
  %v5039 = vpop.f32.mrf.mxu0
  %v5040 = vadd.f32 %v4834, %v5039
  %5041 = vmatmul.bf16.gmra.mxu0 %v4708
  %v5042 = vpop.f32.mrf.mxu0
  %v5043 = vadd.f32 %v4834, %v5042
  %v5044 = vpop.f32.mrf.mxu0
  %v5045 = vadd.f32 %v4834, %v5044
  %5046 = vmatmul.bf16.gmra.mxu0 %v4712
  %v5047 = vpop.f32.mrf.mxu0
  %v5048 = vadd.f32 %v4834, %v5047
  %v5049 = vpop.f32.mrf.mxu0
  %v5050 = vadd.f32 %v4834, %v5049
  %5051 = vmatmul.bf16.gmra.mxu0 %v4716
  %v5052 = vpop.f32.mrf.mxu0
  %v5053 = vadd.f32 %v4834, %v5052
  %v5054 = vpop.f32.mrf.mxu0
  %v5055 = vadd.f32 %v4834, %v5054
  %5056 = vmatmul.bf16.gmra.mxu0 %v4720
  %v5057 = vpop.f32.mrf.mxu0
  %v5058 = vadd.f32 %v4834, %v5057
  %v5059 = vpop.f32.mrf.mxu0
  %v5060 = vadd.f32 %v4834, %v5059
  %5061 = vmatmul.bf16.gmra.mxu0 %v4724
  %v5062 = vpop.f32.mrf.mxu0
  %v5063 = vadd.f32 %v4834, %v5062
  %v5064 = vpop.f32.mrf.mxu0
  %v5065 = vadd.f32 %v4834, %v5064
  %5066 = vmatmul.bf16.gmra.mxu0 %v4728
  %v5067 = vpop.f32.mrf.mxu0
  %v5068 = vadd.f32 %v4834, %v5067
  %v5069 = vpop.f32.mrf.mxu0
  %v5070 = vadd.f32 %v4834, %v5069
  %5071 = vmatmul.bf16.gmra.mxu0 %v4732
  %v5072 = vpop.f32.mrf.mxu0
  %v5073 = vadd.f32 %v4834, %v5072
  %v5074 = vpop.f32.mrf.mxu0
  %v5075 = vadd.f32 %v4834, %v5074
  %5076 = vmatmul.bf16.gmra.mxu0 %v4736
  %v5077 = vpop.f32.mrf.mxu0
  %v5078 = vadd.f32 %v4834, %v5077
  %v5079 = vpop.f32.mrf.mxu0
  %v5080 = vadd.f32 %v4834, %v5079
  %5081 = vmatmul.bf16.gmra.mxu0 %v4740
  %v5082 = vpop.f32.mrf.mxu0
  %v5083 = vadd.f32 %v4834, %v5082
  %v5084 = vpop.f32.mrf.mxu0
  %v5085 = vadd.f32 %v4834, %v5084
  %5086 = vmatmul.bf16.gmra.mxu0 %v4744
  %v5087 = vpop.f32.mrf.mxu0
  %v5088 = vadd.f32 %v4834, %v5087
  %v5089 = vpop.f32.mrf.mxu0
  %v5090 = vadd.f32 %v4834, %v5089
  %5091 = vmatmul.bf16.gmra.mxu0 %v4748
  %v5092 = vpop.f32.mrf.mxu0
  %v5093 = vadd.f32 %v4834, %v5092
  %v5094 = vpop.f32.mrf.mxu0
  %v5095 = vadd.f32 %v4834, %v5094
  %5096 = vmatmul.bf16.gmra.mxu0 %v4752
  %v5097 = vpop.f32.mrf.mxu0
  %v5098 = vadd.f32 %v4834, %v5097
  %v5099 = vpop.f32.mrf.mxu0
  %v5100 = vadd.f32 %v4834, %v5099
  %5101 = vmatmul.bf16.gmra.mxu0 %v4756
  %v5102 = vpop.f32.mrf.mxu0
  %v5103 = vadd.f32 %v4834, %v5102
  %v5104 = vpop.f32.mrf.mxu0
  %v5105 = vadd.f32 %v4834, %v5104
  %5106 = vmatmul.bf16.gmra.mxu0 %v4760
  %v5107 = vpop.f32.mrf.mxu0
  %v5108 = vadd.f32 %v4834, %v5107
  %v5109 = vpop.f32.mrf.mxu0
  %v5110 = vadd.f32 %v4834, %v5109
  %5111 = vmatmul.bf16.gmra.mxu0 %v4764
  %v5112 = vpop.f32.mrf.mxu0
  %v5113 = vadd.f32 %v4834, %v5112
  %v5114 = vpop.f32.mrf.mxu0
  %v5115 = vadd.f32 %v4834, %v5114
  %5116 = vdwg.mxu0
  %5117 = vmatpush.bf16.msra.mxu0 %v4979
  %5118 = vmatpush.bf16.msra.mxu0 %v4978
  %5119 = vmatpush.bf16.msra.mxu0 %v4977
  %5120 = vmatpush.bf16.msra.mxu0 %v4976
  %5121 = vmatpush.bf16.msra.mxu0 %v4975
  %5122 = vmatpush.bf16.msra.mxu0 %v4974
  %5123 = vmatpush.bf16.msra.mxu0 %v4973
  %5124 = vmatpush.bf16.msra.mxu0 %v4972
  %5125 = vmatmul.bf16.gmra.mxu0 %v4705
  %v5126 = vpop.f32.mrf.mxu0
  %v5127 = vadd.f32 %v5038, %v5126
  %v5128 = vpop.f32.mrf.mxu0
  %v5129 = vadd.f32 %v5040, %v5128
  %5130 = vmatmul.bf16.gmra.mxu0 %v4709
  %v5131 = vpop.f32.mrf.mxu0
  %v5132 = vadd.f32 %v5043, %v5131
  %v5133 = vpop.f32.mrf.mxu0
  %v5134 = vadd.f32 %v5045, %v5133
  %5135 = vmatmul.bf16.gmra.mxu0 %v4713
  %v5136 = vpop.f32.mrf.mxu0
  %v5137 = vadd.f32 %v5048, %v5136
  %v5138 = vpop.f32.mrf.mxu0
  %v5139 = vadd.f32 %v5050, %v5138
  %5140 = vmatmul.bf16.gmra.mxu0 %v4717
  %v5141 = vpop.f32.mrf.mxu0
  %v5142 = vadd.f32 %v5053, %v5141
  %v5143 = vpop.f32.mrf.mxu0
  %v5144 = vadd.f32 %v5055, %v5143
  %5145 = vmatmul.bf16.gmra.mxu0 %v4721
  %v5146 = vpop.f32.mrf.mxu0
  %v5147 = vadd.f32 %v5058, %v5146
  %v5148 = vpop.f32.mrf.mxu0
  %v5149 = vadd.f32 %v5060, %v5148
  %5150 = vmatmul.bf16.gmra.mxu0 %v4725
  %v5151 = vpop.f32.mrf.mxu0
  %v5152 = vadd.f32 %v5063, %v5151
  %v5153 = vpop.f32.mrf.mxu0
  %v5154 = vadd.f32 %v5065, %v5153
  %5155 = vmatmul.bf16.gmra.mxu0 %v4729
  %v5156 = vpop.f32.mrf.mxu0
  %v5157 = vadd.f32 %v5068, %v5156
  %v5158 = vpop.f32.mrf.mxu0
  %v5159 = vadd.f32 %v5070, %v5158
  %5160 = vmatmul.bf16.gmra.mxu0 %v4733
  %v5161 = vpop.f32.mrf.mxu0
  %v5162 = vadd.f32 %v5073, %v5161
  %v5163 = vpop.f32.mrf.mxu0
  %v5164 = vadd.f32 %v5075, %v5163
  %5165 = vmatmul.bf16.gmra.mxu0 %v4737
  %v5166 = vpop.f32.mrf.mxu0
  %v5167 = vadd.f32 %v5078, %v5166
  %v5168 = vpop.f32.mrf.mxu0
  %v5169 = vadd.f32 %v5080, %v5168
  %5170 = vmatmul.bf16.gmra.mxu0 %v4741
  %v5171 = vpop.f32.mrf.mxu0
  %v5172 = vadd.f32 %v5083, %v5171
  %v5173 = vpop.f32.mrf.mxu0
  %v5174 = vadd.f32 %v5085, %v5173
  %5175 = vmatmul.bf16.gmra.mxu0 %v4745
  %v5176 = vpop.f32.mrf.mxu0
  %v5177 = vadd.f32 %v5088, %v5176
  %v5178 = vpop.f32.mrf.mxu0
  %v5179 = vadd.f32 %v5090, %v5178
  %5180 = vmatmul.bf16.gmra.mxu0 %v4749
  %v5181 = vpop.f32.mrf.mxu0
  %v5182 = vadd.f32 %v5093, %v5181
  %v5183 = vpop.f32.mrf.mxu0
  %v5184 = vadd.f32 %v5095, %v5183
  %5185 = vmatmul.bf16.gmra.mxu0 %v4753
  %v5186 = vpop.f32.mrf.mxu0
  %v5187 = vadd.f32 %v5098, %v5186
  %v5188 = vpop.f32.mrf.mxu0
  %v5189 = vadd.f32 %v5100, %v5188
  %5190 = vmatmul.bf16.gmra.mxu0 %v4757
  %v5191 = vpop.f32.mrf.mxu0
  %v5192 = vadd.f32 %v5103, %v5191
  %v5193 = vpop.f32.mrf.mxu0
  %v5194 = vadd.f32 %v5105, %v5193
  %5195 = vmatmul.bf16.gmra.mxu0 %v4761
  %v5196 = vpop.f32.mrf.mxu0
  %v5197 = vadd.f32 %v5108, %v5196
  %v5198 = vpop.f32.mrf.mxu0
  %v5199 = vadd.f32 %v5110, %v5198
  %5200 = vmatmul.bf16.gmra.mxu0 %v4765
  %v5201 = vpop.f32.mrf.mxu0
  %v5202 = vadd.f32 %v5113, %v5201
  %v5203 = vpop.f32.mrf.mxu0
  %v5204 = vadd.f32 %v5115, %v5203
  %5205 = vdwg.mxu0
  %5206 = vmatpush.bf16.msra.mxu0 %v4987
  %5207 = vmatpush.bf16.msra.mxu0 %v4986
  %5208 = vmatpush.bf16.msra.mxu0 %v4985
  %5209 = vmatpush.bf16.msra.mxu0 %v4984
  %5210 = vmatpush.bf16.msra.mxu0 %v4983
  %5211 = vmatpush.bf16.msra.mxu0 %v4982
  %5212 = vmatpush.bf16.msra.mxu0 %v4981
  %5213 = vmatpush.bf16.msra.mxu0 %v4980
  %5214 = vmatmul.bf16.gmra.mxu0 %v4706
  %v5215 = vpop.f32.mrf.mxu0
  %v5216 = vadd.f32 %v5127, %v5215
  %v5217 = vpop.f32.mrf.mxu0
  %v5218 = vadd.f32 %v5129, %v5217
  %5219 = vmatmul.bf16.gmra.mxu0 %v4710
  %v5220 = vpop.f32.mrf.mxu0
  %v5221 = vadd.f32 %v5132, %v5220
  %v5222 = vpop.f32.mrf.mxu0
  %v5223 = vadd.f32 %v5134, %v5222
  %5224 = vmatmul.bf16.gmra.mxu0 %v4714
  %v5225 = vpop.f32.mrf.mxu0
  %v5226 = vadd.f32 %v5137, %v5225
  %v5227 = vpop.f32.mrf.mxu0
  %v5228 = vadd.f32 %v5139, %v5227
  %5229 = vmatmul.bf16.gmra.mxu0 %v4718
  %v5230 = vpop.f32.mrf.mxu0
  %v5231 = vadd.f32 %v5142, %v5230
  %v5232 = vpop.f32.mrf.mxu0
  %v5233 = vadd.f32 %v5144, %v5232
  %5234 = vmatmul.bf16.gmra.mxu0 %v4722
  %v5235 = vpop.f32.mrf.mxu0
  %v5236 = vadd.f32 %v5147, %v5235
  %v5237 = vpop.f32.mrf.mxu0
  %v5238 = vadd.f32 %v5149, %v5237
  %5239 = vmatmul.bf16.gmra.mxu0 %v4726
  %v5240 = vpop.f32.mrf.mxu0
  %v5241 = vadd.f32 %v5152, %v5240
  %v5242 = vpop.f32.mrf.mxu0
  %v5243 = vadd.f32 %v5154, %v5242
  %5244 = vmatmul.bf16.gmra.mxu0 %v4730
  %v5245 = vpop.f32.mrf.mxu0
  %v5246 = vadd.f32 %v5157, %v5245
  %v5247 = vpop.f32.mrf.mxu0
  %v5248 = vadd.f32 %v5159, %v5247
  %5249 = vmatmul.bf16.gmra.mxu0 %v4734
  %v5250 = vpop.f32.mrf.mxu0
  %v5251 = vadd.f32 %v5162, %v5250
  %v5252 = vpop.f32.mrf.mxu0
  %v5253 = vadd.f32 %v5164, %v5252
  %5254 = vmatmul.bf16.gmra.mxu0 %v4738
  %v5255 = vpop.f32.mrf.mxu0
  %v5256 = vadd.f32 %v5167, %v5255
  %v5257 = vpop.f32.mrf.mxu0
  %v5258 = vadd.f32 %v5169, %v5257
  %5259 = vmatmul.bf16.gmra.mxu0 %v4742
  %v5260 = vpop.f32.mrf.mxu0
  %v5261 = vadd.f32 %v5172, %v5260
  %v5262 = vpop.f32.mrf.mxu0
  %v5263 = vadd.f32 %v5174, %v5262
  %5264 = vmatmul.bf16.gmra.mxu0 %v4746
  %v5265 = vpop.f32.mrf.mxu0
  %v5266 = vadd.f32 %v5177, %v5265
  %v5267 = vpop.f32.mrf.mxu0
  %v5268 = vadd.f32 %v5179, %v5267
  %5269 = vmatmul.bf16.gmra.mxu0 %v4750
  %v5270 = vpop.f32.mrf.mxu0
  %v5271 = vadd.f32 %v5182, %v5270
  %v5272 = vpop.f32.mrf.mxu0
  %v5273 = vadd.f32 %v5184, %v5272
  %5274 = vmatmul.bf16.gmra.mxu0 %v4754
  %v5275 = vpop.f32.mrf.mxu0
  %v5276 = vadd.f32 %v5187, %v5275
  %v5277 = vpop.f32.mrf.mxu0
  %v5278 = vadd.f32 %v5189, %v5277
  %5279 = vmatmul.bf16.gmra.mxu0 %v4758
  %v5280 = vpop.f32.mrf.mxu0
  %v5281 = vadd.f32 %v5192, %v5280
  %v5282 = vpop.f32.mrf.mxu0
  %v5283 = vadd.f32 %v5194, %v5282
  %5284 = vmatmul.bf16.gmra.mxu0 %v4762
  %v5285 = vpop.f32.mrf.mxu0
  %v5286 = vadd.f32 %v5197, %v5285
  %v5287 = vpop.f32.mrf.mxu0
  %v5288 = vadd.f32 %v5199, %v5287
  %5289 = vmatmul.bf16.gmra.mxu0 %v4766
  %v5290 = vpop.f32.mrf.mxu0
  %v5291 = vadd.f32 %v5202, %v5290
  %v5292 = vpop.f32.mrf.mxu0
  %v5293 = vadd.f32 %v5204, %v5292
  %5294 = vdwg.mxu0
  %5295 = vmatpush.bf16.msra.mxu0 %v4995
  %5296 = vmatpush.bf16.msra.mxu0 %v4994
  %5297 = vmatpush.bf16.msra.mxu0 %v4993
  %5298 = vmatpush.bf16.msra.mxu0 %v4992
  %5299 = vmatpush.bf16.msra.mxu0 %v4991
  %5300 = vmatpush.bf16.msra.mxu0 %v4990
  %5301 = vmatpush.bf16.msra.mxu0 %v4989
  %5302 = vmatpush.bf16.msra.mxu0 %v4988
  %5303 = vmatmul.bf16.gmra.mxu0 %v4707
  %v5304 = vpop.f32.mrf.mxu0
  %v5305 = vadd.f32 %v5216, %v5304
  %v5306 = vpop.f32.mrf.mxu0
  %v5307 = vadd.f32 %v5218, %v5306
  %5308 = vmatmul.bf16.gmra.mxu0 %v4711
  %v5309 = vpop.f32.mrf.mxu0
  %v5310 = vadd.f32 %v5221, %v5309
  %v5311 = vpop.f32.mrf.mxu0
  %v5312 = vadd.f32 %v5223, %v5311
  %5313 = vmatmul.bf16.gmra.mxu0 %v4715
  %v5314 = vpop.f32.mrf.mxu0
  %v5315 = vadd.f32 %v5226, %v5314
  %v5316 = vpop.f32.mrf.mxu0
  %v5317 = vadd.f32 %v5228, %v5316
  %5318 = vmatmul.bf16.gmra.mxu0 %v4719
  %v5319 = vpop.f32.mrf.mxu0
  %v5320 = vadd.f32 %v5231, %v5319
  %v5321 = vpop.f32.mrf.mxu0
  %v5322 = vadd.f32 %v5233, %v5321
  %5323 = vmatmul.bf16.gmra.mxu0 %v4723
  %v5324 = vpop.f32.mrf.mxu0
  %v5325 = vadd.f32 %v5236, %v5324
  %v5326 = vpop.f32.mrf.mxu0
  %v5327 = vadd.f32 %v5238, %v5326
  %5328 = vmatmul.bf16.gmra.mxu0 %v4727
  %v5329 = vpop.f32.mrf.mxu0
  %v5330 = vadd.f32 %v5241, %v5329
  %v5331 = vpop.f32.mrf.mxu0
  %v5332 = vadd.f32 %v5243, %v5331
  %5333 = vmatmul.bf16.gmra.mxu0 %v4731
  %v5334 = vpop.f32.mrf.mxu0
  %v5335 = vadd.f32 %v5246, %v5334
  %v5336 = vpop.f32.mrf.mxu0
  %v5337 = vadd.f32 %v5248, %v5336
  %5338 = vmatmul.bf16.gmra.mxu0 %v4735
  %v5339 = vpop.f32.mrf.mxu0
  %v5340 = vadd.f32 %v5251, %v5339
  %v5341 = vpop.f32.mrf.mxu0
  %v5342 = vadd.f32 %v5253, %v5341
  %5343 = vmatmul.bf16.gmra.mxu0 %v4739
  %v5344 = vpop.f32.mrf.mxu0
  %v5345 = vadd.f32 %v5256, %v5344
  %v5346 = vpop.f32.mrf.mxu0
  %v5347 = vadd.f32 %v5258, %v5346
  %5348 = vmatmul.bf16.gmra.mxu0 %v4743
  %v5349 = vpop.f32.mrf.mxu0
  %v5350 = vadd.f32 %v5261, %v5349
  %v5351 = vpop.f32.mrf.mxu0
  %v5352 = vadd.f32 %v5263, %v5351
  %5353 = vmatmul.bf16.gmra.mxu0 %v4747
  %v5354 = vpop.f32.mrf.mxu0
  %v5355 = vadd.f32 %v5266, %v5354
  %v5356 = vpop.f32.mrf.mxu0
  %v5357 = vadd.f32 %v5268, %v5356
  %5358 = vmatmul.bf16.gmra.mxu0 %v4751
  %v5359 = vpop.f32.mrf.mxu0
  %v5360 = vadd.f32 %v5271, %v5359
  %v5361 = vpop.f32.mrf.mxu0
  %v5362 = vadd.f32 %v5273, %v5361
  %5363 = vmatmul.bf16.gmra.mxu0 %v4755
  %v5364 = vpop.f32.mrf.mxu0
  %v5365 = vadd.f32 %v5276, %v5364
  %v5366 = vpop.f32.mrf.mxu0
  %v5367 = vadd.f32 %v5278, %v5366
  %5368 = vmatmul.bf16.gmra.mxu0 %v4759
  %v5369 = vpop.f32.mrf.mxu0
  %v5370 = vadd.f32 %v5281, %v5369
  %v5371 = vpop.f32.mrf.mxu0
  %v5372 = vadd.f32 %v5283, %v5371
  %5373 = vmatmul.bf16.gmra.mxu0 %v4763
  %v5374 = vpop.f32.mrf.mxu0
  %v5375 = vadd.f32 %v5286, %v5374
  %v5376 = vpop.f32.mrf.mxu0
  %v5377 = vadd.f32 %v5288, %v5376
  %5378 = vmatmul.bf16.gmra.mxu0 %v4767
  %v5379 = vpop.f32.mrf.mxu0
  %v5380 = vadd.f32 %v5291, %v5379
  %v5381 = vpop.f32.mrf.mxu0
  %v5382 = vadd.f32 %v5293, %v5381
  %5383 = vdwg.mxu0
  %v5384 = vmax.f32 %v5305, 0.0
  %v5385 = vmax.f32 %v5307, 0.0
  %v5386 = vmax.f32 %v5310, 0.0
  %v5387 = vmax.f32 %v5312, 0.0
  %v5388 = vmax.f32 %v5315, 0.0
  %v5389 = vmax.f32 %v5317, 0.0
  %v5390 = vmax.f32 %v5320, 0.0
  %v5391 = vmax.f32 %v5322, 0.0
  %v5392 = vmax.f32 %v5325, 0.0
  %v5393 = vmax.f32 %v5327, 0.0
  %v5394 = vmax.f32 %v5330, 0.0
  %v5395 = vmax.f32 %v5332, 0.0
  %v5396 = vmax.f32 %v5335, 0.0
  %v5397 = vmax.f32 %v5337, 0.0
  %v5398 = vmax.f32 %v5340, 0.0
  %v5399 = vmax.f32 %v5342, 0.0
  %v5400 = vmax.f32 %v5345, 0.0
  %v5401 = vmax.f32 %v5347, 0.0
  %v5402 = vmax.f32 %v5350, 0.0
  %v5403 = vmax.f32 %v5352, 0.0
  %v5404 = vmax.f32 %v5355, 0.0
  %v5405 = vmax.f32 %v5357, 0.0
  %v5406 = vmax.f32 %v5360, 0.0
  %v5407 = vmax.f32 %v5362, 0.0
  %v5408 = vmax.f32 %v5365, 0.0
  %v5409 = vmax.f32 %v5367, 0.0
  %v5410 = vmax.f32 %v5370, 0.0
  %v5411 = vmax.f32 %v5372, 0.0
  %v5412 = vmax.f32 %v5375, 0.0
  %v5413 = vmax.f32 %v5377, 0.0
  %v5414 = vmax.f32 %v5380, 0.0
  %v5415 = vmax.f32 %v5382, 0.0
  %v5416 = vpack.c.bf16 %v5385, %v5384
  %v5417 = vpack.c.bf16 %v5387, %v5386
  %v5418 = vpack.c.bf16 %v5389, %v5388
  %v5419 = vpack.c.bf16 %v5391, %v5390
  %v5420 = vpack.c.bf16 %v5393, %v5392
  %v5421 = vpack.c.bf16 %v5395, %v5394
  %v5422 = vpack.c.bf16 %v5397, %v5396
  %v5423 = vpack.c.bf16 %v5399, %v5398
  %v5424 = vpack.c.bf16 %v5401, %v5400
  %v5425 = vpack.c.bf16 %v5403, %v5402
  %v5426 = vpack.c.bf16 %v5405, %v5404
  %v5427 = vpack.c.bf16 %v5407, %v5406
  %v5428 = vpack.c.bf16 %v5409, %v5408
  %v5429 = vpack.c.bf16 %v5411, %v5410
  %v5430 = vpack.c.bf16 %v5413, %v5412
  %v5431 = vpack.c.bf16 %v5415, %v5414
  %v5432 = vld [vmem:[%s5] sm:$0xf]
  %v5433 = vld [vmem:[%s5 + $0x4] sm:$0xf]
  %v5434 = vld [vmem:[%s5 + $0x8] sm:$0xf]
  %v5435 = vld [vmem:[%s5 + $0xc] sm:$0xf]
  %v5436 = vld [vmem:[%s5 + $0x10] sm:$0xf]
  %v5437 = vld [vmem:[%s5 + $0x14] sm:$0xf]
  %v5438 = vld [vmem:[%s5 + $0x18] sm:$0xf]
  %v5439 = vld [vmem:[%s5 + $0x1c] sm:$0xf]
  %v5440 = vld [vmem:[%s5 + $0x20] sm:$0xf]
  %v5441 = vld [vmem:[%s5 + $0x24] sm:$0xf]
  %v5442 = vld [vmem:[%s5 + $0x28] sm:$0xf]
  %v5443 = vld [vmem:[%s5 + $0x2c] sm:$0xf]
  %v5444 = vld [vmem:[%s5 + $0x30] sm:$0xf]
  %v5445 = vld [vmem:[%s5 + $0x34] sm:$0xf]
  %v5446 = vld [vmem:[%s5 + $0x38] sm:$0xf]
  %v5447 = vld [vmem:[%s5 + $0x3c] sm:$0xf]
  %v5448 = vld [vmem:[%s6] sm:$0x1]
  %v5450 = vperm.slane %v5448, 0
  %v5468 = vunpack.c.l.b16 %v5432
  %v5469 = vunpack.c.l.b16 %v5433
  %v5470 = vunpack.c.l.b16 %v5434
  %v5471 = vunpack.c.l.b16 %v5435
  %v5472 = vunpack.c.l.b16 %v5436
  %v5473 = vunpack.c.l.b16 %v5437
  %v5474 = vunpack.c.l.b16 %v5438
  %v5475 = vunpack.c.l.b16 %v5439
  %v5476 = vunpack.c.l.b16 %v5440
  %v5477 = vunpack.c.l.b16 %v5441
  %v5478 = vunpack.c.l.b16 %v5442
  %v5479 = vunpack.c.l.b16 %v5443
  %v5480 = vunpack.c.l.b16 %v5444
  %v5481 = vunpack.c.l.b16 %v5445
  %v5482 = vunpack.c.l.b16 %v5446
  %v5483 = vunpack.c.l.b16 %v5447
  %v5484 = vpack.c.b16 %v5469, %v5468
  %v5485 = vpack.c.b16 %v5471, %v5470
  %v5486 = vpack.c.b16 %v5473, %v5472
  %v5487 = vpack.c.b16 %v5475, %v5474
  %v5488 = vpack.c.b16 %v5477, %v5476
  %v5489 = vpack.c.b16 %v5479, %v5478
  %v5490 = vpack.c.b16 %v5481, %v5480
  %v5491 = vpack.c.b16 %v5483, %v5482
  %5500 = vmatpush.bf16.msra.mxu0 %v5491
  %5501 = vmatpush.bf16.msra.mxu0 %v5490
  %5502 = vmatpush.bf16.msra.mxu0 %v5489
  %5503 = vmatpush.bf16.msra.mxu0 %v5488
  %5504 = vmatpush.bf16.msra.mxu0 %v5487
  %5505 = vmatpush.bf16.msra.mxu0 %v5486
  %5506 = vmatpush.bf16.msra.mxu0 %v5485
  %5507 = vmatpush.bf16.msra.mxu0 %v5484
  %5508 = vmatmul.bf16.gmra.mxu0 %v5416
  %v5509 = vpop.f32.mrf.mxu0
  %v5510 = vadd.f32 %v5450, %v5509
  %v5511 = vpop.f32.mrf.mxu0
  %v5512 = vadd.f32 %v5450, %v5511
  %5513 = vmatmul.bf16.gmra.mxu0 %v5417
  %v5514 = vpop.f32.mrf.mxu0
  %v5515 = vadd.f32 %v5450, %v5514
  %v5516 = vpop.f32.mrf.mxu0
  %v5517 = vadd.f32 %v5450, %v5516
  %5518 = vmatmul.bf16.gmra.mxu0 %v5418
  %v5519 = vpop.f32.mrf.mxu0
  %v5520 = vadd.f32 %v5450, %v5519
  %v5521 = vpop.f32.mrf.mxu0
  %v5522 = vadd.f32 %v5450, %v5521
  %5523 = vmatmul.bf16.gmra.mxu0 %v5419
  %v5524 = vpop.f32.mrf.mxu0
  %v5525 = vadd.f32 %v5450, %v5524
  %v5526 = vpop.f32.mrf.mxu0
  %v5527 = vadd.f32 %v5450, %v5526
  %5528 = vmatmul.bf16.gmra.mxu0 %v5420
  %v5529 = vpop.f32.mrf.mxu0
  %v5530 = vadd.f32 %v5450, %v5529
  %v5531 = vpop.f32.mrf.mxu0
  %v5532 = vadd.f32 %v5450, %v5531
  %5533 = vmatmul.bf16.gmra.mxu0 %v5421
  %v5534 = vpop.f32.mrf.mxu0
  %v5535 = vadd.f32 %v5450, %v5534
  %v5536 = vpop.f32.mrf.mxu0
  %v5537 = vadd.f32 %v5450, %v5536
  %5538 = vmatmul.bf16.gmra.mxu0 %v5422
  %v5539 = vpop.f32.mrf.mxu0
  %v5540 = vadd.f32 %v5450, %v5539
  %v5541 = vpop.f32.mrf.mxu0
  %v5542 = vadd.f32 %v5450, %v5541
  %5543 = vmatmul.bf16.gmra.mxu0 %v5423
  %v5544 = vpop.f32.mrf.mxu0
  %v5545 = vadd.f32 %v5450, %v5544
  %v5546 = vpop.f32.mrf.mxu0
  %v5547 = vadd.f32 %v5450, %v5546
  %5548 = vmatmul.bf16.gmra.mxu0 %v5424
  %v5549 = vpop.f32.mrf.mxu0
  %v5550 = vadd.f32 %v5450, %v5549
  %v5551 = vpop.f32.mrf.mxu0
  %v5552 = vadd.f32 %v5450, %v5551
  %5553 = vmatmul.bf16.gmra.mxu0 %v5425
  %v5554 = vpop.f32.mrf.mxu0
  %v5555 = vadd.f32 %v5450, %v5554
  %v5556 = vpop.f32.mrf.mxu0
  %v5557 = vadd.f32 %v5450, %v5556
  %5558 = vmatmul.bf16.gmra.mxu0 %v5426
  %v5559 = vpop.f32.mrf.mxu0
  %v5560 = vadd.f32 %v5450, %v5559
  %v5561 = vpop.f32.mrf.mxu0
  %v5562 = vadd.f32 %v5450, %v5561
  %5563 = vmatmul.bf16.gmra.mxu0 %v5427
  %v5564 = vpop.f32.mrf.mxu0
  %v5565 = vadd.f32 %v5450, %v5564
  %v5566 = vpop.f32.mrf.mxu0
  %v5567 = vadd.f32 %v5450, %v5566
  %5568 = vmatmul.bf16.gmra.mxu0 %v5428
  %v5569 = vpop.f32.mrf.mxu0
  %v5570 = vadd.f32 %v5450, %v5569
  %v5571 = vpop.f32.mrf.mxu0
  %v5572 = vadd.f32 %v5450, %v5571
  %5573 = vmatmul.bf16.gmra.mxu0 %v5429
  %v5574 = vpop.f32.mrf.mxu0
  %v5575 = vadd.f32 %v5450, %v5574
  %v5576 = vpop.f32.mrf.mxu0
  %v5577 = vadd.f32 %v5450, %v5576
  %5578 = vmatmul.bf16.gmra.mxu0 %v5430
  %v5579 = vpop.f32.mrf.mxu0
  %v5580 = vadd.f32 %v5450, %v5579
  %v5581 = vpop.f32.mrf.mxu0
  %v5582 = vadd.f32 %v5450, %v5581
  %5583 = vmatmul.bf16.gmra.mxu0 %v5431
  %v5584 = vpop.f32.mrf.mxu0
  %v5585 = vadd.f32 %v5450, %v5584
  %v5586 = vpop.f32.mrf.mxu0
  %v5587 = vadd.f32 %v5450, %v5586
  %5588 = vdwg.mxu0
  %v5589 = vpack.c.bf16 %v5510, %v5510
  %v5590 = vpack.c.bf16 %v5512, %v5512
  %v5591 = vpack.c.bf16 %v5515, %v5515
  %v5592 = vpack.c.bf16 %v5517, %v5517
  %v5593 = vpack.c.bf16 %v5520, %v5520
  %v5594 = vpack.c.bf16 %v5522, %v5522
  %v5595 = vpack.c.bf16 %v5525, %v5525
  %v5596 = vpack.c.bf16 %v5527, %v5527
  %v5597 = vpack.c.bf16 %v5530, %v5530
  %v5598 = vpack.c.bf16 %v5532, %v5532
  %v5599 = vpack.c.bf16 %v5535, %v5535
  %v5600 = vpack.c.bf16 %v5537, %v5537
  %v5601 = vpack.c.bf16 %v5540, %v5540
  %v5602 = vpack.c.bf16 %v5542, %v5542
  %v5603 = vpack.c.bf16 %v5545, %v5545
  %v5604 = vpack.c.bf16 %v5547, %v5547
  %v5605 = vpack.c.bf16 %v5550, %v5550
  %v5606 = vpack.c.bf16 %v5552, %v5552
  %v5607 = vpack.c.bf16 %v5555, %v5555
  %v5608 = vpack.c.bf16 %v5557, %v5557
  %v5609 = vpack.c.bf16 %v5560, %v5560
  %v5610 = vpack.c.bf16 %v5562, %v5562
  %v5611 = vpack.c.bf16 %v5565, %v5565
  %v5612 = vpack.c.bf16 %v5567, %v5567
  %v5613 = vpack.c.bf16 %v5570, %v5570
  %v5614 = vpack.c.bf16 %v5572, %v5572
  %v5615 = vpack.c.bf16 %v5575, %v5575
  %v5616 = vpack.c.bf16 %v5577, %v5577
  %v5617 = vpack.c.bf16 %v5580, %v5580
  %v5618 = vpack.c.bf16 %v5582, %v5582
  %v5619 = vpack.c.bf16 %v5585, %v5585
  %v5620 = vpack.c.bf16 %v5587, %v5587
  %5621 = vst [vmem:[%s7] sm:$0xf] %v5589
  %5622 = vst [vmem:[%s7 + $0x4] sm:$0xf] %v5590
  %5623 = vst [vmem:[%s7 + $0x8] sm:$0xf] %v5591
  %5624 = vst [vmem:[%s7 + $0xc] sm:$0xf] %v5592
  %5625 = vst [vmem:[%s7 + $0x10] sm:$0xf] %v5593
  %5626 = vst [vmem:[%s7 + $0x14] sm:$0xf] %v5594
  %5627 = vst [vmem:[%s7 + $0x18] sm:$0xf] %v5595
  %5628 = vst [vmem:[%s7 + $0x1c] sm:$0xf] %v5596
  %5629 = vst [vmem:[%s7 + $0x20] sm:$0xf] %v5597
  %5630 = vst [vmem:[%s7 + $0x24] sm:$0xf] %v5598
  %5631 = vst [vmem:[%s7 + $0x28] sm:$0xf] %v5599
  %5632 = vst [vmem:[%s7 + $0x2c] sm:$0xf] %v5600
  %5633 = vst [vmem:[%s7 + $0x30] sm:$0xf] %v5601
  %5634 = vst [vmem:[%s7 + $0x34] sm:$0xf] %v5602
  %5635 = vst [vmem:[%s7 + $0x38] sm:$0xf] %v5603
  %5636 = vst [vmem:[%s7 + $0x3c] sm:$0xf] %v5604
  %5637 = vst [vmem:[%s7 + $0x40] sm:$0xf] %v5605
  %5638 = vst [vmem:[%s7 + $0x44] sm:$0xf] %v5606
  %5639 = vst [vmem:[%s7 + $0x48] sm:$0xf] %v5607
  %5640 = vst [vmem:[%s7 + $0x4c] sm:$0xf] %v5608
  %5641 = vst [vmem:[%s7 + $0x50] sm:$0xf] %v5609
  %5642 = vst [vmem:[%s7 + $0x54] sm:$0xf] %v5610
  %5643 = vst [vmem:[%s7 + $0x58] sm:$0xf] %v5611
  %5644 = vst [vmem:[%s7 + $0x5c] sm:$0xf] %v5612
  %5645 = vst [vmem:[%s7 + $0x60] sm:$0xf] %v5613
  %5646 = vst [vmem:[%s7 + $0x64] sm:$0xf] %v5614
  %5647 = vst [vmem:[%s7 + $0x68] sm:$0xf] %v5615
  %5648 = vst [vmem:[%s7 + $0x6c] sm:$0xf] %v5616
  %5649 = vst [vmem:[%s7 + $0x70] sm:$0xf] %v5617
  %5650 = vst [vmem:[%s7 + $0x74] sm:$0xf] %v5618
  %5651 = vst [vmem:[%s7 + $0x78] sm:$0xf] %v5619
  %5652 = vst [vmem:[%s7 + $0x7c] sm:$0xf] %v5620
  // Predicated region
  $region30: #{enc_mnist_forward.1} parent=0 // pred_check
    _
  $region31: #{enc_mnist_forward.1} parent=0 // pred_check_branch
    %5654 = sbr.rel (0) target = $region33
  $region32: #{enc_mnist_forward.1} parent=0 // pred_region
    _
  $region33: #{enc_mnist_forward.1} parent=0 // pred_fallthru
    _
  // Predicated region
  $region34: #{enc_mnist_forward.1} parent=0 // pred_check
    _
  $region35: #{enc_mnist_forward.1} parent=0 // pred_check_branch
    %5656 = sbr.rel (0) target = $region37
  $region36: #{enc_mnist_forward.1} parent=0 // pred_region
    _
  $region37: #{enc_mnist_forward.1} parent=0 // pred_fallthru
    _

</llo_original>
